<compile_context>
chip_gen: v7x
topology: tpu7x:2x2x1
jax: 0.10.0
libtpu: 0.0.40
codegen_flags: <defaults>
</compile_context>

<pallas_src>
import functools

import jax
import jax.numpy as jnp
from jax.experimental import pallas as pl
from jax.experimental.pallas import tpu as pltpu


HP = 128  # lane-padded per-gate width used inside the GRU recurrence


# ---------------------------------------------------------------------------
# In-kernel helpers (traced inside the fused kernel body)
# ---------------------------------------------------------------------------

def _gru_last_hidden(x2d, w_ih, w_hh, b_ih, b_hh, *, seq_len, n, hp):
    """PyTorch single-layer GRU with h0 = 0, gate-padded to `hp` lanes per gate.

    x2d  : (T*N, F)   time-major, flattened input
    w_ih : (F,  3*hp) gate g lives in lanes [g*hp, g*hp+hid); rest zero
    w_hh : (hp, 3*hp) rows >= hid are zero, gate columns padded as above
    b_*  : (1,  3*hp) padded lanes zero
    Returns the final hidden state (N, hp); lanes >= hid are exactly zero, and
    lanes < hid equal the unpadded PyTorch GRU output[:, -1, :].
    """
    # Input projection hoisted out of the recurrence: ONE matmul for all steps,
    # with b_ih folded in (single broadcast, emitted once).
    xproj = jnp.dot(x2d, w_ih, preferred_element_type=jnp.float32) + b_ih
    # Loop-invariant broadcast hoisted (JAX does not CSE broadcast_in_dim).
    bhh = jnp.broadcast_to(b_hh, (n, 3 * hp))
    h = jnp.zeros((n, hp), jnp.float32)
    # TODO(synk): switch to lax.fori_loop(..., unroll=k) if T grows large enough
    # to pressure the 64-vreg file; at T=5 the full static unroll is optimal.
    for t in range(seq_len):                      # static T -> fully unrolled
        gi = xproj[t * n:(t + 1) * n, :]          # static slice of hoisted proj
        gh = jnp.dot(h, w_hh, preferred_element_type=jnp.float32) + bhh
        r = jax.nn.sigmoid(gi[:, 0:hp] + gh[:, 0:hp])                # 128-aligned
        z = jax.nn.sigmoid(gi[:, hp:2 * hp] + gh[:, hp:2 * hp])      # 128-aligned
        c = jnp.tanh(gi[:, 2 * hp:3 * hp] + r * gh[:, 2 * hp:3 * hp])
        h = (1.0 - z) * c + z * h
    return h


def _tree_leaf_from_iou(iou, *, hid):
    """TreeSummarize leaf cell given iou = x @ W_ioux + b_ioux + b_iouh."""
    i = jax.nn.sigmoid(iou[:, 0:hid])
    o = jax.nn.sigmoid(iou[:, hid:2 * hid])
    u = jnp.tanh(iou[:, 2 * hid:3 * hid])
    return o * jnp.tanh(i * u)          # child c/h are zero for leaf trees


def _gcn_softmax_head(x, a, conv_w_ref, conv_b_ref, out_w, out_b, *, layer_num):
    """layer_num GCN layers (ReLU on all but last) + Linear + Softmax(dim=1)."""
    # TODO(synk): if graphs grow beyond a few thousand nodes, tile the dense
    # A @ (XW) over a row grid with BlockSpec pipelining instead of holding the
    # whole (N, N) adjacency resident in VMEM (v7x has only 64 MiB physical).
    for i in range(layer_num):
        xw = jnp.dot(x, conv_w_ref[i], preferred_element_type=jnp.float32)
        x = jnp.dot(a, xw, preferred_element_type=jnp.float32) + conv_b_ref[i]
        if i < layer_num - 1:
            x = jnp.maximum(x, 0.0)
    logits = jnp.dot(x, out_w, preferred_element_type=jnp.float32) + out_b
    m = jnp.max(logits, axis=1, keepdims=True)
    e = jnp.exp(logits - m)
    return e * pl.reciprocal(jnp.sum(e, axis=1, keepdims=True), approx=True)


# ---------------------------------------------------------------------------
# Single fused Pallas kernel: both graph sides, two outputs
# ---------------------------------------------------------------------------

def _fixlocator_kernel(
        f1_ref, f2_ref, f3_ref, am_ref,
        f4_ref, f5_ref, f6_ref, as_ref,
        g1wih_ref, g1whh_ref, g1bih_ref, g1bhh_ref,
        g2wih_ref, g2whh_ref, g2bih_ref, g2bhh_ref,
        tree12_w_ref, tree12_b_ref, tree3_w_ref, tree3_b_ref,
        res_m_w_ref, res_m_b_ref, res_s_w_ref, res_s_b_ref,
        conv_m_w_ref, conv_m_b_ref, conv_s_w_ref, conv_s_b_ref,
        r7w_ref, r7b_ref, r8w_ref, r8b_ref,
        mf_ref, sf_ref,
        *, h_size, layer_num, t1, n_m, t6, n_s, hp):
    hid = 3 * h_size
    # TODO(synk): on v7x the two independent graph sides could be pinned to the
    # two TensorCores via pl.core_map over pltpu.create_tensorcore_mesh, gated
    # on pltpu.get_tpu_info(); on v5e/v6e (1 TC) this fused body is already optimal.

    # -------------------- method graph --------------------
    # GRU_1 branch (dropout = identity in eval), last time step kept.
    fv1 = _gru_last_hidden(f1_ref[...], g1wih_ref[...], g1whh_ref[...],
                           g1bih_ref[...], g1bhh_ref[...],
                           seq_len=t1, n=n_m, hp=hp)                 # (n_m, hp)
    # tree_1 / tree_2 leaf branches batched into ONE block-diagonal matmul.
    x23 = jnp.concatenate([f2_ref[...], f3_ref[...]], axis=1)        # (n_m, 2F)
    iou = jnp.dot(x23, tree12_w_ref[...],
                  preferred_element_type=jnp.float32) + tree12_b_ref[...]
    fv2 = _tree_leaf_from_iou(iou[:, 0:3 * hid], hid=hid)
    fv3 = _tree_leaf_from_iou(iou[:, 3 * hid:6 * hid], hid=hid)
    # resize_1/2/3 + torch.cat fused into one block-diagonal matmul; the first
    # block's weight rows are padded to hp so the padded fv1 lanes multiply zero.
    feats_m = jnp.concatenate([fv1, fv2, fv3], axis=1)               # (n_m, hp+2*hid)
    m0 = jnp.dot(feats_m, res_m_w_ref[...],
                 preferred_element_type=jnp.float32) + res_m_b_ref[...]
    mf_ref[...] = _gcn_softmax_head(m0, am_ref[...], conv_m_w_ref, conv_m_b_ref,
                                    r7w_ref[...], r7b_ref[...], layer_num=layer_num)

    # -------------------- statement graph --------------------
    fv6 = _gru_last_hidden(f6_ref[...], g2wih_ref[...], g2whh_ref[...],
                           g2bih_ref[...], g2bhh_ref[...],
                           seq_len=t6, n=n_s, hp=hp)                 # (n_s, hp)
    iou5 = jnp.dot(f5_ref[...], tree3_w_ref[...],
                   preferred_element_type=jnp.float32) + tree3_b_ref[...]
    fv5 = _tree_leaf_from_iou(iou5, hid=hid)
    # resize_4/5/6 + torch.cat fused (last block row-padded to hp for fv6).
    feats_s = jnp.concatenate([f4_ref[...], fv5, fv6], axis=1)       # (n_s, CC+hid+hp)
    s0 = jnp.dot(feats_s, res_s_w_ref[...],
                 preferred_element_type=jnp.float32) + res_s_b_ref[...]
    sf_ref[...] = _gcn_softmax_head(s0, as_ref[...], conv_s_w_ref, conv_s_b_ref,
                                    r8w_ref[...], r8b_ref[...], layer_num=layer_num)
    # TODO(synk): if graphs grow, lane-pad the 2-wide softmax output (bias pad
    # -1e30) and write an (N, 128) slab to avoid masked vst.msk partial stores.


# ---------------------------------------------------------------------------
# Forward (jit'ed): exactly ONE pallas_call
# ---------------------------------------------------------------------------

def fix_locator_forward(fp, f1_2d, f2, f3, f4, f5, f6_2d, a_m, a_s,
                        *, h_size, layer_num, t1, t6):
    n_m = f2.shape[0]
    n_s = f4.shape[0]
    hp = fp["gru1_whh"].shape[0]
    kernel = functools.partial(_fixlocator_kernel, h_size=h_size,
                               layer_num=layer_num, t1=t1, n_m=n_m,
                               t6=t6, n_s=n_s, hp=hp)
    return pl.pallas_call(
        kernel,
        out_shape=(jax.ShapeDtypeStruct((n_m, 2), jnp.float32),
                   jax.ShapeDtypeStruct((n_s, 2), jnp.float32)),
        compiler_params=pltpu.CompilerParams(vmem_limit_bytes=32 * 1024 * 1024),
    )(f1_2d, f2, f3, a_m, f4, f5, f6_2d, a_s,
      fp["gru1_wih"], fp["gru1_whh"], fp["gru1_bih"], fp["gru1_bhh"],
      fp["gru2_wih"], fp["gru2_whh"], fp["gru2_bih"], fp["gru2_bhh"],
      fp["tree12_w"], fp["tree12_b"], fp["tree3_w"], fp["tree3_b"],
      fp["res_m_w"], fp["res_m_b"], fp["res_s_w"], fp["res_s_b"],
      fp["conv_m_w"], fp["conv_m_b"], fp["conv_s_w"], fp["conv_s_b"],
      fp["r7_w"], fp["r7_b"], fp["r8_w"], fp["r8_b"])


# ---------------------------------------------------------------------------
# Plain-JAX glue (run once, outside the jitted forward)
# ---------------------------------------------------------------------------

def gcn_norm_adj(edge_index, num_nodes):
    """Dense D^-1/2 (A + I) D^-1/2 adjacency (PyG GCNConv default normalization)."""
    src = edge_index[0]
    dst = edge_index[1]
    loops = jnp.arange(num_nodes, dtype=edge_index.dtype)
    src = jnp.concatenate([src, loops])
    dst = jnp.concatenate([dst, loops])
    a = jnp.zeros((num_nodes, num_nodes), jnp.float32).at[dst, src].add(1.0)
    deg = jnp.sum(a, axis=1)
    dinv = 1.0 / jnp.sqrt(jnp.maximum(deg, 1e-12))
    return dinv[:, None] * a * dinv[None, :]


def _block_diag(mats):
    rows = sum(m.shape[0] for m in mats)
    cols = sum(m.shape[1] for m in mats)
    out = jnp.zeros((rows, cols), jnp.float32)
    r = c = 0
    for m in mats:
        out = out.at[r:r + m.shape[0], c:c + m.shape[1]].set(m)
        r += m.shape[0]
        c += m.shape[1]
    return out


def _pad_gate_cols(w, hid, hp):
    """(in, 3*hid) -> (in, 3*hp): gate g's hid cols placed at g*hp, zeros elsewhere."""
    out = jnp.zeros((w.shape[0], 3 * hp), jnp.float32)
    for g in range(3):
        out = out.at[:, g * hp:g * hp + hid].set(w[:, g * hid:(g + 1) * hid])
    return out


def _pad_rows(w, rows):
    out = jnp.zeros((rows,) + w.shape[1:], jnp.float32)
    return out.at[:w.shape[0]].set(w)


def init_params(key, *, h_size, feat, code_cover_len, layer_num):
    """Raw per-module parameters (PyTorch Linear weights pre-transposed to (in,out))."""
    H3 = 3 * h_size

    def nrm(k, shape, scale=0.1):
        return scale * jax.random.normal(k, shape, dtype=jnp.float32)

    keys = iter(jax.random.split(key, 64))
    p = {}
    for name in ("gru_1", "gru_2"):
        p[name] = (nrm(next(keys), (feat, 3 * H3)),    # W_ih^T
                   nrm(next(keys), (H3, 3 * H3)),      # W_hh^T
                   nrm(next(keys), (3 * H3,)),         # b_ih
                   nrm(next(keys), (3 * H3,)))         # b_hh
    # TreeSummarize (mem_dim = H3); only ioux weight + ioux/iouh biases matter for leaves.
    # TODO(synk): fx/fh tree params and the non-leaf recursion are omitted — they
    # only multiply zero child states for the single-node (leaf) trees modeled here.
    for name in ("tree_1", "tree_2", "tree_3"):
        p[name] = (nrm(next(keys), (feat, 3 * H3)),    # W_ioux^T
                   nrm(next(keys), (3 * H3,)),         # b_ioux
                   nrm(next(keys), (3 * H3,)))         # b_iouh
    for name in ("resize_1", "resize_2", "resize_3", "resize_5", "resize_6"):
        p[name] = (nrm(next(keys), (H3, h_size)), nrm(next(keys), (h_size,)))
    p["resize_4"] = (nrm(next(keys), (code_cover_len, h_size)), nrm(next(keys), (h_size,)))
    p["resize_7"] = (nrm(next(keys), (H3, 2)), nrm(next(keys), (2,)))
    p["resize_8"] = (nrm(next(keys), (H3, 2)), nrm(next(keys), (2,)))
    p["conv_method"] = [(nrm(next(keys), (H3, H3)), nrm(next(keys), (H3,)))
                        for _ in range(layer_num)]
    p["conv_statement"] = [(nrm(next(keys), (H3, H3)), nrm(next(keys), (H3,)))
                           for _ in range(layer_num)]
    return p


def fuse_params(p, *, h_size, hp=HP):
    """Pack raw params into the fused / lane-padded forms consumed by the kernel.
    Done once, outside jit."""
    H3 = 3 * h_size

    def gru_pack(w_ih_t, w_hh_t, b_ih, b_hh):
        wih = _pad_gate_cols(w_ih_t, H3, hp)                       # (F,  3*hp)
        whh = _pad_rows(_pad_gate_cols(w_hh_t, H3, hp), hp)        # (hp, 3*hp)
        bih = _pad_gate_cols(b_ih.reshape(1, -1), H3, hp)          # (1,  3*hp)
        bhh = _pad_gate_cols(b_hh.reshape(1, -1), H3, hp)
        return wih, whh, bih, bhh

    g1 = gru_pack(*p["gru_1"])
    g2 = gru_pack(*p["gru_2"])

    t1w, t1bx, t1bh = p["tree_1"]
    t2w, t2bx, t2bh = p["tree_2"]
    t3w, t3bx, t3bh = p["tree_3"]

    r1w, r1b = p["resize_1"]; r2w, r2b = p["resize_2"]; r3w, r3b = p["resize_3"]
    r4w, r4b = p["resize_4"]; r5w, r5b = p["resize_5"]; r6w, r6b = p["resize_6"]

    return {
        "gru1_wih": g1[0], "gru1_whh": g1[1], "gru1_bih": g1[2], "gru1_bhh": g1[3],
        "gru2_wih": g2[0], "gru2_whh": g2[1], "gru2_bih": g2[2], "gru2_bhh": g2[3],
        "tree12_w": _block_diag([t1w, t2w]),                              # (2F, 6*H3)
        "tree12_b": jnp.concatenate([t1bx + t1bh, t2bx + t2bh]).reshape(1, -1),
        "tree3_w": t3w,                                                   # (F, 3*H3)
        "tree3_b": (t3bx + t3bh).reshape(1, -1),
        # m_f = cat(resize_1(fv1), resize_2(fv2), resize_3(fv3)); fv1 block rows
        # padded to hp so padded GRU lanes multiply zero weights.
        "res_m_w": _block_diag([_pad_rows(r1w, hp), r2w, r3w]),           # (hp+2*H3, H3)
        "res_m_b": jnp.concatenate([r1b, r2b, r3b]).reshape(1, -1),
        # s_f = cat(resize_4(f4), resize_5(fv5), resize_6(fv6)); fv6 block padded.
        "res_s_w": _block_diag([r4w, r5w, _pad_rows(r6w, hp)]),           # (CC+H3+hp, H3)
        "res_s_b": jnp.concatenate([r4b, r5b, r6b]).reshape(1, -1),
        "conv_m_w": jnp.stack([w for w, _ in p["conv_method"]]),          # (L, H3, H3)
        "conv_m_b": jnp.stack([b.reshape(1, -1) for _, b in p["conv_method"]]),
        "conv_s_w": jnp.stack([w for w, _ in p["conv_statement"]]),
        "conv_s_b": jnp.stack([b.reshape(1, -1) for _, b in p["conv_statement"]]),
        "r7_w": p["resize_7"][0], "r7_b": p["resize_7"][1].reshape(1, -1),
        "r8_w": p["resize_8"][0], "r8_b": p["resize_8"][1].reshape(1, -1),
    }


# ---------------------------------------------------------------------------
# Example run
# ---------------------------------------------------------------------------

if __name__ == "__main__":
    h_size = 8
    feat = 16                  # feature_representation_size
    code_cover_len = 12
    layer_num = 2
    n_method = 6               # rows in the method graph
    n_stmt = 10                # rows in the statement graph
    t1, t6 = 5, 5              # GRU sequence lengths

    key = jax.random.PRNGKey(0)
    k_par, k1, k2, k3, k4, k5, k6 = jax.random.split(key, 7)

    raw_params = init_params(k_par, h_size=h_size, feat=feat,
                             code_cover_len=code_cover_len, layer_num=layer_num)
    params = fuse_params(raw_params, h_size=h_size)

    feature_1 = jax.random.normal(k1, (t1, n_method, feat), jnp.float32)   # GRU_1 input (T,N,F)
    feature_2 = jax.random.normal(k2, (n_method, feat), jnp.float32)       # tree_1 leaf inputs
    feature_3 = jax.random.normal(k3, (n_method, feat), jnp.float32)       # tree_2 leaf inputs
    feature_4 = jax.random.normal(k4, (n_stmt, code_cover_len), jnp.float32)
    feature_5 = jax.random.normal(k5, (n_stmt, feat), jnp.float32)         # tree_3 leaf inputs
    feature_6 = jax.random.normal(k6, (t6, n_stmt, feat), jnp.float32)     # GRU_2 input (T,N,F)

    # Time-major flattening done once in the wrapper (free XLA reshape) so the
    # kernel can hoist the whole GRU input projection into one matmul.
    feature_1_2d = feature_1.reshape(t1 * n_method, feat)
    feature_6_2d = feature_6.reshape(t6 * n_stmt, feat)

    # method-graph edges (2, E_m) and statement-graph edges (2, E_s)
    src_m = jnp.arange(n_method, dtype=jnp.int32)
    dst_m = (src_m + 1) % n_method
    edge_index_m = jnp.concatenate(
        [jnp.stack([src_m, dst_m]), jnp.stack([dst_m, src_m])], axis=1)
    src_s = jnp.arange(n_stmt, dtype=jnp.int32)
    dst_s = (src_s + 1) % n_stmt
    edge_index_s = jnp.concatenate(
        [jnp.stack([src_s, dst_s]), jnp.stack([dst_s, src_s])], axis=1)

    # Adjacency normalization is static — hoisted out of jit, computed once.
    a_m = gcn_norm_adj(edge_index_m, n_method)
    a_s = gcn_norm_adj(edge_index_s, n_stmt)

    forward = jax.jit(functools.partial(fix_locator_forward, h_size=h_size,
                                        layer_num=layer_num, t1=t1, t6=t6))
    m_f, s_f = forward(params, feature_1_2d, feature_2, feature_3,
                       feature_4, feature_5, feature_6_2d, a_m, a_s)
    jax.block_until_ready((m_f, s_f))

    assert m_f.shape == (n_method, 2) and s_f.shape == (n_stmt, 2)
    assert bool(jnp.all(jnp.isfinite(m_f))) and bool(jnp.all(jnp.isfinite(s_f)))
    # Rows should sum to ~1 (approx reciprocal in the softmax denominator).
    assert bool(jnp.all(jnp.abs(jnp.sum(m_f, axis=1) - 1.0) < 1e-2))
    assert bool(jnp.all(jnp.abs(jnp.sum(s_f, axis=1) - 1.0) < 1e-2))
    print("KERNEL_OK")
</pallas_src>

<mosaic_0001>
module attributes {stable_mosaic.version = 11 : i64} {
  func.func @_fixlocator_kernel(%arg0: memref<30x16xf32, #tpu.memory_space<vmem>>, %arg1: memref<6x16xf32, #tpu.memory_space<vmem>>, %arg2: memref<6x16xf32, #tpu.memory_space<vmem>>, %arg3: memref<6x6xf32, #tpu.memory_space<vmem>>, %arg4: memref<10x12xf32, #tpu.memory_space<vmem>>, %arg5: memref<10x16xf32, #tpu.memory_space<vmem>>, %arg6: memref<50x16xf32, #tpu.memory_space<vmem>>, %arg7: memref<10x10xf32, #tpu.memory_space<vmem>>, %arg8: memref<16x384xf32, #tpu.memory_space<vmem>>, %arg9: memref<128x384xf32, #tpu.memory_space<vmem>>, %arg10: memref<1x384xf32, #tpu.memory_space<vmem>>, %arg11: memref<1x384xf32, #tpu.memory_space<vmem>>, %arg12: memref<16x384xf32, #tpu.memory_space<vmem>>, %arg13: memref<128x384xf32, #tpu.memory_space<vmem>>, %arg14: memref<1x384xf32, #tpu.memory_space<vmem>>, %arg15: memref<1x384xf32, #tpu.memory_space<vmem>>, %arg16: memref<32x144xf32, #tpu.memory_space<vmem>>, %arg17: memref<1x144xf32, #tpu.memory_space<vmem>>, %arg18: memref<16x72xf32, #tpu.memory_space<vmem>>, %arg19: memref<1x72xf32, #tpu.memory_space<vmem>>, %arg20: memref<176x24xf32, #tpu.memory_space<vmem>>, %arg21: memref<1x24xf32, #tpu.memory_space<vmem>>, %arg22: memref<164x24xf32, #tpu.memory_space<vmem>>, %arg23: memref<1x24xf32, #tpu.memory_space<vmem>>, %arg24: memref<2x24x24xf32, #tpu.memory_space<vmem>>, %arg25: memref<2x1x24xf32, #tpu.memory_space<vmem>>, %arg26: memref<2x24x24xf32, #tpu.memory_space<vmem>>, %arg27: memref<2x1x24xf32, #tpu.memory_space<vmem>>, %arg28: memref<24x2xf32, #tpu.memory_space<vmem>>, %arg29: memref<1x2xf32, #tpu.memory_space<vmem>>, %arg30: memref<24x2xf32, #tpu.memory_space<vmem>>, %arg31: memref<1x2xf32, #tpu.memory_space<vmem>>, %arg32: memref<6x2xf32, #tpu.memory_space<vmem>>, %arg33: memref<10x2xf32, #tpu.memory_space<vmem>>) attributes {dimension_semantics = [], scalar_prefetch = 0 : i64, scratch_operands = 0 : i64, tpu.core_type = #tpu.core_type<tc>} {
    %c0 = arith.constant 0 : index
    %c0_0 = arith.constant 0 : index
    %0 = vector.load %arg0[%c0, %c0_0] : memref<30x16xf32, #tpu.memory_space<vmem>>, vector<30x16xf32>
    %c0_1 = arith.constant 0 : index
    %c0_2 = arith.constant 0 : index
    %1 = vector.load %arg8[%c0_1, %c0_2] : memref<16x384xf32, #tpu.memory_space<vmem>>, vector<16x384xf32>
    %c0_3 = arith.constant 0 : index
    %c0_4 = arith.constant 0 : index
    %2 = vector.load %arg9[%c0_3, %c0_4] : memref<128x384xf32, #tpu.memory_space<vmem>>, vector<128x384xf32>
    %c0_5 = arith.constant 0 : index
    %c0_6 = arith.constant 0 : index
    %3 = vector.load %arg10[%c0_5, %c0_6] : memref<1x384xf32, #tpu.memory_space<vmem>>, vector<1x384xf32>
    %c0_7 = arith.constant 0 : index
    %c0_8 = arith.constant 0 : index
    %4 = vector.load %arg11[%c0_7, %c0_8] : memref<1x384xf32, #tpu.memory_space<vmem>>, vector<1x384xf32>
    %cst = arith.constant dense<0.000000e+00> : vector<30x384xf32>
    %5 = tpu.matmul %0, %1, %cst {dimension_numbers = #tpu.dot_dimension_numbers<[1], [0], [0], [1], [0, 0, 1, 1], [], []>} : vector<30x16xf32>, vector<16x384xf32>, vector<30x384xf32> -> vector<30x384xf32>
    %6 = vector.broadcast %3 : vector<1x384xf32> to vector<30x384xf32>
    %7 = arith.addf %5, %6 : vector<30x384xf32>
    %8 = vector.shape_cast %4 : vector<1x384xf32> to vector<1x384xf32>
    %9 = vector.broadcast %8 : vector<1x384xf32> to vector<6x384xf32>
    %cst_9 = arith.constant 0.000000e+00 : f32
    %10 = vector.broadcast %cst_9 : f32 to vector<6x128xf32>
    %11 = vector.extract_strided_slice %7 {offsets = [0, 0], sizes = [6, 384], strides = [1, 1]} : vector<30x384xf32> to vector<6x384xf32>
    %cst_10 = arith.constant dense<0.000000e+00> : vector<6x384xf32>
    %12 = tpu.matmul %10, %2, %cst_10 {dimension_numbers = #tpu.dot_dimension_numbers<[1], [0], [0], [1], [0, 0, 1, 1], [], []>} : vector<6x128xf32>, vector<128x384xf32>, vector<6x384xf32> -> vector<6x384xf32>
    %13 = arith.addf %12, %9 : vector<6x384xf32>
    %14 = vector.extract_strided_slice %11 {offsets = [0, 0], sizes = [6, 128], strides = [1, 1]} : vector<6x384xf32> to vector<6x128xf32>
    %15 = vector.extract_strided_slice %13 {offsets = [0, 0], sizes = [6, 128], strides = [1, 1]} : vector<6x384xf32> to vector<6x128xf32>
    %16 = arith.addf %14, %15 : vector<6x128xf32>
    %17 = arith.negf %16 : vector<6x128xf32>
    %18 = math.exp %17 : vector<6x128xf32>
    %cst_11 = arith.constant 1.000000e+00 : f32
    %19 = vector.broadcast %cst_11 : f32 to vector<6x128xf32>
    %20 = arith.addf %19, %18 : vector<6x128xf32>
    %21 = arith.divf %19, %20 : vector<6x128xf32>
    %22 = vector.extract_strided_slice %11 {offsets = [0, 128], sizes = [6, 128], strides = [1, 1]} : vector<6x384xf32> to vector<6x128xf32>
    %23 = vector.extract_strided_slice %13 {offsets = [0, 128], sizes = [6, 128], strides = [1, 1]} : vector<6x384xf32> to vector<6x128xf32>
    %24 = arith.addf %22, %23 : vector<6x128xf32>
    %25 = arith.negf %24 : vector<6x128xf32>
    %26 = math.exp %25 : vector<6x128xf32>
    %cst_12 = arith.constant 1.000000e+00 : f32
    %27 = vector.broadcast %cst_12 : f32 to vector<6x128xf32>
    %28 = arith.addf %27, %26 : vector<6x128xf32>
    %29 = arith.divf %27, %28 : vector<6x128xf32>
    %30 = vector.extract_strided_slice %11 {offsets = [0, 256], sizes = [6, 128], strides = [1, 1]} : vector<6x384xf32> to vector<6x128xf32>
    %31 = vector.extract_strided_slice %13 {offsets = [0, 256], sizes = [6, 128], strides = [1, 1]} : vector<6x384xf32> to vector<6x128xf32>
    %32 = arith.mulf %21, %31 : vector<6x128xf32>
    %33 = arith.addf %30, %32 : vector<6x128xf32>
    %34 = math.tanh %33 : vector<6x128xf32>
    %cst_13 = arith.constant 1.000000e+00 : f32
    %35 = vector.broadcast %cst_13 : f32 to vector<6x128xf32>
    %36 = arith.subf %35, %29 : vector<6x128xf32>
    %37 = arith.mulf %36, %34 : vector<6x128xf32>
    %38 = arith.mulf %29, %10 : vector<6x128xf32>
    %39 = arith.addf %37, %38 : vector<6x128xf32>
    %40 = vector.extract_strided_slice %7 {offsets = [6, 0], sizes = [6, 384], strides = [1, 1]} : vector<30x384xf32> to vector<6x384xf32>
    %cst_14 = arith.constant dense<0.000000e+00> : vector<6x384xf32>
    %41 = tpu.matmul %39, %2, %cst_14 {dimension_numbers = #tpu.dot_dimension_numbers<[1], [0], [0], [1], [0, 0, 1, 1], [], []>} : vector<6x128xf32>, vector<128x384xf32>, vector<6x384xf32> -> vector<6x384xf32>
    %42 = arith.addf %41, %9 : vector<6x384xf32>
    %43 = vector.extract_strided_slice %40 {offsets = [0, 0], sizes = [6, 128], strides = [1, 1]} : vector<6x384xf32> to vector<6x128xf32>
    %44 = vector.extract_strided_slice %42 {offsets = [0, 0], sizes = [6, 128], strides = [1, 1]} : vector<6x384xf32> to vector<6x128xf32>
    %45 = arith.addf %43, %44 : vector<6x128xf32>
    %46 = arith.negf %45 : vector<6x128xf32>
    %47 = math.exp %46 : vector<6x128xf32>
    %cst_15 = arith.constant 1.000000e+00 : f32
    %48 = vector.broadcast %cst_15 : f32 to vector<6x128xf32>
    %49 = arith.addf %48, %47 : vector<6x128xf32>
    %50 = arith.divf %48, %49 : vector<6x128xf32>
    %51 = vector.extract_strided_slice %40 {offsets = [0, 128], sizes = [6, 128], strides = [1, 1]} : vector<6x384xf32> to vector<6x128xf32>
    %52 = vector.extract_strided_slice %42 {offsets = [0, 128], sizes = [6, 128], strides = [1, 1]} : vector<6x384xf32> to vector<6x128xf32>
    %53 = arith.addf %51, %52 : vector<6x128xf32>
    %54 = arith.negf %53 : vector<6x128xf32>
    %55 = math.exp %54 : vector<6x128xf32>
    %cst_16 = arith.constant 1.000000e+00 : f32
    %56 = vector.broadcast %cst_16 : f32 to vector<6x128xf32>
    %57 = arith.addf %56, %55 : vector<6x128xf32>
    %58 = arith.divf %56, %57 : vector<6x128xf32>
    %59 = vector.extract_strided_slice %40 {offsets = [0, 256], sizes = [6, 128], strides = [1, 1]} : vector<6x384xf32> to vector<6x128xf32>
    %60 = vector.extract_strided_slice %42 {offsets = [0, 256], sizes = [6, 128], strides = [1, 1]} : vector<6x384xf32> to vector<6x128xf32>
    %61 = arith.mulf %50, %60 : vector<6x128xf32>
    %62 = arith.addf %59, %61 : vector<6x128xf32>
    %63 = math.tanh %62 : vector<6x128xf32>
    %cst_17 = arith.constant 1.000000e+00 : f32
    %64 = vector.broadcast %cst_17 : f32 to vector<6x128xf32>
    %65 = arith.subf %64, %58 : vector<6x128xf32>
    %66 = arith.mulf %65, %63 : vector<6x128xf32>
    %67 = arith.mulf %58, %39 : vector<6x128xf32>
    %68 = arith.addf %66, %67 : vector<6x128xf32>
    %69 = vector.extract_strided_slice %7 {offsets = [12, 0], sizes = [6, 384], strides = [1, 1]} : vector<30x384xf32> to vector<6x384xf32>
    %cst_18 = arith.constant dense<0.000000e+00> : vector<6x384xf32>
    %70 = tpu.matmul %68, %2, %cst_18 {dimension_numbers = #tpu.dot_dimension_numbers<[1], [0], [0], [1], [0, 0, 1, 1], [], []>} : vector<6x128xf32>, vector<128x384xf32>, vector<6x384xf32> -> vector<6x384xf32>
    %71 = arith.addf %70, %9 : vector<6x384xf32>
    %72 = vector.extract_strided_slice %69 {offsets = [0, 0], sizes = [6, 128], strides = [1, 1]} : vector<6x384xf32> to vector<6x128xf32>
    %73 = vector.extract_strided_slice %71 {offsets = [0, 0], sizes = [6, 128], strides = [1, 1]} : vector<6x384xf32> to vector<6x128xf32>
    %74 = arith.addf %72, %73 : vector<6x128xf32>
    %75 = arith.negf %74 : vector<6x128xf32>
    %76 = math.exp %75 : vector<6x128xf32>
    %cst_19 = arith.constant 1.000000e+00 : f32
    %77 = vector.broadcast %cst_19 : f32 to vector<6x128xf32>
    %78 = arith.addf %77, %76 : vector<6x128xf32>
    %79 = arith.divf %77, %78 : vector<6x128xf32>
    %80 = vector.extract_strided_slice %69 {offsets = [0, 128], sizes = [6, 128], strides = [1, 1]} : vector<6x384xf32> to vector<6x128xf32>
    %81 = vector.extract_strided_slice %71 {offsets = [0, 128], sizes = [6, 128], strides = [1, 1]} : vector<6x384xf32> to vector<6x128xf32>
    %82 = arith.addf %80, %81 : vector<6x128xf32>
    %83 = arith.negf %82 : vector<6x128xf32>
    %84 = math.exp %83 : vector<6x128xf32>
    %cst_20 = arith.constant 1.000000e+00 : f32
    %85 = vector.broadcast %cst_20 : f32 to vector<6x128xf32>
    %86 = arith.addf %85, %84 : vector<6x128xf32>
    %87 = arith.divf %85, %86 : vector<6x128xf32>
    %88 = vector.extract_strided_slice %69 {offsets = [0, 256], sizes = [6, 128], strides = [1, 1]} : vector<6x384xf32> to vector<6x128xf32>
    %89 = vector.extract_strided_slice %71 {offsets = [0, 256], sizes = [6, 128], strides = [1, 1]} : vector<6x384xf32> to vector<6x128xf32>
    %90 = arith.mulf %79, %89 : vector<6x128xf32>
    %91 = arith.addf %88, %90 : vector<6x128xf32>
    %92 = math.tanh %91 : vector<6x128xf32>
    %cst_21 = arith.constant 1.000000e+00 : f32
    %93 = vector.broadcast %cst_21 : f32 to vector<6x128xf32>
    %94 = arith.subf %93, %87 : vector<6x128xf32>
    %95 = arith.mulf %94, %92 : vector<6x128xf32>
    %96 = arith.mulf %87, %68 : vector<6x128xf32>
    %97 = arith.addf %95, %96 : vector<6x128xf32>
    %98 = vector.extract_strided_slice %7 {offsets = [18, 0], sizes = [6, 384], strides = [1, 1]} : vector<30x384xf32> to vector<6x384xf32>
    %cst_22 = arith.constant dense<0.000000e+00> : vector<6x384xf32>
    %99 = tpu.matmul %97, %2, %cst_22 {dimension_numbers = #tpu.dot_dimension_numbers<[1], [0], [0], [1], [0, 0, 1, 1], [], []>} : vector<6x128xf32>, vector<128x384xf32>, vector<6x384xf32> -> vector<6x384xf32>
    %100 = arith.addf %99, %9 : vector<6x384xf32>
    %101 = vector.extract_strided_slice %98 {offsets = [0, 0], sizes = [6, 128], strides = [1, 1]} : vector<6x384xf32> to vector<6x128xf32>
    %102 = vector.extract_strided_slice %100 {offsets = [0, 0], sizes = [6, 128], strides = [1, 1]} : vector<6x384xf32> to vector<6x128xf32>
    %103 = arith.addf %101, %102 : vector<6x128xf32>
    %104 = arith.negf %103 : vector<6x128xf32>
    %105 = math.exp %104 : vector<6x128xf32>
    %cst_23 = arith.constant 1.000000e+00 : f32
    %106 = vector.broadcast %cst_23 : f32 to vector<6x128xf32>
    %107 = arith.addf %106, %105 : vector<6x128xf32>
    %108 = arith.divf %106, %107 : vector<6x128xf32>
    %109 = vector.extract_strided_slice %98 {offsets = [0, 128], sizes = [6, 128], strides = [1, 1]} : vector<6x384xf32> to vector<6x128xf32>
    %110 = vector.extract_strided_slice %100 {offsets = [0, 128], sizes = [6, 128], strides = [1, 1]} : vector<6x384xf32> to vector<6x128xf32>
    %111 = arith.addf %109, %110 : vector<6x128xf32>
    %112 = arith.negf %111 : vector<6x128xf32>
    %113 = math.exp %112 : vector<6x128xf32>
    %cst_24 = arith.constant 1.000000e+00 : f32
    %114 = vector.broadcast %cst_24 : f32 to vector<6x128xf32>
    %115 = arith.addf %114, %113 : vector<6x128xf32>
    %116 = arith.divf %114, %115 : vector<6x128xf32>
    %117 = vector.extract_strided_slice %98 {offsets = [0, 256], sizes = [6, 128], strides = [1, 1]} : vector<6x384xf32> to vector<6x128xf32>
    %118 = vector.extract_strided_slice %100 {offsets = [0, 256], sizes = [6, 128], strides = [1, 1]} : vector<6x384xf32> to vector<6x128xf32>
    %119 = arith.mulf %108, %118 : vector<6x128xf32>
    %120 = arith.addf %117, %119 : vector<6x128xf32>
    %121 = math.tanh %120 : vector<6x128xf32>
    %cst_25 = arith.constant 1.000000e+00 : f32
    %122 = vector.broadcast %cst_25 : f32 to vector<6x128xf32>
    %123 = arith.subf %122, %116 : vector<6x128xf32>
    %124 = arith.mulf %123, %121 : vector<6x128xf32>
    %125 = arith.mulf %116, %97 : vector<6x128xf32>
    %126 = arith.addf %124, %125 : vector<6x128xf32>
    %127 = vector.extract_strided_slice %7 {offsets = [24, 0], sizes = [6, 384], strides = [1, 1]} : vector<30x384xf32> to vector<6x384xf32>
    %cst_26 = arith.constant dense<0.000000e+00> : vector<6x384xf32>
    %128 = tpu.matmul %126, %2, %cst_26 {dimension_numbers = #tpu.dot_dimension_numbers<[1], [0], [0], [1], [0, 0, 1, 1], [], []>} : vector<6x128xf32>, vector<128x384xf32>, vector<6x384xf32> -> vector<6x384xf32>
    %129 = arith.addf %128, %9 : vector<6x384xf32>
    %130 = vector.extract_strided_slice %127 {offsets = [0, 0], sizes = [6, 128], strides = [1, 1]} : vector<6x384xf32> to vector<6x128xf32>
    %131 = vector.extract_strided_slice %129 {offsets = [0, 0], sizes = [6, 128], strides = [1, 1]} : vector<6x384xf32> to vector<6x128xf32>
    %132 = arith.addf %130, %131 : vector<6x128xf32>
    %133 = arith.negf %132 : vector<6x128xf32>
    %134 = math.exp %133 : vector<6x128xf32>
    %cst_27 = arith.constant 1.000000e+00 : f32
    %135 = vector.broadcast %cst_27 : f32 to vector<6x128xf32>
    %136 = arith.addf %135, %134 : vector<6x128xf32>
    %137 = arith.divf %135, %136 : vector<6x128xf32>
    %138 = vector.extract_strided_slice %127 {offsets = [0, 128], sizes = [6, 128], strides = [1, 1]} : vector<6x384xf32> to vector<6x128xf32>
    %139 = vector.extract_strided_slice %129 {offsets = [0, 128], sizes = [6, 128], strides = [1, 1]} : vector<6x384xf32> to vector<6x128xf32>
    %140 = arith.addf %138, %139 : vector<6x128xf32>
    %141 = arith.negf %140 : vector<6x128xf32>
    %142 = math.exp %141 : vector<6x128xf32>
    %cst_28 = arith.constant 1.000000e+00 : f32
    %143 = vector.broadcast %cst_28 : f32 to vector<6x128xf32>
    %144 = arith.addf %143, %142 : vector<6x128xf32>
    %145 = arith.divf %143, %144 : vector<6x128xf32>
    %146 = vector.extract_strided_slice %127 {offsets = [0, 256], sizes = [6, 128], strides = [1, 1]} : vector<6x384xf32> to vector<6x128xf32>
    %147 = vector.extract_strided_slice %129 {offsets = [0, 256], sizes = [6, 128], strides = [1, 1]} : vector<6x384xf32> to vector<6x128xf32>
    %148 = arith.mulf %137, %147 : vector<6x128xf32>
    %149 = arith.addf %146, %148 : vector<6x128xf32>
    %150 = math.tanh %149 : vector<6x128xf32>
    %cst_29 = arith.constant 1.000000e+00 : f32
    %151 = vector.broadcast %cst_29 : f32 to vector<6x128xf32>
    %152 = arith.subf %151, %145 : vector<6x128xf32>
    %153 = arith.mulf %152, %150 : vector<6x128xf32>
    %154 = arith.mulf %145, %126 : vector<6x128xf32>
    %155 = arith.addf %153, %154 : vector<6x128xf32>
    %c0_30 = arith.constant 0 : index
    %c0_31 = arith.constant 0 : index
    %156 = vector.load %arg1[%c0_30, %c0_31] : memref<6x16xf32, #tpu.memory_space<vmem>>, vector<6x16xf32>
    %c0_32 = arith.constant 0 : index
    %c0_33 = arith.constant 0 : index
    %157 = vector.load %arg2[%c0_32, %c0_33] : memref<6x16xf32, #tpu.memory_space<vmem>>, vector<6x16xf32>
    %158 = tpu.concatenate %156, %157 in 1 : vector<6x16xf32>, vector<6x16xf32> -> vector<6x32xf32>
    %c0_34 = arith.constant 0 : index
    %c0_35 = arith.constant 0 : index
    %159 = vector.load %arg16[%c0_34, %c0_35] : memref<32x144xf32, #tpu.memory_space<vmem>>, vector<32x144xf32>
    %cst_36 = arith.constant dense<0.000000e+00> : vector<6x144xf32>
    %160 = tpu.matmul %158, %159, %cst_36 {dimension_numbers = #tpu.dot_dimension_numbers<[1], [0], [0], [1], [0, 0, 1, 1], [], []>} : vector<6x32xf32>, vector<32x144xf32>, vector<6x144xf32> -> vector<6x144xf32>
    %c0_37 = arith.constant 0 : index
    %c0_38 = arith.constant 0 : index
    %161 = vector.load %arg17[%c0_37, %c0_38] : memref<1x144xf32, #tpu.memory_space<vmem>>, vector<1x144xf32>
    %162 = vector.broadcast %161 : vector<1x144xf32> to vector<6x144xf32>
    %163 = arith.addf %160, %162 : vector<6x144xf32>
    %164 = vector.extract_strided_slice %163 {offsets = [0, 0], sizes = [6, 72], strides = [1, 1]} : vector<6x144xf32> to vector<6x72xf32>
    %165 = vector.extract_strided_slice %164 {offsets = [0, 0], sizes = [6, 24], strides = [1, 1]} : vector<6x72xf32> to vector<6x24xf32>
    %166 = arith.negf %165 : vector<6x24xf32>
    %167 = math.exp %166 : vector<6x24xf32>
    %cst_39 = arith.constant 1.000000e+00 : f32
    %168 = vector.broadcast %cst_39 : f32 to vector<6x24xf32>
    %169 = arith.addf %168, %167 : vector<6x24xf32>
    %170 = arith.divf %168, %169 : vector<6x24xf32>
    %171 = vector.extract_strided_slice %164 {offsets = [0, 24], sizes = [6, 24], strides = [1, 1]} : vector<6x72xf32> to vector<6x24xf32>
    %172 = arith.negf %171 : vector<6x24xf32>
    %173 = math.exp %172 : vector<6x24xf32>
    %cst_40 = arith.constant 1.000000e+00 : f32
    %174 = vector.broadcast %cst_40 : f32 to vector<6x24xf32>
    %175 = arith.addf %174, %173 : vector<6x24xf32>
    %176 = arith.divf %174, %175 : vector<6x24xf32>
    %177 = vector.extract_strided_slice %164 {offsets = [0, 48], sizes = [6, 24], strides = [1, 1]} : vector<6x72xf32> to vector<6x24xf32>
    %178 = math.tanh %177 : vector<6x24xf32>
    %179 = arith.mulf %170, %178 : vector<6x24xf32>
    %180 = math.tanh %179 : vector<6x24xf32>
    %181 = arith.mulf %176, %180 : vector<6x24xf32>
    %182 = vector.extract_strided_slice %163 {offsets = [0, 72], sizes = [6, 72], strides = [1, 1]} : vector<6x144xf32> to vector<6x72xf32>
    %183 = vector.extract_strided_slice %182 {offsets = [0, 0], sizes = [6, 24], strides = [1, 1]} : vector<6x72xf32> to vector<6x24xf32>
    %184 = arith.negf %183 : vector<6x24xf32>
    %185 = math.exp %184 : vector<6x24xf32>
    %cst_41 = arith.constant 1.000000e+00 : f32
    %186 = vector.broadcast %cst_41 : f32 to vector<6x24xf32>
    %187 = arith.addf %186, %185 : vector<6x24xf32>
    %188 = arith.divf %186, %187 : vector<6x24xf32>
    %189 = vector.extract_strided_slice %182 {offsets = [0, 24], sizes = [6, 24], strides = [1, 1]} : vector<6x72xf32> to vector<6x24xf32>
    %190 = arith.negf %189 : vector<6x24xf32>
    %191 = math.exp %190 : vector<6x24xf32>
    %cst_42 = arith.constant 1.000000e+00 : f32
    %192 = vector.broadcast %cst_42 : f32 to vector<6x24xf32>
    %193 = arith.addf %192, %191 : vector<6x24xf32>
    %194 = arith.divf %192, %193 : vector<6x24xf32>
    %195 = vector.extract_strided_slice %182 {offsets = [0, 48], sizes = [6, 24], strides = [1, 1]} : vector<6x72xf32> to vector<6x24xf32>
    %196 = math.tanh %195 : vector<6x24xf32>
    %197 = arith.mulf %188, %196 : vector<6x24xf32>
    %198 = math.tanh %197 : vector<6x24xf32>
    %199 = arith.mulf %194, %198 : vector<6x24xf32>
    %200 = tpu.concatenate %155, %181, %199 in 1 : vector<6x128xf32>, vector<6x24xf32>, vector<6x24xf32> -> vector<6x176xf32>
    %c0_43 = arith.constant 0 : index
    %c0_44 = arith.constant 0 : index
    %201 = vector.load %arg20[%c0_43, %c0_44] : memref<176x24xf32, #tpu.memory_space<vmem>>, vector<176x24xf32>
    %cst_45 = arith.constant dense<0.000000e+00> : vector<6x24xf32>
    %202 = tpu.matmul %200, %201, %cst_45 {dimension_numbers = #tpu.dot_dimension_numbers<[1], [0], [0], [1], [0, 0, 1, 1], [], []>} : vector<6x176xf32>, vector<176x24xf32>, vector<6x24xf32> -> vector<6x24xf32>
    %c0_46 = arith.constant 0 : index
    %c0_47 = arith.constant 0 : index
    %203 = vector.load %arg21[%c0_46, %c0_47] : memref<1x24xf32, #tpu.memory_space<vmem>>, vector<1x24xf32>
    %204 = vector.broadcast %203 : vector<1x24xf32> to vector<6x24xf32>
    %205 = arith.addf %202, %204 : vector<6x24xf32>
    %c0_48 = arith.constant 0 : index
    %c0_49 = arith.constant 0 : index
    %206 = vector.load %arg3[%c0_48, %c0_49] : memref<6x6xf32, #tpu.memory_space<vmem>>, vector<6x6xf32>
    %c0_50 = arith.constant 0 : index
    %c0_51 = arith.constant 0 : index
    %207 = vector.load %arg28[%c0_50, %c0_51] : memref<24x2xf32, #tpu.memory_space<vmem>>, vector<24x2xf32>
    %c0_52 = arith.constant 0 : index
    %c0_53 = arith.constant 0 : index
    %208 = vector.load %arg29[%c0_52, %c0_53] : memref<1x2xf32, #tpu.memory_space<vmem>>, vector<1x2xf32>
    %c0_54 = arith.constant 0 : index
    %c0_55 = arith.constant 0 : index
    %c0_56 = arith.constant 0 : index
    %209 = vector.load %arg24[%c0_54, %c0_55, %c0_56] : memref<2x24x24xf32, #tpu.memory_space<vmem>>, vector<1x24x24xf32>
    %210 = vector.shape_cast %209 : vector<1x24x24xf32> to vector<24x24xf32>
    %cst_57 = arith.constant dense<0.000000e+00> : vector<6x24xf32>
    %211 = tpu.matmul %205, %210, %cst_57 {dimension_numbers = #tpu.dot_dimension_numbers<[1], [0], [0], [1], [0, 0, 1, 1], [], []>} : vector<6x24xf32>, vector<24x24xf32>, vector<6x24xf32> -> vector<6x24xf32>
    %cst_58 = arith.constant dense<0.000000e+00> : vector<6x24xf32>
    %212 = tpu.matmul %206, %211, %cst_58 {dimension_numbers = #tpu.dot_dimension_numbers<[1], [0], [0], [1], [0, 0, 1, 1], [], []>} : vector<6x6xf32>, vector<6x24xf32>, vector<6x24xf32> -> vector<6x24xf32>
    %c0_59 = arith.constant 0 : index
    %c0_60 = arith.constant 0 : index
    %c0_61 = arith.constant 0 : index
    %213 = vector.load %arg25[%c0_59, %c0_60, %c0_61] : memref<2x1x24xf32, #tpu.memory_space<vmem>>, vector<1x1x24xf32>
    %214 = vector.shape_cast %213 : vector<1x1x24xf32> to vector<1x24xf32>
    %215 = vector.broadcast %214 : vector<1x24xf32> to vector<6x24xf32>
    %216 = arith.addf %212, %215 : vector<6x24xf32>
    %cst_62 = arith.constant 0.000000e+00 : f32
    %217 = vector.broadcast %cst_62 : f32 to vector<6x24xf32>
    %218 = arith.maximumf %216, %217 : vector<6x24xf32>
    %c1 = arith.constant 1 : index
    %c0_63 = arith.constant 0 : index
    %c0_64 = arith.constant 0 : index
    %219 = vector.load %arg24[%c1, %c0_63, %c0_64] : memref<2x24x24xf32, #tpu.memory_space<vmem>>, vector<1x24x24xf32>
    %220 = vector.shape_cast %219 : vector<1x24x24xf32> to vector<24x24xf32>
    %cst_65 = arith.constant dense<0.000000e+00> : vector<6x24xf32>
    %221 = tpu.matmul %218, %220, %cst_65 {dimension_numbers = #tpu.dot_dimension_numbers<[1], [0], [0], [1], [0, 0, 1, 1], [], []>} : vector<6x24xf32>, vector<24x24xf32>, vector<6x24xf32> -> vector<6x24xf32>
    %cst_66 = arith.constant dense<0.000000e+00> : vector<6x24xf32>
    %222 = tpu.matmul %206, %221, %cst_66 {dimension_numbers = #tpu.dot_dimension_numbers<[1], [0], [0], [1], [0, 0, 1, 1], [], []>} : vector<6x6xf32>, vector<6x24xf32>, vector<6x24xf32> -> vector<6x24xf32>
    %c1_67 = arith.constant 1 : index
    %c0_68 = arith.constant 0 : index
    %c0_69 = arith.constant 0 : index
    %223 = vector.load %arg25[%c1_67, %c0_68, %c0_69] : memref<2x1x24xf32, #tpu.memory_space<vmem>>, vector<1x1x24xf32>
    %224 = vector.shape_cast %223 : vector<1x1x24xf32> to vector<1x24xf32>
    %225 = vector.broadcast %224 : vector<1x24xf32> to vector<6x24xf32>
    %226 = arith.addf %222, %225 : vector<6x24xf32>
    %cst_70 = arith.constant dense<0.000000e+00> : vector<6x2xf32>
    %227 = tpu.matmul %226, %207, %cst_70 {dimension_numbers = #tpu.dot_dimension_numbers<[1], [0], [0], [1], [0, 0, 1, 1], [], []>} : vector<6x24xf32>, vector<24x2xf32>, vector<6x2xf32> -> vector<6x2xf32>
    %228 = vector.broadcast %208 : vector<1x2xf32> to vector<6x2xf32>
    %229 = arith.addf %227, %228 : vector<6x2xf32>
    %cst_71 = arith.constant dense<0xFF800000> : vector<6xf32>
    %230 = vector.multi_reduction <maximumf>, %229, %cst_71 [1] : vector<6x2xf32> to vector<6xf32>
    %231 = vector.shape_cast %230 : vector<6xf32> to vector<6x1xf32>
    %232 = vector.broadcast %231 : vector<6x1xf32> to vector<6x2xf32>
    %233 = arith.subf %229, %232 : vector<6x2xf32>
    %234 = math.exp %233 : vector<6x2xf32>
    %cst_72 = arith.constant dense<0.000000e+00> : vector<6xf32>
    %235 = vector.multi_reduction <add>, %234, %cst_72 [1] : vector<6x2xf32> to vector<6xf32>
    %236 = vector.shape_cast %235 : vector<6xf32> to vector<6x1xf32>
    %237 = tpu.reciprocal %236 {approx = true} : vector<6x1xf32> -> vector<6x1xf32>
    %238 = vector.broadcast %237 : vector<6x1xf32> to vector<6x2xf32>
    %239 = arith.mulf %234, %238 : vector<6x2xf32>
    %c0_73 = arith.constant 0 : index
    %c0_74 = arith.constant 0 : index
    %240 = vector.load %arg32[%c0_73, %c0_74] : memref<6x2xf32, #tpu.memory_space<vmem>>, vector<6x2xf32>
    tpu.vector_store %arg32[%c0_73, %c0_74], %239 {strides = array<i32>} : memref<6x2xf32, #tpu.memory_space<vmem>>, vector<6x2xf32>,
    %c0_75 = arith.constant 0 : index
    %c0_76 = arith.constant 0 : index
    %241 = vector.load %arg6[%c0_75, %c0_76] : memref<50x16xf32, #tpu.memory_space<vmem>>, vector<50x16xf32>
    %c0_77 = arith.constant 0 : index
    %c0_78 = arith.constant 0 : index
    %242 = vector.load %arg12[%c0_77, %c0_78] : memref<16x384xf32, #tpu.memory_space<vmem>>, vector<16x384xf32>
    %c0_79 = arith.constant 0 : index
    %c0_80 = arith.constant 0 : index
    %243 = vector.load %arg13[%c0_79, %c0_80] : memref<128x384xf32, #tpu.memory_space<vmem>>, vector<128x384xf32>
    %c0_81 = arith.constant 0 : index
    %c0_82 = arith.constant 0 : index
    %244 = vector.load %arg14[%c0_81, %c0_82] : memref<1x384xf32, #tpu.memory_space<vmem>>, vector<1x384xf32>
    %c0_83 = arith.constant 0 : index
    %c0_84 = arith.constant 0 : index
    %245 = vector.load %arg15[%c0_83, %c0_84] : memref<1x384xf32, #tpu.memory_space<vmem>>, vector<1x384xf32>
    %cst_85 = arith.constant dense<0.000000e+00> : vector<50x384xf32>
    %246 = tpu.matmul %241, %242, %cst_85 {dimension_numbers = #tpu.dot_dimension_numbers<[1], [0], [0], [1], [0, 0, 1, 1], [], []>} : vector<50x16xf32>, vector<16x384xf32>, vector<50x384xf32> -> vector<50x384xf32>
    %247 = vector.broadcast %244 : vector<1x384xf32> to vector<50x384xf32>
    %248 = arith.addf %246, %247 : vector<50x384xf32>
    %249 = vector.shape_cast %245 : vector<1x384xf32> to vector<1x384xf32>
    %250 = vector.broadcast %249 : vector<1x384xf32> to vector<10x384xf32>
    %cst_86 = arith.constant 0.000000e+00 : f32
    %251 = vector.broadcast %cst_86 : f32 to vector<10x128xf32>
    %252 = vector.extract_strided_slice %248 {offsets = [0, 0], sizes = [10, 384], strides = [1, 1]} : vector<50x384xf32> to vector<10x384xf32>
    %cst_87 = arith.constant dense<0.000000e+00> : vector<10x384xf32>
    %253 = tpu.matmul %251, %243, %cst_87 {dimension_numbers = #tpu.dot_dimension_numbers<[1], [0], [0], [1], [0, 0, 1, 1], [], []>} : vector<10x128xf32>, vector<128x384xf32>, vector<10x384xf32> -> vector<10x384xf32>
    %254 = arith.addf %253, %250 : vector<10x384xf32>
    %255 = vector.extract_strided_slice %252 {offsets = [0, 0], sizes = [10, 128], strides = [1, 1]} : vector<10x384xf32> to vector<10x128xf32>
    %256 = vector.extract_strided_slice %254 {offsets = [0, 0], sizes = [10, 128], strides = [1, 1]} : vector<10x384xf32> to vector<10x128xf32>
    %257 = arith.addf %255, %256 : vector<10x128xf32>
    %258 = arith.negf %257 : vector<10x128xf32>
    %259 = math.exp %258 : vector<10x128xf32>
    %cst_88 = arith.constant 1.000000e+00 : f32
    %260 = vector.broadcast %cst_88 : f32 to vector<10x128xf32>
    %261 = arith.addf %260, %259 : vector<10x128xf32>
    %262 = arith.divf %260, %261 : vector<10x128xf32>
    %263 = vector.extract_strided_slice %252 {offsets = [0, 128], sizes = [10, 128], strides = [1, 1]} : vector<10x384xf32> to vector<10x128xf32>
    %264 = vector.extract_strided_slice %254 {offsets = [0, 128], sizes = [10, 128], strides = [1, 1]} : vector<10x384xf32> to vector<10x128xf32>
    %265 = arith.addf %263, %264 : vector<10x128xf32>
    %266 = arith.negf %265 : vector<10x128xf32>
    %267 = math.exp %266 : vector<10x128xf32>
    %cst_89 = arith.constant 1.000000e+00 : f32
    %268 = vector.broadcast %cst_89 : f32 to vector<10x128xf32>
    %269 = arith.addf %268, %267 : vector<10x128xf32>
    %270 = arith.divf %268, %269 : vector<10x128xf32>
    %271 = vector.extract_strided_slice %252 {offsets = [0, 256], sizes = [10, 128], strides = [1, 1]} : vector<10x384xf32> to vector<10x128xf32>
    %272 = vector.extract_strided_slice %254 {offsets = [0, 256], sizes = [10, 128], strides = [1, 1]} : vector<10x384xf32> to vector<10x128xf32>
    %273 = arith.mulf %262, %272 : vector<10x128xf32>
    %274 = arith.addf %271, %273 : vector<10x128xf32>
    %275 = math.tanh %274 : vector<10x128xf32>
    %cst_90 = arith.constant 1.000000e+00 : f32
    %276 = vector.broadcast %cst_90 : f32 to vector<10x128xf32>
    %277 = arith.subf %276, %270 : vector<10x128xf32>
    %278 = arith.mulf %277, %275 : vector<10x128xf32>
    %279 = arith.mulf %270, %251 : vector<10x128xf32>
    %280 = arith.addf %278, %279 : vector<10x128xf32>
    %281 = vector.extract_strided_slice %248 {offsets = [10, 0], sizes = [10, 384], strides = [1, 1]} : vector<50x384xf32> to vector<10x384xf32>
    %cst_91 = arith.constant dense<0.000000e+00> : vector<10x384xf32>
    %282 = tpu.matmul %280, %243, %cst_91 {dimension_numbers = #tpu.dot_dimension_numbers<[1], [0], [0], [1], [0, 0, 1, 1], [], []>} : vector<10x128xf32>, vector<128x384xf32>, vector<10x384xf32> -> vector<10x384xf32>
    %283 = arith.addf %282, %250 : vector<10x384xf32>
    %284 = vector.extract_strided_slice %281 {offsets = [0, 0], sizes = [10, 128], strides = [1, 1]} : vector<10x384xf32> to vector<10x128xf32>
    %285 = vector.extract_strided_slice %283 {offsets = [0, 0], sizes = [10, 128], strides = [1, 1]} : vector<10x384xf32> to vector<10x128xf32>
    %286 = arith.addf %284, %285 : vector<10x128xf32>
    %287 = arith.negf %286 : vector<10x128xf32>
    %288 = math.exp %287 : vector<10x128xf32>
    %cst_92 = arith.constant 1.000000e+00 : f32
    %289 = vector.broadcast %cst_92 : f32 to vector<10x128xf32>
    %290 = arith.addf %289, %288 : vector<10x128xf32>
    %291 = arith.divf %289, %290 : vector<10x128xf32>
    %292 = vector.extract_strided_slice %281 {offsets = [0, 128], sizes = [10, 128], strides = [1, 1]} : vector<10x384xf32> to vector<10x128xf32>
    %293 = vector.extract_strided_slice %283 {offsets = [0, 128], sizes = [10, 128], strides = [1, 1]} : vector<10x384xf32> to vector<10x128xf32>
    %294 = arith.addf %292, %293 : vector<10x128xf32>
    %295 = arith.negf %294 : vector<10x128xf32>
    %296 = math.exp %295 : vector<10x128xf32>
    %cst_93 = arith.constant 1.000000e+00 : f32
    %297 = vector.broadcast %cst_93 : f32 to vector<10x128xf32>
    %298 = arith.addf %297, %296 : vector<10x128xf32>
    %299 = arith.divf %297, %298 : vector<10x128xf32>
    %300 = vector.extract_strided_slice %281 {offsets = [0, 256], sizes = [10, 128], strides = [1, 1]} : vector<10x384xf32> to vector<10x128xf32>
    %301 = vector.extract_strided_slice %283 {offsets = [0, 256], sizes = [10, 128], strides = [1, 1]} : vector<10x384xf32> to vector<10x128xf32>
    %302 = arith.mulf %291, %301 : vector<10x128xf32>
    %303 = arith.addf %300, %302 : vector<10x128xf32>
    %304 = math.tanh %303 : vector<10x128xf32>
    %cst_94 = arith.constant 1.000000e+00 : f32
    %305 = vector.broadcast %cst_94 : f32 to vector<10x128xf32>
    %306 = arith.subf %305, %299 : vector<10x128xf32>
    %307 = arith.mulf %306, %304 : vector<10x128xf32>
    %308 = arith.mulf %299, %280 : vector<10x128xf32>
    %309 = arith.addf %307, %308 : vector<10x128xf32>
    %310 = vector.extract_strided_slice %248 {offsets = [20, 0], sizes = [10, 384], strides = [1, 1]} : vector<50x384xf32> to vector<10x384xf32>
    %cst_95 = arith.constant dense<0.000000e+00> : vector<10x384xf32>
    %311 = tpu.matmul %309, %243, %cst_95 {dimension_numbers = #tpu.dot_dimension_numbers<[1], [0], [0], [1], [0, 0, 1, 1], [], []>} : vector<10x128xf32>, vector<128x384xf32>, vector<10x384xf32> -> vector<10x384xf32>
    %312 = arith.addf %311, %250 : vector<10x384xf32>
    %313 = vector.extract_strided_slice %310 {offsets = [0, 0], sizes = [10, 128], strides = [1, 1]} : vector<10x384xf32> to vector<10x128xf32>
    %314 = vector.extract_strided_slice %312 {offsets = [0, 0], sizes = [10, 128], strides = [1, 1]} : vector<10x384xf32> to vector<10x128xf32>
    %315 = arith.addf %313, %314 : vector<10x128xf32>
    %316 = arith.negf %315 : vector<10x128xf32>
    %317 = math.exp %316 : vector<10x128xf32>
    %cst_96 = arith.constant 1.000000e+00 : f32
    %318 = vector.broadcast %cst_96 : f32 to vector<10x128xf32>
    %319 = arith.addf %318, %317 : vector<10x128xf32>
    %320 = arith.divf %318, %319 : vector<10x128xf32>
    %321 = vector.extract_strided_slice %310 {offsets = [0, 128], sizes = [10, 128], strides = [1, 1]} : vector<10x384xf32> to vector<10x128xf32>
    %322 = vector.extract_strided_slice %312 {offsets = [0, 128], sizes = [10, 128], strides = [1, 1]} : vector<10x384xf32> to vector<10x128xf32>
    %323 = arith.addf %321, %322 : vector<10x128xf32>
    %324 = arith.negf %323 : vector<10x128xf32>
    %325 = math.exp %324 : vector<10x128xf32>
    %cst_97 = arith.constant 1.000000e+00 : f32
    %326 = vector.broadcast %cst_97 : f32 to vector<10x128xf32>
    %327 = arith.addf %326, %325 : vector<10x128xf32>
    %328 = arith.divf %326, %327 : vector<10x128xf32>
    %329 = vector.extract_strided_slice %310 {offsets = [0, 256], sizes = [10, 128], strides = [1, 1]} : vector<10x384xf32> to vector<10x128xf32>
    %330 = vector.extract_strided_slice %312 {offsets = [0, 256], sizes = [10, 128], strides = [1, 1]} : vector<10x384xf32> to vector<10x128xf32>
    %331 = arith.mulf %320, %330 : vector<10x128xf32>
    %332 = arith.addf %329, %331 : vector<10x128xf32>
    %333 = math.tanh %332 : vector<10x128xf32>
    %cst_98 = arith.constant 1.000000e+00 : f32
    %334 = vector.broadcast %cst_98 : f32 to vector<10x128xf32>
    %335 = arith.subf %334, %328 : vector<10x128xf32>
    %336 = arith.mulf %335, %333 : vector<10x128xf32>
    %337 = arith.mulf %328, %309 : vector<10x128xf32>
    %338 = arith.addf %336, %337 : vector<10x128xf32>
    %339 = vector.extract_strided_slice %248 {offsets = [30, 0], sizes = [10, 384], strides = [1, 1]} : vector<50x384xf32> to vector<10x384xf32>
    %cst_99 = arith.constant dense<0.000000e+00> : vector<10x384xf32>
    %340 = tpu.matmul %338, %243, %cst_99 {dimension_numbers = #tpu.dot_dimension_numbers<[1], [0], [0], [1], [0, 0, 1, 1], [], []>} : vector<10x128xf32>, vector<128x384xf32>, vector<10x384xf32> -> vector<10x384xf32>
    %341 = arith.addf %340, %250 : vector<10x384xf32>
    %342 = vector.extract_strided_slice %339 {offsets = [0, 0], sizes = [10, 128], strides = [1, 1]} : vector<10x384xf32> to vector<10x128xf32>
    %343 = vector.extract_strided_slice %341 {offsets = [0, 0], sizes = [10, 128], strides = [1, 1]} : vector<10x384xf32> to vector<10x128xf32>
    %344 = arith.addf %342, %343 : vector<10x128xf32>
    %345 = arith.negf %344 : vector<10x128xf32>
    %346 = math.exp %345 : vector<10x128xf32>
    %cst_100 = arith.constant 1.000000e+00 : f32
    %347 = vector.broadcast %cst_100 : f32 to vector<10x128xf32>
    %348 = arith.addf %347, %346 : vector<10x128xf32>
    %349 = arith.divf %347, %348 : vector<10x128xf32>
    %350 = vector.extract_strided_slice %339 {offsets = [0, 128], sizes = [10, 128], strides = [1, 1]} : vector<10x384xf32> to vector<10x128xf32>
    %351 = vector.extract_strided_slice %341 {offsets = [0, 128], sizes = [10, 128], strides = [1, 1]} : vector<10x384xf32> to vector<10x128xf32>
    %352 = arith.addf %350, %351 : vector<10x128xf32>
    %353 = arith.negf %352 : vector<10x128xf32>
    %354 = math.exp %353 : vector<10x128xf32>
    %cst_101 = arith.constant 1.000000e+00 : f32
    %355 = vector.broadcast %cst_101 : f32 to vector<10x128xf32>
    %356 = arith.addf %355, %354 : vector<10x128xf32>
    %357 = arith.divf %355, %356 : vector<10x128xf32>
    %358 = vector.extract_strided_slice %339 {offsets = [0, 256], sizes = [10, 128], strides = [1, 1]} : vector<10x384xf32> to vector<10x128xf32>
    %359 = vector.extract_strided_slice %341 {offsets = [0, 256], sizes = [10, 128], strides = [1, 1]} : vector<10x384xf32> to vector<10x128xf32>
    %360 = arith.mulf %349, %359 : vector<10x128xf32>
    %361 = arith.addf %358, %360 : vector<10x128xf32>
    %362 = math.tanh %361 : vector<10x128xf32>
    %cst_102 = arith.constant 1.000000e+00 : f32
    %363 = vector.broadcast %cst_102 : f32 to vector<10x128xf32>
    %364 = arith.subf %363, %357 : vector<10x128xf32>
    %365 = arith.mulf %364, %362 : vector<10x128xf32>
    %366 = arith.mulf %357, %338 : vector<10x128xf32>
    %367 = arith.addf %365, %366 : vector<10x128xf32>
    %368 = vector.extract_strided_slice %248 {offsets = [40, 0], sizes = [10, 384], strides = [1, 1]} : vector<50x384xf32> to vector<10x384xf32>
    %cst_103 = arith.constant dense<0.000000e+00> : vector<10x384xf32>
    %369 = tpu.matmul %367, %243, %cst_103 {dimension_numbers = #tpu.dot_dimension_numbers<[1], [0], [0], [1], [0, 0, 1, 1], [], []>} : vector<10x128xf32>, vector<128x384xf32>, vector<10x384xf32> -> vector<10x384xf32>
    %370 = arith.addf %369, %250 : vector<10x384xf32>
    %371 = vector.extract_strided_slice %368 {offsets = [0, 0], sizes = [10, 128], strides = [1, 1]} : vector<10x384xf32> to vector<10x128xf32>
    %372 = vector.extract_strided_slice %370 {offsets = [0, 0], sizes = [10, 128], strides = [1, 1]} : vector<10x384xf32> to vector<10x128xf32>
    %373 = arith.addf %371, %372 : vector<10x128xf32>
    %374 = arith.negf %373 : vector<10x128xf32>
    %375 = math.exp %374 : vector<10x128xf32>
    %cst_104 = arith.constant 1.000000e+00 : f32
    %376 = vector.broadcast %cst_104 : f32 to vector<10x128xf32>
    %377 = arith.addf %376, %375 : vector<10x128xf32>
    %378 = arith.divf %376, %377 : vector<10x128xf32>
    %379 = vector.extract_strided_slice %368 {offsets = [0, 128], sizes = [10, 128], strides = [1, 1]} : vector<10x384xf32> to vector<10x128xf32>
    %380 = vector.extract_strided_slice %370 {offsets = [0, 128], sizes = [10, 128], strides = [1, 1]} : vector<10x384xf32> to vector<10x128xf32>
    %381 = arith.addf %379, %380 : vector<10x128xf32>
    %382 = arith.negf %381 : vector<10x128xf32>
    %383 = math.exp %382 : vector<10x128xf32>
    %cst_105 = arith.constant 1.000000e+00 : f32
    %384 = vector.broadcast %cst_105 : f32 to vector<10x128xf32>
    %385 = arith.addf %384, %383 : vector<10x128xf32>
    %386 = arith.divf %384, %385 : vector<10x128xf32>
    %387 = vector.extract_strided_slice %368 {offsets = [0, 256], sizes = [10, 128], strides = [1, 1]} : vector<10x384xf32> to vector<10x128xf32>
    %388 = vector.extract_strided_slice %370 {offsets = [0, 256], sizes = [10, 128], strides = [1, 1]} : vector<10x384xf32> to vector<10x128xf32>
    %389 = arith.mulf %378, %388 : vector<10x128xf32>
    %390 = arith.addf %387, %389 : vector<10x128xf32>
    %391 = math.tanh %390 : vector<10x128xf32>
    %cst_106 = arith.constant 1.000000e+00 : f32
    %392 = vector.broadcast %cst_106 : f32 to vector<10x128xf32>
    %393 = arith.subf %392, %386 : vector<10x128xf32>
    %394 = arith.mulf %393, %391 : vector<10x128xf32>
    %395 = arith.mulf %386, %367 : vector<10x128xf32>
    %396 = arith.addf %394, %395 : vector<10x128xf32>
    %c0_107 = arith.constant 0 : index
    %c0_108 = arith.constant 0 : index
    %397 = vector.load %arg5[%c0_107, %c0_108] : memref<10x16xf32, #tpu.memory_space<vmem>>, vector<10x16xf32>
    %c0_109 = arith.constant 0 : index
    %c0_110 = arith.constant 0 : index
    %398 = vector.load %arg18[%c0_109, %c0_110] : memref<16x72xf32, #tpu.memory_space<vmem>>, vector<16x72xf32>
    %cst_111 = arith.constant dense<0.000000e+00> : vector<10x72xf32>
    %399 = tpu.matmul %397, %398, %cst_111 {dimension_numbers = #tpu.dot_dimension_numbers<[1], [0], [0], [1], [0, 0, 1, 1], [], []>} : vector<10x16xf32>, vector<16x72xf32>, vector<10x72xf32> -> vector<10x72xf32>
    %c0_112 = arith.constant 0 : index
    %c0_113 = arith.constant 0 : index
    %400 = vector.load %arg19[%c0_112, %c0_113] : memref<1x72xf32, #tpu.memory_space<vmem>>, vector<1x72xf32>
    %401 = vector.broadcast %400 : vector<1x72xf32> to vector<10x72xf32>
    %402 = arith.addf %399, %401 : vector<10x72xf32>
    %403 = vector.extract_strided_slice %402 {offsets = [0, 0], sizes = [10, 24], strides = [1, 1]} : vector<10x72xf32> to vector<10x24xf32>
    %404 = arith.negf %403 : vector<10x24xf32>
    %405 = math.exp %404 : vector<10x24xf32>
    %cst_114 = arith.constant 1.000000e+00 : f32
    %406 = vector.broadcast %cst_114 : f32 to vector<10x24xf32>
    %407 = arith.addf %406, %405 : vector<10x24xf32>
    %408 = arith.divf %406, %407 : vector<10x24xf32>
    %409 = vector.extract_strided_slice %402 {offsets = [0, 24], sizes = [10, 24], strides = [1, 1]} : vector<10x72xf32> to vector<10x24xf32>
    %410 = arith.negf %409 : vector<10x24xf32>
    %411 = math.exp %410 : vector<10x24xf32>
    %cst_115 = arith.constant 1.000000e+00 : f32
    %412 = vector.broadcast %cst_115 : f32 to vector<10x24xf32>
    %413 = arith.addf %412, %411 : vector<10x24xf32>
    %414 = arith.divf %412, %413 : vector<10x24xf32>
    %415 = vector.extract_strided_slice %402 {offsets = [0, 48], sizes = [10, 24], strides = [1, 1]} : vector<10x72xf32> to vector<10x24xf32>
    %416 = math.tanh %415 : vector<10x24xf32>
    %417 = arith.mulf %408, %416 : vector<10x24xf32>
    %418 = math.tanh %417 : vector<10x24xf32>
    %419 = arith.mulf %414, %418 : vector<10x24xf32>
    %c0_116 = arith.constant 0 : index
    %c0_117 = arith.constant 0 : index
    %420 = vector.load %arg4[%c0_116, %c0_117] : memref<10x12xf32, #tpu.memory_space<vmem>>, vector<10x12xf32>
    %421 = tpu.concatenate %420, %419, %396 in 1 : vector<10x12xf32>, vector<10x24xf32>, vector<10x128xf32> -> vector<10x164xf32>
    %c0_118 = arith.constant 0 : index
    %c0_119 = arith.constant 0 : index
    %422 = vector.load %arg22[%c0_118, %c0_119] : memref<164x24xf32, #tpu.memory_space<vmem>>, vector<164x24xf32>
    %cst_120 = arith.constant dense<0.000000e+00> : vector<10x24xf32>
    %423 = tpu.matmul %421, %422, %cst_120 {dimension_numbers = #tpu.dot_dimension_numbers<[1], [0], [0], [1], [0, 0, 1, 1], [], []>} : vector<10x164xf32>, vector<164x24xf32>, vector<10x24xf32> -> vector<10x24xf32>
    %c0_121 = arith.constant 0 : index
    %c0_122 = arith.constant 0 : index
    %424 = vector.load %arg23[%c0_121, %c0_122] : memref<1x24xf32, #tpu.memory_space<vmem>>, vector<1x24xf32>
    %425 = vector.broadcast %424 : vector<1x24xf32> to vector<10x24xf32>
    %426 = arith.addf %423, %425 : vector<10x24xf32>
    %c0_123 = arith.constant 0 : index
    %c0_124 = arith.constant 0 : index
    %427 = vector.load %arg7[%c0_123, %c0_124] : memref<10x10xf32, #tpu.memory_space<vmem>>, vector<10x10xf32>
    %c0_125 = arith.constant 0 : index
    %c0_126 = arith.constant 0 : index
    %428 = vector.load %arg30[%c0_125, %c0_126] : memref<24x2xf32, #tpu.memory_space<vmem>>, vector<24x2xf32>
    %c0_127 = arith.constant 0 : index
    %c0_128 = arith.constant 0 : index
    %429 = vector.load %arg31[%c0_127, %c0_128] : memref<1x2xf32, #tpu.memory_space<vmem>>, vector<1x2xf32>
    %c0_129 = arith.constant 0 : index
    %c0_130 = arith.constant 0 : index
    %c0_131 = arith.constant 0 : index
    %430 = vector.load %arg26[%c0_129, %c0_130, %c0_131] : memref<2x24x24xf32, #tpu.memory_space<vmem>>, vector<1x24x24xf32>
    %431 = vector.shape_cast %430 : vector<1x24x24xf32> to vector<24x24xf32>
    %cst_132 = arith.constant dense<0.000000e+00> : vector<10x24xf32>
    %432 = tpu.matmul %426, %431, %cst_132 {dimension_numbers = #tpu.dot_dimension_numbers<[1], [0], [0], [1], [0, 0, 1, 1], [], []>} : vector<10x24xf32>, vector<24x24xf32>, vector<10x24xf32> -> vector<10x24xf32>
    %cst_133 = arith.constant dense<0.000000e+00> : vector<10x24xf32>
    %433 = tpu.matmul %427, %432, %cst_133 {dimension_numbers = #tpu.dot_dimension_numbers<[1], [0], [0], [1], [0, 0, 1, 1], [], []>} : vector<10x10xf32>, vector<10x24xf32>, vector<10x24xf32> -> vector<10x24xf32>
    %c0_134 = arith.constant 0 : index
    %c0_135 = arith.constant 0 : index
    %c0_136 = arith.constant 0 : index
    %434 = vector.load %arg27[%c0_134, %c0_135, %c0_136] : memref<2x1x24xf32, #tpu.memory_space<vmem>>, vector<1x1x24xf32>
    %435 = vector.shape_cast %434 : vector<1x1x24xf32> to vector<1x24xf32>
    %436 = vector.broadcast %435 : vector<1x24xf32> to vector<10x24xf32>
    %437 = arith.addf %433, %436 : vector<10x24xf32>
    %cst_137 = arith.constant 0.000000e+00 : f32
    %438 = vector.broadcast %cst_137 : f32 to vector<10x24xf32>
    %439 = arith.maximumf %437, %438 : vector<10x24xf32>
    %c1_138 = arith.constant 1 : index
    %c0_139 = arith.constant 0 : index
    %c0_140 = arith.constant 0 : index
    %440 = vector.load %arg26[%c1_138, %c0_139, %c0_140] : memref<2x24x24xf32, #tpu.memory_space<vmem>>, vector<1x24x24xf32>
    %441 = vector.shape_cast %440 : vector<1x24x24xf32> to vector<24x24xf32>
    %cst_141 = arith.constant dense<0.000000e+00> : vector<10x24xf32>
    %442 = tpu.matmul %439, %441, %cst_141 {dimension_numbers = #tpu.dot_dimension_numbers<[1], [0], [0], [1], [0, 0, 1, 1], [], []>} : vector<10x24xf32>, vector<24x24xf32>, vector<10x24xf32> -> vector<10x24xf32>
    %cst_142 = arith.constant dense<0.000000e+00> : vector<10x24xf32>
    %443 = tpu.matmul %427, %442, %cst_142 {dimension_numbers = #tpu.dot_dimension_numbers<[1], [0], [0], [1], [0, 0, 1, 1], [], []>} : vector<10x10xf32>, vector<10x24xf32>, vector<10x24xf32> -> vector<10x24xf32>
    %c1_143 = arith.constant 1 : index
    %c0_144 = arith.constant 0 : index
    %c0_145 = arith.constant 0 : index
    %444 = vector.load %arg27[%c1_143, %c0_144, %c0_145] : memref<2x1x24xf32, #tpu.memory_space<vmem>>, vector<1x1x24xf32>
    %445 = vector.shape_cast %444 : vector<1x1x24xf32> to vector<1x24xf32>
    %446 = vector.broadcast %445 : vector<1x24xf32> to vector<10x24xf32>
    %447 = arith.addf %443, %446 : vector<10x24xf32>
    %cst_146 = arith.constant dense<0.000000e+00> : vector<10x2xf32>
    %448 = tpu.matmul %447, %428, %cst_146 {dimension_numbers = #tpu.dot_dimension_numbers<[1], [0], [0], [1], [0, 0, 1, 1], [], []>} : vector<10x24xf32>, vector<24x2xf32>, vector<10x2xf32> -> vector<10x2xf32>
    %449 = vector.broadcast %429 : vector<1x2xf32> to vector<10x2xf32>
    %450 = arith.addf %448, %449 : vector<10x2xf32>
    %cst_147 = arith.constant dense<0xFF800000> : vector<10xf32>
    %451 = vector.multi_reduction <maximumf>, %450, %cst_147 [1] : vector<10x2xf32> to vector<10xf32>
    %452 = vector.shape_cast %451 : vector<10xf32> to vector<10x1xf32>
    %453 = vector.broadcast %452 : vector<10x1xf32> to vector<10x2xf32>
    %454 = arith.subf %450, %453 : vector<10x2xf32>
    %455 = math.exp %454 : vector<10x2xf32>
    %cst_148 = arith.constant dense<0.000000e+00> : vector<10xf32>
    %456 = vector.multi_reduction <add>, %455, %cst_148 [1] : vector<10x2xf32> to vector<10xf32>
    %457 = vector.shape_cast %456 : vector<10xf32> to vector<10x1xf32>
    %458 = tpu.reciprocal %457 {approx = true} : vector<10x1xf32> -> vector<10x1xf32>
    %459 = vector.broadcast %458 : vector<10x1xf32> to vector<10x2xf32>
    %460 = arith.mulf %455, %459 : vector<10x2xf32>
    %c0_149 = arith.constant 0 : index
    %c0_150 = arith.constant 0 : index
    %461 = vector.load %arg33[%c0_149, %c0_150] : memref<10x2xf32, #tpu.memory_space<vmem>>, vector<10x2xf32>
    tpu.vector_store %arg33[%c0_149, %c0_150], %460 {strides = array<i32>} : memref<10x2xf32, #tpu.memory_space<vmem>>, vector<10x2xf32>,
    return
  }
}

</mosaic_0001>

<llo_original>
// kernel: fix_locator_forward.1
$region0: #{fix_locator_forward.1}
  #allocation0 [shape = 'u32[]', space=smem, size = 0x4, offset = 0x4, fixed_abs, tag = 'smem constant byte address 0x4 - core index']
  #allocation1 [shape = 'u32[144,128]{1,0:T(1,128)}', space=vmem, size = 0x12000, scoped, tag = 'internal scratch']
  %s0 = inlined_call_operand.smem [shape: u32[34], index: -1, kind: input, shape index: {}]
  %s1 = sld [smem:[%s0]]
  %s2 = scalar_lea.smem %s0, 1
  %s3 = sld [smem:[%s2]]
  %s4 = scalar_lea.smem %s0, 2
  %s5 = sld [smem:[%s4]]
  %s6 = scalar_lea.smem %s0, 3
  %s7 = sld [smem:[%s6]]
  %s8 = scalar_lea.smem %s0, 4
  %s9 = sld [smem:[%s8]]
  %s10 = scalar_lea.smem %s0, 5
  %s11 = sld [smem:[%s10]]
  %s12 = scalar_lea.smem %s0, 6
  %s13 = sld [smem:[%s12]]
  %s14 = scalar_lea.smem %s0, 7
  %s15 = sld [smem:[%s14]]
  %s16 = scalar_lea.smem %s0, 8
  %s17 = sld [smem:[%s16]]
  %s18 = scalar_lea.smem %s0, 9
  %s19 = sld [smem:[%s18]]
  %s20 = scalar_lea.smem %s0, 10
  %s21 = sld [smem:[%s20]]
  %s22 = scalar_lea.smem %s0, 11
  %s23 = sld [smem:[%s22]]
  %s24 = scalar_lea.smem %s0, 12
  %s25 = sld [smem:[%s24]]
  %s26 = scalar_lea.smem %s0, 13
  %s27 = sld [smem:[%s26]]
  %s28 = scalar_lea.smem %s0, 14
  %s29 = sld [smem:[%s28]]
  %s30 = scalar_lea.smem %s0, 15
  %s31 = sld [smem:[%s30]]
  %s32 = scalar_lea.smem %s0, 16
  %s33 = sld [smem:[%s32]]
  %s34 = scalar_lea.smem %s0, 17
  %s35 = sld [smem:[%s34]]
  %s36 = scalar_lea.smem %s0, 18
  %s37 = sld [smem:[%s36]]
  %s38 = scalar_lea.smem %s0, 19
  %s39 = sld [smem:[%s38]]
  %s40 = scalar_lea.smem %s0, 20
  %s41 = sld [smem:[%s40]]
  %s42 = scalar_lea.smem %s0, 21
  %s43 = sld [smem:[%s42]]
  %s44 = scalar_lea.smem %s0, 22
  %s45 = sld [smem:[%s44]]
  %s46 = scalar_lea.smem %s0, 23
  %s47 = sld [smem:[%s46]]
  %s48 = scalar_lea.smem %s0, 24
  %s49 = sld [smem:[%s48]]
  %s50 = scalar_lea.smem %s0, 25
  %s51 = sld [smem:[%s50]]
  %s52 = scalar_lea.smem %s0, 26
  %s53 = sld [smem:[%s52]]
  %s54 = scalar_lea.smem %s0, 27
  %s55 = sld [smem:[%s54]]
  %s56 = scalar_lea.smem %s0, 28
  %s57 = sld [smem:[%s56]]
  %s58 = scalar_lea.smem %s0, 29
  %s59 = sld [smem:[%s58]]
  %s60 = scalar_lea.smem %s0, 30
  %s61 = sld [smem:[%s60]]
  %s62 = scalar_lea.smem %s0, 31
  %s63 = sld [smem:[%s62]]
  %s64 = scalar_lea.smem %s0, 32
  %s65 = sld [smem:[%s64]]
  %s66 = scalar_lea.smem %s0, 33
  %s67 = sld [smem:[%s66]]
  %68 = xla_tuple %s65, %s67
  %s69 = sld [smem:[#allocation0]]
  $region210: #{fix_locator_forward.1} parent=0
    _
  %s71 = ssub.s32 1, %s69
  %s72 = scalar_select 0, %s71, %s69
  $region1: #{fix_locator_forward.1} parent=0
    #allocation2 [shape = 'u8[4096]{0}', space=vmem, size = 0x1000, scoped, tag = 'input window, operand 1, single buffered']
    #allocation3 [shape = 's32[1]{0}', space=sflag, size = 0x4, scoped, tag = 'scoped memory for fix_locator_forward.1']
    #allocation4 [shape = 'u8[4096]{0}', space=vmem, size = 0x1000, scoped, tag = 'input window, operand 2, single buffered']
    #allocation5 [shape = 's32[1]{0}', space=sflag, size = 0x4, scoped, tag = 'scoped memory for fix_locator_forward.1']
    #allocation6 [shape = 'u8[1536]{0}', space=vmem, size = 0x800, scoped, tag = 'input window, operand 10, single buffered']
    #allocation7 [shape = 'u8[1536]{0}', space=vmem, size = 0x800, scoped, tag = 'input window, operand 11, single buffered']
    #allocation8 [shape = 's32[1]{0}', space=sflag, size = 0x4, scoped, tag = 'scoped memory for fix_locator_forward.1']
    #allocation9 [shape = 'u8[196608]{0}', space=vmem, size = 0x30000, scoped, tag = 'input window, operand 13, single buffered']
    #allocation10 [shape = 'u8[1536]{0}', space=vmem, size = 0x800, scoped, tag = 'input window, operand 14, single buffered']
    #allocation11 [shape = 's32[1]{0}', space=sflag, size = 0x4, scoped, tag = 'scoped memory for fix_locator_forward.1']
    #allocation12 [shape = 'u8[1536]{0}', space=vmem, size = 0x800, scoped, tag = 'input window, operand 15, single buffered']
    #allocation13 [shape = 'u8[8192]{0}', space=vmem, size = 0x2000, scoped, tag = 'input window, operand 18, single buffered']
    #allocation14 [shape = 's32[1]{0}', space=sflag, size = 0x4, scoped, tag = 'scoped memory for fix_locator_forward.1']
    #allocation15 [shape = 'u8[512]{0}', space=vmem, size = 0x400, scoped, tag = 'input window, operand 19, single buffered']
    #allocation16 [shape = 'u8[512]{0}', space=vmem, size = 0x400, scoped, tag = 'input window, operand 21, single buffered']
    #allocation17 [shape = 's32[1]{0}', space=sflag, size = 0x4, scoped, tag = 'scoped memory for fix_locator_forward.1']
    #allocation18 [shape = 'u8[512]{0}', space=vmem, size = 0x400, scoped, tag = 'input window, operand 23, single buffered']
    #allocation19 [shape = 'u8[1024]{0}', space=vmem, size = 0x400, scoped, tag = 'input window, operand 25, single buffered']
    #allocation20 [shape = 's32[1]{0}', space=sflag, size = 0x4, scoped, tag = 'scoped memory for fix_locator_forward.1']
    #allocation21 [shape = 'u8[24576]{0}', space=vmem, size = 0x6000, scoped, tag = 'input window, operand 26, single buffered']
    #allocation22 [shape = 'u8[1024]{0}', space=vmem, size = 0x400, scoped, tag = 'input window, operand 27, single buffered']
    #allocation23 [shape = 's32[1]{0}', space=sflag, size = 0x4, scoped, tag = 'scoped memory for fix_locator_forward.1']
    #allocation24 [shape = 'u8[512]{0}', space=vmem, size = 0x400, scoped, tag = 'input window, operand 29, single buffered']
    #allocation25 [shape = 'u8[512]{0}', space=vmem, size = 0x400, scoped, tag = 'input window, operand 31, single buffered']
    #allocation26 [shape = 's32[1]{0}', space=sflag, size = 0x4, scoped, tag = 'scoped memory for fix_locator_forward.1']
    %73 = vsyncpa [#allocation3], 0
    %74 = vsyncpa [#allocation5], 0
    %75 = vsyncpa [#allocation8], 0
    %76 = vsyncpa [#allocation11], 0
    %77 = vsyncpa [#allocation14], 0
    %78 = vsyncpa [#allocation17], 0
    %79 = vsyncpa [#allocation20], 0
    %80 = vsyncpa [#allocation23], 0
    %81 = vsyncpa [#allocation26], 0
    // Predicated region
    $region2: #{fix_locator_forward.1} parent=1 // pred_check
      _
    $region3: #{fix_locator_forward.1} parent=1 // pred_check_branch
      %83 = sbr.rel (0) target = $region5
    $region4: #{fix_locator_forward.1} parent=1 // pred_region
      _
    $region5: #{fix_locator_forward.1} parent=1 // pred_fallthru
      _
    // Predicated region
    $region6: #{fix_locator_forward.1} parent=1 // pred_check
      _
    $region7: #{fix_locator_forward.1} parent=1 // pred_check_branch
      %85 = sbr.rel (0) target = $region9
    $region8: #{fix_locator_forward.1} parent=1 // pred_region
      %s87 = ssub.s32 128, 128
      %88 = vsyncadd [#allocation3], %s87
      %s90 = sshll.u32 [#allocation2], 4
      %s91 = int_to_ptr.vmem [resolvable:$true] %s90
      %93 = dma.hbm_to_vmem [thread:$0]  %s3, 128, %s91, [#allocation3]
    $region9: #{fix_locator_forward.1} parent=1 // pred_fallthru
      _
    // Predicated region
    $region10: #{fix_locator_forward.1} parent=1 // pred_check
      _
    $region11: #{fix_locator_forward.1} parent=1 // pred_check_branch
      %95 = sbr.rel (0) target = $region13
    $region12: #{fix_locator_forward.1} parent=1 // pred_region
      %s97 = ssub.s32 128, 128
      %98 = vsyncadd [#allocation5], %s97
      %s100 = sshll.u32 [#allocation4], 4
      %s101 = int_to_ptr.vmem [resolvable:$true] %s100
      %103 = dma.hbm_to_vmem [thread:$0]  %s5, 128, %s101, [#allocation5]
    $region13: #{fix_locator_forward.1} parent=1 // pred_fallthru
      _
    // Predicated region
    $region14: #{fix_locator_forward.1} parent=1 // pred_check
      _
    $region15: #{fix_locator_forward.1} parent=1 // pred_check_branch
      %105 = sbr.rel (0) target = $region17
    $region16: #{fix_locator_forward.1} parent=1 // pred_region
      _
    $region17: #{fix_locator_forward.1} parent=1 // pred_fallthru
      _
    // Predicated region
    $region18: #{fix_locator_forward.1} parent=1 // pred_check
      _
    $region19: #{fix_locator_forward.1} parent=1 // pred_check_branch
      %107 = sbr.rel (0) target = $region21
    $region20: #{fix_locator_forward.1} parent=1 // pred_region
      _
    $region21: #{fix_locator_forward.1} parent=1 // pred_fallthru
      _
    // Predicated region
    $region22: #{fix_locator_forward.1} parent=1 // pred_check
      _
    $region23: #{fix_locator_forward.1} parent=1 // pred_check_branch
      %109 = sbr.rel (0) target = $region25
    $region24: #{fix_locator_forward.1} parent=1 // pred_region
      _
    $region25: #{fix_locator_forward.1} parent=1 // pred_fallthru
      _
    // Predicated region
    $region26: #{fix_locator_forward.1} parent=1 // pred_check
      _
    $region27: #{fix_locator_forward.1} parent=1 // pred_check_branch
      %111 = sbr.rel (0) target = $region29
    $region28: #{fix_locator_forward.1} parent=1 // pred_region
      _
    $region29: #{fix_locator_forward.1} parent=1 // pred_fallthru
      _
    // Predicated region
    $region30: #{fix_locator_forward.1} parent=1 // pred_check
      _
    $region31: #{fix_locator_forward.1} parent=1 // pred_check_branch
      %113 = sbr.rel (0) target = $region33
    $region32: #{fix_locator_forward.1} parent=1 // pred_region
      _
    $region33: #{fix_locator_forward.1} parent=1 // pred_fallthru
      _
    // Predicated region
    $region34: #{fix_locator_forward.1} parent=1 // pred_check
      _
    $region35: #{fix_locator_forward.1} parent=1 // pred_check_branch
      %115 = sbr.rel (0) target = $region37
    $region36: #{fix_locator_forward.1} parent=1 // pred_region
      _
    $region37: #{fix_locator_forward.1} parent=1 // pred_fallthru
      _
    // Predicated region
    $region38: #{fix_locator_forward.1} parent=1 // pred_check
      _
    $region39: #{fix_locator_forward.1} parent=1 // pred_check_branch
      %117 = sbr.rel (0) target = $region41
    $region40: #{fix_locator_forward.1} parent=1 // pred_region
      _
    $region41: #{fix_locator_forward.1} parent=1 // pred_fallthru
      _
    // Predicated region
    $region42: #{fix_locator_forward.1} parent=1 // pred_check
      _
    $region43: #{fix_locator_forward.1} parent=1 // pred_check_branch
      %119 = sbr.rel (0) target = $region45
    $region44: #{fix_locator_forward.1} parent=1 // pred_region
      %s121 = ssub.s32 48, 48
      %122 = vsyncadd [#allocation5], %s121
      %s124 = sshll.u32 [#allocation6], 4
      %s125 = int_to_ptr.vmem [resolvable:$true] %s124
      %127 = dma.hbm_to_vmem [thread:$0]  %s21, 48, %s125, [#allocation5]
    $region45: #{fix_locator_forward.1} parent=1 // pred_fallthru
      _
    // Predicated region
    $region46: #{fix_locator_forward.1} parent=1 // pred_check
      _
    $region47: #{fix_locator_forward.1} parent=1 // pred_check_branch
      %129 = sbr.rel (0) target = $region49
    $region48: #{fix_locator_forward.1} parent=1 // pred_region
      %s131 = ssub.s32 48, 48
      %132 = vsyncadd [#allocation8], %s131
      %s134 = sshll.u32 [#allocation7], 4
      %s135 = int_to_ptr.vmem [resolvable:$true] %s134
      %137 = dma.hbm_to_vmem [thread:$0]  %s23, 48, %s135, [#allocation8]
    $region49: #{fix_locator_forward.1} parent=1 // pred_fallthru
      _
    // Predicated region
    $region50: #{fix_locator_forward.1} parent=1 // pred_check
      _
    $region51: #{fix_locator_forward.1} parent=1 // pred_check_branch
      %139 = sbr.rel (0) target = $region53
    $region52: #{fix_locator_forward.1} parent=1 // pred_region
      _
    $region53: #{fix_locator_forward.1} parent=1 // pred_fallthru
      _
    // Predicated region
    $region54: #{fix_locator_forward.1} parent=1 // pred_check
      _
    $region55: #{fix_locator_forward.1} parent=1 // pred_check_branch
      %141 = sbr.rel (0) target = $region57
    $region56: #{fix_locator_forward.1} parent=1 // pred_region
      %s143 = ssub.s32 6144, 6144
      %144 = vsyncadd [#allocation8], %s143
      %s145 = sshll.u32 [#allocation9], 4
      %s146 = int_to_ptr.vmem [resolvable:$true] %s145
      %151 = dma.hbm_to_vmem [thread:$0]  %s27, 6144, %s146, [#allocation8], 384, 384, 24
    $region57: #{fix_locator_forward.1} parent=1 // pred_fallthru
      _
    // Predicated region
    $region58: #{fix_locator_forward.1} parent=1 // pred_check
      _
    $region59: #{fix_locator_forward.1} parent=1 // pred_check_branch
      %153 = sbr.rel (0) target = $region61
    $region60: #{fix_locator_forward.1} parent=1 // pred_region
      %s155 = ssub.s32 48, 48
      %156 = vsyncadd [#allocation11], %s155
      %s158 = sshll.u32 [#allocation10], 4
      %s159 = int_to_ptr.vmem [resolvable:$true] %s158
      %161 = dma.hbm_to_vmem [thread:$0]  %s29, 48, %s159, [#allocation11]
    $region61: #{fix_locator_forward.1} parent=1 // pred_fallthru
      _
    // Predicated region
    $region62: #{fix_locator_forward.1} parent=1 // pred_check
      _
    $region63: #{fix_locator_forward.1} parent=1 // pred_check_branch
      %163 = sbr.rel (0) target = $region65
    $region64: #{fix_locator_forward.1} parent=1 // pred_region
      %s165 = ssub.s32 48, 48
      %166 = vsyncadd [#allocation11], %s165
      %s168 = sshll.u32 [#allocation12], 4
      %s169 = int_to_ptr.vmem [resolvable:$true] %s168
      %171 = dma.hbm_to_vmem [thread:$0]  %s31, 48, %s169, [#allocation11]
    $region65: #{fix_locator_forward.1} parent=1 // pred_fallthru
      _
    // Predicated region
    $region66: #{fix_locator_forward.1} parent=1 // pred_check
      _
    $region67: #{fix_locator_forward.1} parent=1 // pred_check_branch
      %173 = sbr.rel (0) target = $region69
    $region68: #{fix_locator_forward.1} parent=1 // pred_region
      _
    $region69: #{fix_locator_forward.1} parent=1 // pred_fallthru
      _
    // Predicated region
    $region70: #{fix_locator_forward.1} parent=1 // pred_check
      _
    $region71: #{fix_locator_forward.1} parent=1 // pred_check_branch
      %175 = sbr.rel (0) target = $region73
    $region72: #{fix_locator_forward.1} parent=1 // pred_region
      _
    $region73: #{fix_locator_forward.1} parent=1 // pred_fallthru
      _
    // Predicated region
    $region74: #{fix_locator_forward.1} parent=1 // pred_check
      _
    $region75: #{fix_locator_forward.1} parent=1 // pred_check_branch
      %177 = sbr.rel (0) target = $region77
    $region76: #{fix_locator_forward.1} parent=1 // pred_region
      %s179 = ssub.s32 256, 256
      %180 = vsyncadd [#allocation14], %s179
      %s181 = sshll.u32 [#allocation13], 4
      %s182 = int_to_ptr.vmem [resolvable:$true] %s181
      %187 = dma.hbm_to_vmem [thread:$0]  %s37, 256, %s182, [#allocation14], 128, 128, 8
    $region77: #{fix_locator_forward.1} parent=1 // pred_fallthru
      _
    // Predicated region
    $region78: #{fix_locator_forward.1} parent=1 // pred_check
      _
    $region79: #{fix_locator_forward.1} parent=1 // pred_check_branch
      %189 = sbr.rel (0) target = $region81
    $region80: #{fix_locator_forward.1} parent=1 // pred_region
      %s191 = ssub.s32 16, 16
      %192 = vsyncadd [#allocation14], %s191
      %s194 = sshll.u32 [#allocation15], 4
      %s195 = int_to_ptr.vmem [resolvable:$true] %s194
      %197 = dma.hbm_to_vmem [thread:$0]  %s39, 16, %s195, [#allocation14]
    $region81: #{fix_locator_forward.1} parent=1 // pred_fallthru
      _
    // Predicated region
    $region82: #{fix_locator_forward.1} parent=1 // pred_check
      _
    $region83: #{fix_locator_forward.1} parent=1 // pred_check_branch
      %199 = sbr.rel (0) target = $region85
    $region84: #{fix_locator_forward.1} parent=1 // pred_region
      _
    $region85: #{fix_locator_forward.1} parent=1 // pred_fallthru
      _
    // Predicated region
    $region86: #{fix_locator_forward.1} parent=1 // pred_check
      _
    $region87: #{fix_locator_forward.1} parent=1 // pred_check_branch
      %201 = sbr.rel (0) target = $region89
    $region88: #{fix_locator_forward.1} parent=1 // pred_region
      %s203 = ssub.s32 16, 16
      %204 = vsyncadd [#allocation17], %s203
      %s206 = sshll.u32 [#allocation16], 4
      %s207 = int_to_ptr.vmem [resolvable:$true] %s206
      %209 = dma.hbm_to_vmem [thread:$0]  %s43, 16, %s207, [#allocation17]
    $region89: #{fix_locator_forward.1} parent=1 // pred_fallthru
      _
    // Predicated region
    $region90: #{fix_locator_forward.1} parent=1 // pred_check
      _
    $region91: #{fix_locator_forward.1} parent=1 // pred_check_branch
      %211 = sbr.rel (0) target = $region93
    $region92: #{fix_locator_forward.1} parent=1 // pred_region
      _
    $region93: #{fix_locator_forward.1} parent=1 // pred_fallthru
      _
    // Predicated region
    $region94: #{fix_locator_forward.1} parent=1 // pred_check
      _
    $region95: #{fix_locator_forward.1} parent=1 // pred_check_branch
      %213 = sbr.rel (0) target = $region97
    $region96: #{fix_locator_forward.1} parent=1 // pred_region
      %s215 = ssub.s32 16, 16
      %216 = vsyncadd [#allocation17], %s215
      %s218 = sshll.u32 [#allocation18], 4
      %s219 = int_to_ptr.vmem [resolvable:$true] %s218
      %221 = dma.hbm_to_vmem [thread:$0]  %s47, 16, %s219, [#allocation17]
    $region97: #{fix_locator_forward.1} parent=1 // pred_fallthru
      _
    // Predicated region
    $region98: #{fix_locator_forward.1} parent=1 // pred_check
      _
    $region99: #{fix_locator_forward.1} parent=1 // pred_check_branch
      %223 = sbr.rel (0) target = $region101
    $region100: #{fix_locator_forward.1} parent=1 // pred_region
      _
    $region101: #{fix_locator_forward.1} parent=1 // pred_fallthru
      _
    // Predicated region
    $region102: #{fix_locator_forward.1} parent=1 // pred_check
      _
    $region103: #{fix_locator_forward.1} parent=1 // pred_check_branch
      %225 = sbr.rel (0) target = $region105
    $region104: #{fix_locator_forward.1} parent=1 // pred_region
      %s227 = ssub.s32 32, 32
      %228 = vsyncadd [#allocation20], %s227
      %s229 = sshll.u32 [#allocation19], 4
      %s230 = int_to_ptr.vmem [resolvable:$true] %s229
      %235 = dma.hbm_to_vmem [thread:$0]  %s51, 32, %s230, [#allocation20], 16, 16, 1
    $region105: #{fix_locator_forward.1} parent=1 // pred_fallthru
      _
    // Predicated region
    $region106: #{fix_locator_forward.1} parent=1 // pred_check
      _
    $region107: #{fix_locator_forward.1} parent=1 // pred_check_branch
      %237 = sbr.rel (0) target = $region109
    $region108: #{fix_locator_forward.1} parent=1 // pred_region
      %s239 = ssub.s32 768, 768
      %240 = vsyncadd [#allocation20], %s239
      %s241 = sshll.u32 [#allocation21], 4
      %s242 = int_to_ptr.vmem [resolvable:$true] %s241
      %247 = dma.hbm_to_vmem [thread:$0]  %s53, 768, %s242, [#allocation20], 128, 128, 8
    $region109: #{fix_locator_forward.1} parent=1 // pred_fallthru
      _
    // Predicated region
    $region110: #{fix_locator_forward.1} parent=1 // pred_check
      _
    $region111: #{fix_locator_forward.1} parent=1 // pred_check_branch
      %249 = sbr.rel (0) target = $region113
    $region112: #{fix_locator_forward.1} parent=1 // pred_region
      %s251 = ssub.s32 32, 32
      %252 = vsyncadd [#allocation23], %s251
      %s253 = sshll.u32 [#allocation22], 4
      %s254 = int_to_ptr.vmem [resolvable:$true] %s253
      %259 = dma.hbm_to_vmem [thread:$0]  %s55, 32, %s254, [#allocation23], 16, 16, 1
    $region113: #{fix_locator_forward.1} parent=1 // pred_fallthru
      _
    // Predicated region
    $region114: #{fix_locator_forward.1} parent=1 // pred_check
      _
    $region115: #{fix_locator_forward.1} parent=1 // pred_check_branch
      %261 = sbr.rel (0) target = $region117
    $region116: #{fix_locator_forward.1} parent=1 // pred_region
      _
    $region117: #{fix_locator_forward.1} parent=1 // pred_fallthru
      _
    // Predicated region
    $region118: #{fix_locator_forward.1} parent=1 // pred_check
      _
    $region119: #{fix_locator_forward.1} parent=1 // pred_check_branch
      %263 = sbr.rel (0) target = $region121
    $region120: #{fix_locator_forward.1} parent=1 // pred_region
      %s265 = ssub.s32 16, 16
      %266 = vsyncadd [#allocation23], %s265
      %s268 = sshll.u32 [#allocation24], 4
      %s269 = int_to_ptr.vmem [resolvable:$true] %s268
      %271 = dma.hbm_to_vmem [thread:$0]  %s59, 16, %s269, [#allocation23]
    $region121: #{fix_locator_forward.1} parent=1 // pred_fallthru
      _
    // Predicated region
    $region122: #{fix_locator_forward.1} parent=1 // pred_check
      _
    $region123: #{fix_locator_forward.1} parent=1 // pred_check_branch
      %273 = sbr.rel (0) target = $region125
    $region124: #{fix_locator_forward.1} parent=1 // pred_region
      _
    $region125: #{fix_locator_forward.1} parent=1 // pred_fallthru
      _
    // Predicated region
    $region126: #{fix_locator_forward.1} parent=1 // pred_check
      _
    $region127: #{fix_locator_forward.1} parent=1 // pred_check_branch
      %275 = sbr.rel (0) target = $region129
    $region128: #{fix_locator_forward.1} parent=1 // pred_region
      %s277 = ssub.s32 16, 16
      %278 = vsyncadd [#allocation26], %s277
      %s280 = sshll.u32 [#allocation25], 4
      %s281 = int_to_ptr.vmem [resolvable:$true] %s280
      %283 = dma.hbm_to_vmem [thread:$0]  %s63, 16, %s281, [#allocation26]
    $region129: #{fix_locator_forward.1} parent=1 // pred_fallthru
      _
    // Predicated region
    $region130: #{fix_locator_forward.1} parent=1 // pred_check
      _
    $region131: #{fix_locator_forward.1} parent=1 // pred_check_branch
      %285 = sbr.rel (0) target = $region133
    $region132: #{fix_locator_forward.1} parent=1 // pred_region
      %286 = dma.done [#allocation3], 128
    $region133: #{fix_locator_forward.1} parent=1 // pred_fallthru
      _
    // Predicated region
    $region134: #{fix_locator_forward.1} parent=1 // pred_check
      _
    $region135: #{fix_locator_forward.1} parent=1 // pred_check_branch
      %288 = sbr.rel (0) target = $region137
    $region136: #{fix_locator_forward.1} parent=1 // pred_region
      %289 = dma.done [#allocation5], 128
    $region137: #{fix_locator_forward.1} parent=1 // pred_fallthru
      _
    // Predicated region
    $region138: #{fix_locator_forward.1} parent=1 // pred_check
      _
    $region139: #{fix_locator_forward.1} parent=1 // pred_check_branch
      %291 = sbr.rel (0) target = $region141
    $region140: #{fix_locator_forward.1} parent=1 // pred_region
      %292 = dma.done [#allocation5], 48
    $region141: #{fix_locator_forward.1} parent=1 // pred_fallthru
      _
    // Predicated region
    $region142: #{fix_locator_forward.1} parent=1 // pred_check
      _
    $region143: #{fix_locator_forward.1} parent=1 // pred_check_branch
      %294 = sbr.rel (0) target = $region145
    $region144: #{fix_locator_forward.1} parent=1 // pred_region
      %295 = dma.done [#allocation8], 48
    $region145: #{fix_locator_forward.1} parent=1 // pred_fallthru
      _
    // Predicated region
    $region146: #{fix_locator_forward.1} parent=1 // pred_check
      _
    $region147: #{fix_locator_forward.1} parent=1 // pred_check_branch
      %297 = sbr.rel (0) target = $region149
    $region148: #{fix_locator_forward.1} parent=1 // pred_region
      %298 = dma.done [#allocation8], 6144
    $region149: #{fix_locator_forward.1} parent=1 // pred_fallthru
      _
    // Predicated region
    $region150: #{fix_locator_forward.1} parent=1 // pred_check
      _
    $region151: #{fix_locator_forward.1} parent=1 // pred_check_branch
      %300 = sbr.rel (0) target = $region153
    $region152: #{fix_locator_forward.1} parent=1 // pred_region
      %301 = dma.done [#allocation11], 48
    $region153: #{fix_locator_forward.1} parent=1 // pred_fallthru
      _
    // Predicated region
    $region154: #{fix_locator_forward.1} parent=1 // pred_check
      _
    $region155: #{fix_locator_forward.1} parent=1 // pred_check_branch
      %303 = sbr.rel (0) target = $region157
    $region156: #{fix_locator_forward.1} parent=1 // pred_region
      %304 = dma.done [#allocation11], 48
    $region157: #{fix_locator_forward.1} parent=1 // pred_fallthru
      _
    // Predicated region
    $region158: #{fix_locator_forward.1} parent=1 // pred_check
      _
    $region159: #{fix_locator_forward.1} parent=1 // pred_check_branch
      %306 = sbr.rel (0) target = $region161
    $region160: #{fix_locator_forward.1} parent=1 // pred_region
      %307 = dma.done [#allocation14], 256
    $region161: #{fix_locator_forward.1} parent=1 // pred_fallthru
      _
    // Predicated region
    $region162: #{fix_locator_forward.1} parent=1 // pred_check
      _
    $region163: #{fix_locator_forward.1} parent=1 // pred_check_branch
      %309 = sbr.rel (0) target = $region165
    $region164: #{fix_locator_forward.1} parent=1 // pred_region
      %310 = dma.done [#allocation14], 16
    $region165: #{fix_locator_forward.1} parent=1 // pred_fallthru
      _
    // Predicated region
    $region166: #{fix_locator_forward.1} parent=1 // pred_check
      _
    $region167: #{fix_locator_forward.1} parent=1 // pred_check_branch
      %312 = sbr.rel (0) target = $region169
    $region168: #{fix_locator_forward.1} parent=1 // pred_region
      %313 = dma.done [#allocation17], 16
    $region169: #{fix_locator_forward.1} parent=1 // pred_fallthru
      _
    // Predicated region
    $region170: #{fix_locator_forward.1} parent=1 // pred_check
      _
    $region171: #{fix_locator_forward.1} parent=1 // pred_check_branch
      %315 = sbr.rel (0) target = $region173
    $region172: #{fix_locator_forward.1} parent=1 // pred_region
      %316 = dma.done [#allocation17], 16
    $region173: #{fix_locator_forward.1} parent=1 // pred_fallthru
      _
    // Predicated region
    $region174: #{fix_locator_forward.1} parent=1 // pred_check
      _
    $region175: #{fix_locator_forward.1} parent=1 // pred_check_branch
      %318 = sbr.rel (0) target = $region177
    $region176: #{fix_locator_forward.1} parent=1 // pred_region
      %319 = dma.done [#allocation20], 32
    $region177: #{fix_locator_forward.1} parent=1 // pred_fallthru
      _
    // Predicated region
    $region178: #{fix_locator_forward.1} parent=1 // pred_check
      _
    $region179: #{fix_locator_forward.1} parent=1 // pred_check_branch
      %321 = sbr.rel (0) target = $region181
    $region180: #{fix_locator_forward.1} parent=1 // pred_region
      %322 = dma.done [#allocation20], 768
    $region181: #{fix_locator_forward.1} parent=1 // pred_fallthru
      _
    // Predicated region
    $region182: #{fix_locator_forward.1} parent=1 // pred_check
      _
    $region183: #{fix_locator_forward.1} parent=1 // pred_check_branch
      %324 = sbr.rel (0) target = $region185
    $region184: #{fix_locator_forward.1} parent=1 // pred_region
      %325 = dma.done [#allocation23], 32
    $region185: #{fix_locator_forward.1} parent=1 // pred_fallthru
      _
    // Predicated region
    $region186: #{fix_locator_forward.1} parent=1 // pred_check
      _
    $region187: #{fix_locator_forward.1} parent=1 // pred_check_branch
      %327 = sbr.rel (0) target = $region189
    $region188: #{fix_locator_forward.1} parent=1 // pred_region
      %328 = dma.done [#allocation23], 16
    $region189: #{fix_locator_forward.1} parent=1 // pred_fallthru
      _
    // Predicated region
    $region190: #{fix_locator_forward.1} parent=1 // pred_check
      _
    $region191: #{fix_locator_forward.1} parent=1 // pred_check_branch
      %330 = sbr.rel (0) target = $region193
    $region192: #{fix_locator_forward.1} parent=1 // pred_region
      %331 = dma.done [#allocation26], 16
    $region193: #{fix_locator_forward.1} parent=1 // pred_fallthru
      _
    %v332 = vld [vmem:[%s1] sm:$0xff]
    %v333 = vld [vmem:[%s1 + $0x8] sm:$0xff]
    %v334 = vld [vmem:[%s1 + $0x10] sm:$0xff]
    %v335 = vld [vmem:[%s1 + $0x18] sm:$0x3f]
    %v336 = vld [vmem:[%s17] sm:$0xff]
    %v337 = vld [vmem:[%s17 + $0x8] sm:$0xff]
    %v338 = vld [vmem:[%s17 + $0x10] sm:$0xff]
    %v339 = vld [vmem:[%s17 + $0x18] sm:$0xff]
    %v340 = vld [vmem:[%s17 + $0x20] sm:$0xff]
    %v341 = vld [vmem:[%s17 + $0x28] sm:$0xff]
    %v342 = vld [vmem:[%s19] sm:$0xff]
    %v343 = vld [vmem:[%s19 + $0x8] sm:$0xff]
    %v344 = vld [vmem:[%s19 + $0x10] sm:$0xff]
    %v345 = vld [vmem:[%s19 + $0x18] sm:$0xff]
    %v346 = vld [vmem:[%s19 + $0x20] sm:$0xff]
    %v347 = vld [vmem:[%s19 + $0x28] sm:$0xff]
    %v348 = vld [vmem:[%s19 + $0x30] sm:$0xff]
    %v349 = vld [vmem:[%s19 + $0x38] sm:$0xff]
    %v350 = vld [vmem:[%s19 + $0x40] sm:$0xff]
    %v351 = vld [vmem:[%s19 + $0x48] sm:$0xff]
    %v352 = vld [vmem:[%s19 + $0x50] sm:$0xff]
    %v353 = vld [vmem:[%s19 + $0x58] sm:$0xff]
    %v354 = vld [vmem:[%s19 + $0x60] sm:$0xff]
    %v355 = vld [vmem:[%s19 + $0x68] sm:$0xff]
    %v356 = vld [vmem:[%s19 + $0x70] sm:$0xff]
    %v357 = vld [vmem:[%s19 + $0x78] sm:$0xff]
    %v358 = vld [vmem:[%s19 + $0x80] sm:$0xff]
    %v359 = vld [vmem:[%s19 + $0x88] sm:$0xff]
    %v360 = vld [vmem:[%s19 + $0x90] sm:$0xff]
    %v361 = vld [vmem:[%s19 + $0x98] sm:$0xff]
    %v362 = vld [vmem:[%s19 + $0xa0] sm:$0xff]
    %v363 = vld [vmem:[%s19 + $0xa8] sm:$0xff]
    %v364 = vld [vmem:[%s19 + $0xb0] sm:$0xff]
    %v365 = vld [vmem:[%s19 + $0xb8] sm:$0xff]
    %v366 = vld [vmem:[%s19 + $0xc0] sm:$0xff]
    %v367 = vld [vmem:[%s19 + $0xc8] sm:$0xff]
    %v368 = vld [vmem:[%s19 + $0xd0] sm:$0xff]
    %v369 = vld [vmem:[%s19 + $0xd8] sm:$0xff]
    %v370 = vld [vmem:[%s19 + $0xe0] sm:$0xff]
    %v371 = vld [vmem:[%s19 + $0xe8] sm:$0xff]
    %v372 = vld [vmem:[%s19 + $0xf0] sm:$0xff]
    %v373 = vld [vmem:[%s19 + $0xf8] sm:$0xff]
    %v374 = vld [vmem:[%s19 + $0x100] sm:$0xff]
    %v375 = vld [vmem:[%s19 + $0x108] sm:$0xff]
    %v376 = vld [vmem:[%s19 + $0x110] sm:$0xff]
    %v377 = vld [vmem:[%s19 + $0x118] sm:$0xff]
    %v378 = vld [vmem:[%s19 + $0x120] sm:$0xff]
    %v379 = vld [vmem:[%s19 + $0x128] sm:$0xff]
    %v380 = vld [vmem:[%s19 + $0x130] sm:$0xff]
    %v381 = vld [vmem:[%s19 + $0x138] sm:$0xff]
    %v382 = vld [vmem:[%s19 + $0x140] sm:$0xff]
    %v383 = vld [vmem:[%s19 + $0x148] sm:$0xff]
    %v384 = vld [vmem:[%s19 + $0x150] sm:$0xff]
    %v385 = vld [vmem:[%s19 + $0x158] sm:$0xff]
    %v386 = vld [vmem:[%s19 + $0x160] sm:$0xff]
    %v387 = vld [vmem:[%s19 + $0x168] sm:$0xff]
    %v388 = vld [vmem:[%s19 + $0x170] sm:$0xff]
    %v389 = vld [vmem:[%s19 + $0x178] sm:$0xff]
    %v390 = vld [vmem:[#allocation6] sm:$0x7]
    %v391 = vld [vmem:[#allocation7] sm:$0x7]
    %v393 = vlaneseq
    %v394 = vshrl.u32 %v393, 7
    %v395 = vsub.s32 0, %v394
    %v396 = vrot.slane %v390, %v395
    %v397 = vlaneseq
    %v398 = vshrl.u32 %v397, 7
    %v399 = vsub.s32 1, %v398
    %v400 = vrot.slane %v390, %v399
    %v401 = vlaneseq
    %v402 = vshrl.u32 %v401, 7
    %v403 = vsub.s32 2, %v402
    %v404 = vrot.slane %v390, %v403
    %vm408 = vcmask 130048
    %v410 = vsel %vm408, %v332, 0
    %v413 = vsel %vm408, %v333, 0
    %v416 = vsel %vm408, %v334, 0
    %v419 = vsel %vm408, %v335, 0
    %421 = vmatprep.subr.mxu0 %v337
    %422 = vmatpush1.msra.mxu0 %v336
    %423 = vmatprep.subr.mxu0 %v340
    %424 = vmatpush1.msra.mxu0 %v339
    %425 = vmatprep.subr.mxu0 0.0
    %426 = vmatpush1.msra.mxu0 0.0
    %427 = vmatprep.subr.mxu0 0.0
    %428 = vmatpush1.msra.mxu0 0.0
    %429 = vmatprep.subr.mxu0 0.0
    %430 = vmatpush1.msra.mxu0 0.0
    %431 = vmatprep.subr.mxu0 0.0
    %432 = vmatpush1.msra.mxu0 0.0
    %433 = vmatprep.subr.mxu0 0.0
    %434 = vmatpush1.msra.mxu0 0.0
    %435 = vmatprep.subr.mxu0 0.0
    %436 = vmatpush1.msra.mxu0 0.0
    %437 = vmatprep.subr.mxu0 0.0
    %438 = vmatpush1.msra.mxu0 0.0
    %439 = vmatprep.subr.mxu0 0.0
    %440 = vmatpush1.msra.mxu0 0.0
    %441 = vmatprep.subr.mxu0 0.0
    %442 = vmatpush1.msra.mxu0 0.0
    %443 = vmatprep.subr.mxu0 0.0
    %444 = vmatpush1.msra.mxu0 0.0
    %445 = vmatprep.subr.mxu0 0.0
    %446 = vmatpush1.msra.mxu0 0.0
    %447 = vmatprep.subr.mxu0 0.0
    %448 = vmatpush1.msra.mxu0 0.0
    %449 = vmatprep.subr.mxu0 0.0
    %450 = vmatpush1.msra.mxu0 0.0
    %451 = vmatprep.subr.mxu0 0.0
    %452 = vmatpush1.msra.mxu0 0.0
    %453 = vmatprep.subr.mxu0 0.0
    %454 = vmatpush1.msra.mxu0 0.0
    %455 = vmatprep.subr.mxu0 0.0
    %456 = vmatpush1.msra.mxu0 0.0
    %457 = vmatprep.subr.mxu0 0.0
    %458 = vmatpush1.msra.mxu0 0.0
    %459 = vmatprep.subr.mxu0 0.0
    %460 = vmatpush1.msra.mxu0 0.0
    %461 = vmatprep.subr.mxu0 0.0
    %462 = vmatpush1.msra.mxu0 0.0
    %463 = vmatprep.subr.mxu0 0.0
    %464 = vmatpush1.msra.mxu0 0.0
    %465 = vmatprep.subr.mxu0 0.0
    %466 = vmatpush1.msra.mxu0 0.0
    %467 = vmatprep.subr.mxu0 0.0
    %468 = vmatpush1.msra.mxu0 0.0
    %469 = vmatprep.subr.mxu0 0.0
    %470 = vmatpush1.msra.mxu0 0.0
    %471 = vmatprep.subr.mxu0 0.0
    %472 = vmatpush1.msra.mxu0 0.0
    %473 = vmatprep.subr.mxu0 0.0
    %474 = vmatpush1.msra.mxu0 0.0
    %475 = vmatprep.subr.mxu0 0.0
    %476 = vmatpush1.msra.mxu0 0.0
    %477 = vmatprep.subr.mxu0 0.0
    %478 = vmatpush1.msra.mxu0 0.0
    %479 = vmatprep.subr.mxu0 0.0
    %480 = vmatpush1.msra.mxu0 0.0
    %481 = vmatprep.subr.mxu0 0.0
    %482 = vmatpush1.msra.mxu0 0.0
    %483 = vmatprep.subr.mxu0 0.0
    %484 = vmatpush1.msra.mxu0 0.0
    %485 = vmatprep.mubr.f32.mxu0 0.0
    %486 = vmatmul.mubr.f32.gmra.mrb[0].mxu0 %v410
    %v487 = vpop.f32.mrb[0].mxu0
    %v488 = vadd.f32 %v396, %v487
    %v489 = vpop.f32.mrb[0].mxu0
    %v490 = vadd.f32 %v400, %v489
    %491 = vmatprep.mubr.f32.mxu0 0.0
    %492 = vmatmul.mubr.f32.gmra.mrb[0].mxu0 %v413
    %v493 = vpop.f32.mrb[0].mxu0
    %v494 = vadd.f32 %v396, %v493
    %v495 = vpop.f32.mrb[0].mxu0
    %v496 = vadd.f32 %v400, %v495
    %497 = vmatprep.mubr.f32.mxu0 0.0
    %498 = vmatmul.mubr.f32.gmra.mrb[0].mxu0 %v416
    %v499 = vpop.f32.mrb[0].mxu0
    %v500 = vadd.f32 %v396, %v499
    %v501 = vpop.f32.mrb[0].mxu0
    %v502 = vadd.f32 %v400, %v501
    %503 = vmatprep.mubr.f32.mxu0 0.0
    %504 = vmatmul.mubr.f32.gmra.mrb[0].mxu0 %v419
    %v505 = vpop.f32.mrb[0].mxu0
    %v506 = vadd.f32 %v396, %v505
    %v507 = vpop.f32.mrb[0].mxu0
    %v508 = vadd.f32 %v400, %v507
    %509 = vdwg.mxu0
    %510 = vmatprep.subr.mxu0 0.0
    %511 = vmatpush1.msra.mxu0 %v338
    %512 = vmatprep.subr.mxu0 0.0
    %513 = vmatpush1.msra.mxu0 %v341
    %514 = vmatprep.subr.mxu0 0.0
    %515 = vmatpush1.msra.mxu0 0.0
    %516 = vmatprep.subr.mxu0 0.0
    %517 = vmatpush1.msra.mxu0 0.0
    %518 = vmatprep.subr.mxu0 0.0
    %519 = vmatpush1.msra.mxu0 0.0
    %520 = vmatprep.subr.mxu0 0.0
    %521 = vmatpush1.msra.mxu0 0.0
    %522 = vmatprep.subr.mxu0 0.0
    %523 = vmatpush1.msra.mxu0 0.0
    %524 = vmatprep.subr.mxu0 0.0
    %525 = vmatpush1.msra.mxu0 0.0
    %526 = vmatprep.subr.mxu0 0.0
    %527 = vmatpush1.msra.mxu0 0.0
    %528 = vmatprep.subr.mxu0 0.0
    %529 = vmatpush1.msra.mxu0 0.0
    %530 = vmatprep.subr.mxu0 0.0
    %531 = vmatpush1.msra.mxu0 0.0
    %532 = vmatprep.subr.mxu0 0.0
    %533 = vmatpush1.msra.mxu0 0.0
    %534 = vmatprep.subr.mxu0 0.0
    %535 = vmatpush1.msra.mxu0 0.0
    %536 = vmatprep.subr.mxu0 0.0
    %537 = vmatpush1.msra.mxu0 0.0
    %538 = vmatprep.subr.mxu0 0.0
    %539 = vmatpush1.msra.mxu0 0.0
    %540 = vmatprep.subr.mxu0 0.0
    %541 = vmatpush1.msra.mxu0 0.0
    %542 = vmatprep.subr.mxu0 0.0
    %543 = vmatpush1.msra.mxu0 0.0
    %544 = vmatprep.subr.mxu0 0.0
    %545 = vmatpush1.msra.mxu0 0.0
    %546 = vmatprep.subr.mxu0 0.0
    %547 = vmatpush1.msra.mxu0 0.0
    %548 = vmatprep.subr.mxu0 0.0
    %549 = vmatpush1.msra.mxu0 0.0
    %550 = vmatprep.subr.mxu0 0.0
    %551 = vmatpush1.msra.mxu0 0.0
    %552 = vmatprep.subr.mxu0 0.0
    %553 = vmatpush1.msra.mxu0 0.0
    %554 = vmatprep.subr.mxu0 0.0
    %555 = vmatpush1.msra.mxu0 0.0
    %556 = vmatprep.subr.mxu0 0.0
    %557 = vmatpush1.msra.mxu0 0.0
    %558 = vmatprep.subr.mxu0 0.0
    %559 = vmatpush1.msra.mxu0 0.0
    %560 = vmatprep.subr.mxu0 0.0
    %561 = vmatpush1.msra.mxu0 0.0
    %562 = vmatprep.subr.mxu0 0.0
    %563 = vmatpush1.msra.mxu0 0.0
    %564 = vmatprep.subr.mxu0 0.0
    %565 = vmatpush1.msra.mxu0 0.0
    %566 = vmatprep.subr.mxu0 0.0
    %567 = vmatpush1.msra.mxu0 0.0
    %568 = vmatprep.subr.mxu0 0.0
    %569 = vmatpush1.msra.mxu0 0.0
    %570 = vmatprep.subr.mxu0 0.0
    %571 = vmatpush1.msra.mxu0 0.0
    %572 = vmatprep.subr.mxu0 0.0
    %573 = vmatpush1.msra.mxu0 0.0
    %574 = vmatprep.mubr.f32.mxu0 0.0
    %575 = vmatmul.mubr.f32.gmra.mrb[0].mxu0 %v410
    %v576 = vpop.f32.mrb[0].mxu0
    %v577 = vadd.f32 %v404, %v576
    %v578 = vpop.f32.mrb[0].mxu0
    %579 = vmatprep.mubr.f32.mxu0 0.0
    %580 = vmatmul.mubr.f32.gmra.mrb[0].mxu0 %v413
    %v581 = vpop.f32.mrb[0].mxu0
    %v582 = vadd.f32 %v404, %v581
    %v583 = vpop.f32.mrb[0].mxu0
    %584 = vmatprep.mubr.f32.mxu0 0.0
    %585 = vmatmul.mubr.f32.gmra.mrb[0].mxu0 %v416
    %v586 = vpop.f32.mrb[0].mxu0
    %v587 = vadd.f32 %v404, %v586
    %v588 = vpop.f32.mrb[0].mxu0
    %589 = vmatprep.mubr.f32.mxu0 0.0
    %590 = vmatmul.mubr.f32.gmra.mrb[0].mxu0 %v419
    %v591 = vpop.f32.mrb[0].mxu0
    %v592 = vadd.f32 %v404, %v591
    %v593 = vpop.f32.mrb[0].mxu0
    %594 = vdwg.mxu0
    %v596 = vlaneseq
    %v597 = vshrl.u32 %v596, 7
    %v598 = vsub.s32 0, %v597
    %v599 = vrot.slane %v391, %v598
    %v600 = vlaneseq
    %v601 = vshrl.u32 %v600, 7
    %v602 = vsub.s32 1, %v601
    %v603 = vrot.slane %v391, %v602
    %v604 = vlaneseq
    %v605 = vshrl.u32 %v604, 7
    %v606 = vsub.s32 2, %v605
    %v607 = vrot.slane %v391, %v606
    %611 = vmatprep.subr.mxu0 %v343
    %612 = vmatpush1.msra.mxu0 %v342
    %613 = vmatprep.subr.mxu0 %v346
    %614 = vmatpush1.msra.mxu0 %v345
    %615 = vmatprep.subr.mxu0 %v349
    %616 = vmatpush1.msra.mxu0 %v348
    %617 = vmatprep.subr.mxu0 %v352
    %618 = vmatpush1.msra.mxu0 %v351
    %619 = vmatprep.subr.mxu0 %v355
    %620 = vmatpush1.msra.mxu0 %v354
    %621 = vmatprep.subr.mxu0 %v358
    %622 = vmatpush1.msra.mxu0 %v357
    %623 = vmatprep.subr.mxu0 %v361
    %624 = vmatpush1.msra.mxu0 %v360
    %625 = vmatprep.subr.mxu0 %v364
    %626 = vmatpush1.msra.mxu0 %v363
    %627 = vmatprep.subr.mxu0 %v367
    %628 = vmatpush1.msra.mxu0 %v366
    %629 = vmatprep.subr.mxu0 %v370
    %630 = vmatpush1.msra.mxu0 %v369
    %631 = vmatprep.subr.mxu0 %v373
    %632 = vmatpush1.msra.mxu0 %v372
    %633 = vmatprep.subr.mxu0 %v376
    %634 = vmatpush1.msra.mxu0 %v375
    %635 = vmatprep.subr.mxu0 %v379
    %636 = vmatpush1.msra.mxu0 %v378
    %637 = vmatprep.subr.mxu0 %v382
    %638 = vmatpush1.msra.mxu0 %v381
    %639 = vmatprep.subr.mxu0 %v385
    %640 = vmatpush1.msra.mxu0 %v384
    %641 = vmatprep.subr.mxu0 %v388
    %642 = vmatpush1.msra.mxu0 %v387
    %643 = vmatprep.subr.mxu0 0.0
    %644 = vmatpush1.msra.mxu0 0.0
    %645 = vmatprep.subr.mxu0 0.0
    %646 = vmatpush1.msra.mxu0 0.0
    %647 = vmatprep.subr.mxu0 0.0
    %648 = vmatpush1.msra.mxu0 0.0
    %649 = vmatprep.subr.mxu0 0.0
    %650 = vmatpush1.msra.mxu0 0.0
    %651 = vmatprep.subr.mxu0 0.0
    %652 = vmatpush1.msra.mxu0 0.0
    %653 = vmatprep.subr.mxu0 0.0
    %654 = vmatpush1.msra.mxu0 0.0
    %655 = vmatprep.subr.mxu0 0.0
    %656 = vmatpush1.msra.mxu0 0.0
    %657 = vmatprep.subr.mxu0 0.0
    %658 = vmatpush1.msra.mxu0 0.0
    %659 = vmatprep.subr.mxu0 0.0
    %660 = vmatpush1.msra.mxu0 0.0
    %661 = vmatprep.subr.mxu0 0.0
    %662 = vmatpush1.msra.mxu0 0.0
    %663 = vmatprep.subr.mxu0 0.0
    %664 = vmatpush1.msra.mxu0 0.0
    %665 = vmatprep.subr.mxu0 0.0
    %666 = vmatpush1.msra.mxu0 0.0
    %667 = vmatprep.subr.mxu0 0.0
    %668 = vmatpush1.msra.mxu0 0.0
    %669 = vmatprep.subr.mxu0 0.0
    %670 = vmatpush1.msra.mxu0 0.0
    %671 = vmatprep.subr.mxu0 0.0
    %672 = vmatpush1.msra.mxu0 0.0
    %673 = vmatprep.subr.mxu0 0.0
    %674 = vmatpush1.msra.mxu0 0.0
    %675 = vmatprep.mubr.f32.mxu0 0.0
    %676 = vmatmul.mubr.f32.gmra.mrb[0].mxu0 0.0
    %v677 = vpop.f32.mrb[0].mxu0
    %v678 = vadd.f32 %v599, %v677
    %v679 = vpop.f32.mrb[0].mxu0
    %v680 = vadd.f32 %v603, %v679
    %681 = vdwg.mxu0
    %682 = vmatprep.subr.mxu0 0.0
    %683 = vmatpush1.msra.mxu0 %v344
    %684 = vmatprep.subr.mxu0 0.0
    %685 = vmatpush1.msra.mxu0 %v347
    %686 = vmatprep.subr.mxu0 0.0
    %687 = vmatpush1.msra.mxu0 %v350
    %688 = vmatprep.subr.mxu0 0.0
    %689 = vmatpush1.msra.mxu0 %v353
    %690 = vmatprep.subr.mxu0 0.0
    %691 = vmatpush1.msra.mxu0 %v356
    %692 = vmatprep.subr.mxu0 0.0
    %693 = vmatpush1.msra.mxu0 %v359
    %694 = vmatprep.subr.mxu0 0.0
    %695 = vmatpush1.msra.mxu0 %v362
    %696 = vmatprep.subr.mxu0 0.0
    %697 = vmatpush1.msra.mxu0 %v365
    %698 = vmatprep.subr.mxu0 0.0
    %699 = vmatpush1.msra.mxu0 %v368
    %700 = vmatprep.subr.mxu0 0.0
    %701 = vmatpush1.msra.mxu0 %v371
    %702 = vmatprep.subr.mxu0 0.0
    %703 = vmatpush1.msra.mxu0 %v374
    %704 = vmatprep.subr.mxu0 0.0
    %705 = vmatpush1.msra.mxu0 %v377
    %706 = vmatprep.subr.mxu0 0.0
    %707 = vmatpush1.msra.mxu0 %v380
    %708 = vmatprep.subr.mxu0 0.0
    %709 = vmatpush1.msra.mxu0 %v383
    %710 = vmatprep.subr.mxu0 0.0
    %711 = vmatpush1.msra.mxu0 %v386
    %712 = vmatprep.subr.mxu0 0.0
    %713 = vmatpush1.msra.mxu0 %v389
    %714 = vmatprep.subr.mxu0 0.0
    %715 = vmatpush1.msra.mxu0 0.0
    %716 = vmatprep.subr.mxu0 0.0
    %717 = vmatpush1.msra.mxu0 0.0
    %718 = vmatprep.subr.mxu0 0.0
    %719 = vmatpush1.msra.mxu0 0.0
    %720 = vmatprep.subr.mxu0 0.0
    %721 = vmatpush1.msra.mxu0 0.0
    %722 = vmatprep.subr.mxu0 0.0
    %723 = vmatpush1.msra.mxu0 0.0
    %724 = vmatprep.subr.mxu0 0.0
    %725 = vmatpush1.msra.mxu0 0.0
    %726 = vmatprep.subr.mxu0 0.0
    %727 = vmatpush1.msra.mxu0 0.0
    %728 = vmatprep.subr.mxu0 0.0
    %729 = vmatpush1.msra.mxu0 0.0
    %730 = vmatprep.subr.mxu0 0.0
    %731 = vmatpush1.msra.mxu0 0.0
    %732 = vmatprep.subr.mxu0 0.0
    %733 = vmatpush1.msra.mxu0 0.0
    %734 = vmatprep.subr.mxu0 0.0
    %735 = vmatpush1.msra.mxu0 0.0
    %736 = vmatprep.subr.mxu0 0.0
    %737 = vmatpush1.msra.mxu0 0.0
    %738 = vmatprep.subr.mxu0 0.0
    %739 = vmatpush1.msra.mxu0 0.0
    %740 = vmatprep.subr.mxu0 0.0
    %741 = vmatpush1.msra.mxu0 0.0
    %742 = vmatprep.subr.mxu0 0.0
    %743 = vmatpush1.msra.mxu0 0.0
    %744 = vmatprep.subr.mxu0 0.0
    %745 = vmatpush1.msra.mxu0 0.0
    %746 = vmatprep.mubr.f32.mxu0 0.0
    %747 = vmatmul.mubr.f32.gmra.mrb[0].mxu0 0.0
    %v748 = vpop.f32.mrb[0].mxu0
    %v749 = vadd.f32 %v607, %v748
    %v750 = vpop.f32.mrb[0].mxu0
    %751 = vdwg.mxu0
    %v752 = vadd.f32 %v488, %v678
    %v753 = vxor.u32 %v752, 2147483648
    %v754 = vmul.f32 %v753, 1.442695
    %v755 = vpow.pop %v754
    %v756 = vadd.f32 %v755, 1.0
    %v757 = vrcp.pop %v756
    %v758 = vmul.f32 1.0, %v757
    %v759 = vadd.f32 %v490, %v680
    %v760 = vxor.u32 %v759, 2147483648
    %v761 = vmul.f32 %v760, 1.442695
    %v762 = vpow.pop %v761
    %v763 = vadd.f32 %v762, 1.0
    %v764 = vrcp.pop %v763
    %v765 = vmul.f32 1.0, %v764
    %v766 = vmul.f32 %v758, %v749
    %v767 = vadd.f32 %v577, %v766
    %v768 = vtanh.pop %v767
    %v769 = vsub.f32 1.0, %v765
    %v770 = vmul.f32 %v769, %v768
    %v771 = vmul.f32 %v765, 0.0
    %v772 = vadd.f32 %v770, %v771
    %773 = vmatprep.subr.mxu0 %v343
    %774 = vmatpush1.msra.mxu0 %v342
    %775 = vmatprep.subr.mxu0 %v346
    %776 = vmatpush1.msra.mxu0 %v345
    %777 = vmatprep.subr.mxu0 %v349
    %778 = vmatpush1.msra.mxu0 %v348
    %779 = vmatprep.subr.mxu0 %v352
    %780 = vmatpush1.msra.mxu0 %v351
    %781 = vmatprep.subr.mxu0 %v355
    %782 = vmatpush1.msra.mxu0 %v354
    %783 = vmatprep.subr.mxu0 %v358
    %784 = vmatpush1.msra.mxu0 %v357
    %785 = vmatprep.subr.mxu0 %v361
    %786 = vmatpush1.msra.mxu0 %v360
    %787 = vmatprep.subr.mxu0 %v364
    %788 = vmatpush1.msra.mxu0 %v363
    %789 = vmatprep.subr.mxu0 %v367
    %790 = vmatpush1.msra.mxu0 %v366
    %791 = vmatprep.subr.mxu0 %v370
    %792 = vmatpush1.msra.mxu0 %v369
    %793 = vmatprep.subr.mxu0 %v373
    %794 = vmatpush1.msra.mxu0 %v372
    %795 = vmatprep.subr.mxu0 %v376
    %796 = vmatpush1.msra.mxu0 %v375
    %797 = vmatprep.subr.mxu0 %v379
    %798 = vmatpush1.msra.mxu0 %v378
    %799 = vmatprep.subr.mxu0 %v382
    %800 = vmatpush1.msra.mxu0 %v381
    %801 = vmatprep.subr.mxu0 %v385
    %802 = vmatpush1.msra.mxu0 %v384
    %803 = vmatprep.subr.mxu0 %v388
    %804 = vmatpush1.msra.mxu0 %v387
    %805 = vmatprep.subr.mxu0 0.0
    %806 = vmatpush1.msra.mxu0 0.0
    %807 = vmatprep.subr.mxu0 0.0
    %808 = vmatpush1.msra.mxu0 0.0
    %809 = vmatprep.subr.mxu0 0.0
    %810 = vmatpush1.msra.mxu0 0.0
    %811 = vmatprep.subr.mxu0 0.0
    %812 = vmatpush1.msra.mxu0 0.0
    %813 = vmatprep.subr.mxu0 0.0
    %814 = vmatpush1.msra.mxu0 0.0
    %815 = vmatprep.subr.mxu0 0.0
    %816 = vmatpush1.msra.mxu0 0.0
    %817 = vmatprep.subr.mxu0 0.0
    %818 = vmatpush1.msra.mxu0 0.0
    %819 = vmatprep.subr.mxu0 0.0
    %820 = vmatpush1.msra.mxu0 0.0
    %821 = vmatprep.subr.mxu0 0.0
    %822 = vmatpush1.msra.mxu0 0.0
    %823 = vmatprep.subr.mxu0 0.0
    %824 = vmatpush1.msra.mxu0 0.0
    %825 = vmatprep.subr.mxu0 0.0
    %826 = vmatpush1.msra.mxu0 0.0
    %827 = vmatprep.subr.mxu0 0.0
    %828 = vmatpush1.msra.mxu0 0.0
    %829 = vmatprep.subr.mxu0 0.0
    %830 = vmatpush1.msra.mxu0 0.0
    %831 = vmatprep.subr.mxu0 0.0
    %832 = vmatpush1.msra.mxu0 0.0
    %833 = vmatprep.subr.mxu0 0.0
    %834 = vmatpush1.msra.mxu0 0.0
    %835 = vmatprep.subr.mxu0 0.0
    %836 = vmatpush1.msra.mxu0 0.0
    %837 = vmatprep.mubr.f32.mxu0 0.0
    %838 = vmatmul.mubr.f32.gmra.mrb[0].mxu0 %v772
    %v839 = vpop.f32.mrb[0].mxu0
    %v840 = vadd.f32 %v599, %v839
    %v841 = vpop.f32.mrb[0].mxu0
    %v842 = vadd.f32 %v603, %v841
    %843 = vdwg.mxu0
    %844 = vmatprep.subr.mxu0 0.0
    %845 = vmatpush1.msra.mxu0 %v344
    %846 = vmatprep.subr.mxu0 0.0
    %847 = vmatpush1.msra.mxu0 %v347
    %848 = vmatprep.subr.mxu0 0.0
    %849 = vmatpush1.msra.mxu0 %v350
    %850 = vmatprep.subr.mxu0 0.0
    %851 = vmatpush1.msra.mxu0 %v353
    %852 = vmatprep.subr.mxu0 0.0
    %853 = vmatpush1.msra.mxu0 %v356
    %854 = vmatprep.subr.mxu0 0.0
    %855 = vmatpush1.msra.mxu0 %v359
    %856 = vmatprep.subr.mxu0 0.0
    %857 = vmatpush1.msra.mxu0 %v362
    %858 = vmatprep.subr.mxu0 0.0
    %859 = vmatpush1.msra.mxu0 %v365
    %860 = vmatprep.subr.mxu0 0.0
    %861 = vmatpush1.msra.mxu0 %v368
    %862 = vmatprep.subr.mxu0 0.0
    %863 = vmatpush1.msra.mxu0 %v371
    %864 = vmatprep.subr.mxu0 0.0
    %865 = vmatpush1.msra.mxu0 %v374
    %866 = vmatprep.subr.mxu0 0.0
    %867 = vmatpush1.msra.mxu0 %v377
    %868 = vmatprep.subr.mxu0 0.0
    %869 = vmatpush1.msra.mxu0 %v380
    %870 = vmatprep.subr.mxu0 0.0
    %871 = vmatpush1.msra.mxu0 %v383
    %872 = vmatprep.subr.mxu0 0.0
    %873 = vmatpush1.msra.mxu0 %v386
    %874 = vmatprep.subr.mxu0 0.0
    %875 = vmatpush1.msra.mxu0 %v389
    %876 = vmatprep.subr.mxu0 0.0
    %877 = vmatpush1.msra.mxu0 0.0
    %878 = vmatprep.subr.mxu0 0.0
    %879 = vmatpush1.msra.mxu0 0.0
    %880 = vmatprep.subr.mxu0 0.0
    %881 = vmatpush1.msra.mxu0 0.0
    %882 = vmatprep.subr.mxu0 0.0
    %883 = vmatpush1.msra.mxu0 0.0
    %884 = vmatprep.subr.mxu0 0.0
    %885 = vmatpush1.msra.mxu0 0.0
    %886 = vmatprep.subr.mxu0 0.0
    %887 = vmatpush1.msra.mxu0 0.0
    %888 = vmatprep.subr.mxu0 0.0
    %889 = vmatpush1.msra.mxu0 0.0
    %890 = vmatprep.subr.mxu0 0.0
    %891 = vmatpush1.msra.mxu0 0.0
    %892 = vmatprep.subr.mxu0 0.0
    %893 = vmatpush1.msra.mxu0 0.0
    %894 = vmatprep.subr.mxu0 0.0
    %895 = vmatpush1.msra.mxu0 0.0
    %896 = vmatprep.subr.mxu0 0.0
    %897 = vmatpush1.msra.mxu0 0.0
    %898 = vmatprep.subr.mxu0 0.0
    %899 = vmatpush1.msra.mxu0 0.0
    %900 = vmatprep.subr.mxu0 0.0
    %901 = vmatpush1.msra.mxu0 0.0
    %902 = vmatprep.subr.mxu0 0.0
    %903 = vmatpush1.msra.mxu0 0.0
    %904 = vmatprep.subr.mxu0 0.0
    %905 = vmatpush1.msra.mxu0 0.0
    %906 = vmatprep.subr.mxu0 0.0
    %907 = vmatpush1.msra.mxu0 0.0
    %908 = vmatprep.mubr.f32.mxu0 0.0
    %909 = vmatmul.mubr.f32.gmra.mrb[0].mxu0 %v772
    %v910 = vpop.f32.mrb[0].mxu0
    %v911 = vadd.f32 %v607, %v910
    %v912 = vpop.f32.mrb[0].mxu0
    %913 = vdwg.mxu0
    %v915 = vrot.slane %v840, 2
    %v917 = vadd.f32 %v488, %v915
    %v918 = vadd.f32 %v494, %v915
    %v919 = vxor.u32 %v917, 2147483648
    %v920 = vxor.u32 %v918, 2147483648
    %v921 = vmul.f32 %v919, 1.442695
    %v922 = vpow.pop %v921
    %v923 = vmul.f32 %v920, 1.442695
    %v924 = vpow.pop %v923
    %v925 = vadd.f32 %v922, 1.0
    %v926 = vadd.f32 %v924, 1.0
    %v927 = vrcp.pop %v925
    %v928 = vmul.f32 1.0, %v927
    %v929 = vrcp.pop %v926
    %v930 = vmul.f32 1.0, %v929
    %v932 = vrot.slane %v842, 2
    %v934 = vadd.f32 %v490, %v932
    %v935 = vadd.f32 %v496, %v932
    %v936 = vxor.u32 %v934, 2147483648
    %v937 = vxor.u32 %v935, 2147483648
    %v938 = vmul.f32 %v936, 1.442695
    %v939 = vpow.pop %v938
    %v940 = vmul.f32 %v937, 1.442695
    %v941 = vpow.pop %v940
    %v942 = vadd.f32 %v939, 1.0
    %v943 = vadd.f32 %v941, 1.0
    %v944 = vrcp.pop %v942
    %v945 = vmul.f32 1.0, %v944
    %v946 = vrcp.pop %v943
    %v947 = vmul.f32 1.0, %v946
    %v949 = vrot.slane %v911, 2
    %v951 = vmul.f32 %v928, %v949
    %v952 = vmul.f32 %v930, %v949
    %v953 = vadd.f32 %v577, %v951
    %v954 = vadd.f32 %v582, %v952
    %v955 = vtanh.pop %v953
    %v956 = vtanh.pop %v954
    %v957 = vsub.f32 1.0, %v945
    %v958 = vsub.f32 1.0, %v947
    %v959 = vmul.f32 %v957, %v955
    %v960 = vmul.f32 %v958, %v956
    %v962 = vrot.slane %v772, 2
    %v964 = vmul.f32 %v945, %v962
    %v965 = vmul.f32 %v947, %v962
    %v966 = vadd.f32 %v959, %v964
    %v967 = vadd.f32 %v960, %v965
    %vm970 = vcmask 1041408
    %v971 = vrot.slane %v966, 6
    %v972 = vrot.slane %v967, 6
    %v973 = vsel %vm970, %v971, %v972
    %975 = vmatprep.subr.mxu0 %v343
    %976 = vmatpush1.msra.mxu0 %v342
    %977 = vmatprep.subr.mxu0 %v346
    %978 = vmatpush1.msra.mxu0 %v345
    %979 = vmatprep.subr.mxu0 %v349
    %980 = vmatpush1.msra.mxu0 %v348
    %981 = vmatprep.subr.mxu0 %v352
    %982 = vmatpush1.msra.mxu0 %v351
    %983 = vmatprep.subr.mxu0 %v355
    %984 = vmatpush1.msra.mxu0 %v354
    %985 = vmatprep.subr.mxu0 %v358
    %986 = vmatpush1.msra.mxu0 %v357
    %987 = vmatprep.subr.mxu0 %v361
    %988 = vmatpush1.msra.mxu0 %v360
    %989 = vmatprep.subr.mxu0 %v364
    %990 = vmatpush1.msra.mxu0 %v363
    %991 = vmatprep.subr.mxu0 %v367
    %992 = vmatpush1.msra.mxu0 %v366
    %993 = vmatprep.subr.mxu0 %v370
    %994 = vmatpush1.msra.mxu0 %v369
    %995 = vmatprep.subr.mxu0 %v373
    %996 = vmatpush1.msra.mxu0 %v372
    %997 = vmatprep.subr.mxu0 %v376
    %998 = vmatpush1.msra.mxu0 %v375
    %999 = vmatprep.subr.mxu0 %v379
    %1000 = vmatpush1.msra.mxu0 %v378
    %1001 = vmatprep.subr.mxu0 %v382
    %1002 = vmatpush1.msra.mxu0 %v381
    %1003 = vmatprep.subr.mxu0 %v385
    %1004 = vmatpush1.msra.mxu0 %v384
    %1005 = vmatprep.subr.mxu0 %v388
    %1006 = vmatpush1.msra.mxu0 %v387
    %1007 = vmatprep.subr.mxu0 0.0
    %1008 = vmatpush1.msra.mxu0 0.0
    %1009 = vmatprep.subr.mxu0 0.0
    %1010 = vmatpush1.msra.mxu0 0.0
    %1011 = vmatprep.subr.mxu0 0.0
    %1012 = vmatpush1.msra.mxu0 0.0
    %1013 = vmatprep.subr.mxu0 0.0
    %1014 = vmatpush1.msra.mxu0 0.0
    %1015 = vmatprep.subr.mxu0 0.0
    %1016 = vmatpush1.msra.mxu0 0.0
    %1017 = vmatprep.subr.mxu0 0.0
    %1018 = vmatpush1.msra.mxu0 0.0
    %1019 = vmatprep.subr.mxu0 0.0
    %1020 = vmatpush1.msra.mxu0 0.0
    %1021 = vmatprep.subr.mxu0 0.0
    %1022 = vmatpush1.msra.mxu0 0.0
    %1023 = vmatprep.subr.mxu0 0.0
    %1024 = vmatpush1.msra.mxu0 0.0
    %1025 = vmatprep.subr.mxu0 0.0
    %1026 = vmatpush1.msra.mxu0 0.0
    %1027 = vmatprep.subr.mxu0 0.0
    %1028 = vmatpush1.msra.mxu0 0.0
    %1029 = vmatprep.subr.mxu0 0.0
    %1030 = vmatpush1.msra.mxu0 0.0
    %1031 = vmatprep.subr.mxu0 0.0
    %1032 = vmatpush1.msra.mxu0 0.0
    %1033 = vmatprep.subr.mxu0 0.0
    %1034 = vmatpush1.msra.mxu0 0.0
    %1035 = vmatprep.subr.mxu0 0.0
    %1036 = vmatpush1.msra.mxu0 0.0
    %1037 = vmatprep.subr.mxu0 0.0
    %1038 = vmatpush1.msra.mxu0 0.0
    %1039 = vmatprep.mubr.f32.mxu0 0.0
    %1040 = vmatmul.mubr.f32.gmra.mrb[0].mxu0 %v973
    %v1041 = vpop.f32.mrb[0].mxu0
    %v1042 = vadd.f32 %v599, %v1041
    %v1043 = vpop.f32.mrb[0].mxu0
    %v1044 = vadd.f32 %v603, %v1043
    %1045 = vdwg.mxu0
    %1046 = vmatprep.subr.mxu0 0.0
    %1047 = vmatpush1.msra.mxu0 %v344
    %1048 = vmatprep.subr.mxu0 0.0
    %1049 = vmatpush1.msra.mxu0 %v347
    %1050 = vmatprep.subr.mxu0 0.0
    %1051 = vmatpush1.msra.mxu0 %v350
    %1052 = vmatprep.subr.mxu0 0.0
    %1053 = vmatpush1.msra.mxu0 %v353
    %1054 = vmatprep.subr.mxu0 0.0
    %1055 = vmatpush1.msra.mxu0 %v356
    %1056 = vmatprep.subr.mxu0 0.0
    %1057 = vmatpush1.msra.mxu0 %v359
    %1058 = vmatprep.subr.mxu0 0.0
    %1059 = vmatpush1.msra.mxu0 %v362
    %1060 = vmatprep.subr.mxu0 0.0
    %1061 = vmatpush1.msra.mxu0 %v365
    %1062 = vmatprep.subr.mxu0 0.0
    %1063 = vmatpush1.msra.mxu0 %v368
    %1064 = vmatprep.subr.mxu0 0.0
    %1065 = vmatpush1.msra.mxu0 %v371
    %1066 = vmatprep.subr.mxu0 0.0
    %1067 = vmatpush1.msra.mxu0 %v374
    %1068 = vmatprep.subr.mxu0 0.0
    %1069 = vmatpush1.msra.mxu0 %v377
    %1070 = vmatprep.subr.mxu0 0.0
    %1071 = vmatpush1.msra.mxu0 %v380
    %1072 = vmatprep.subr.mxu0 0.0
    %1073 = vmatpush1.msra.mxu0 %v383
    %1074 = vmatprep.subr.mxu0 0.0
    %1075 = vmatpush1.msra.mxu0 %v386
    %1076 = vmatprep.subr.mxu0 0.0
    %1077 = vmatpush1.msra.mxu0 %v389
    %1078 = vmatprep.subr.mxu0 0.0
    %1079 = vmatpush1.msra.mxu0 0.0
    %1080 = vmatprep.subr.mxu0 0.0
    %1081 = vmatpush1.msra.mxu0 0.0
    %1082 = vmatprep.subr.mxu0 0.0
    %1083 = vmatpush1.msra.mxu0 0.0
    %1084 = vmatprep.subr.mxu0 0.0
    %1085 = vmatpush1.msra.mxu0 0.0
    %1086 = vmatprep.subr.mxu0 0.0
    %1087 = vmatpush1.msra.mxu0 0.0
    %1088 = vmatprep.subr.mxu0 0.0
    %1089 = vmatpush1.msra.mxu0 0.0
    %1090 = vmatprep.subr.mxu0 0.0
    %1091 = vmatpush1.msra.mxu0 0.0
    %1092 = vmatprep.subr.mxu0 0.0
    %1093 = vmatpush1.msra.mxu0 0.0
    %1094 = vmatprep.subr.mxu0 0.0
    %1095 = vmatpush1.msra.mxu0 0.0
    %1096 = vmatprep.subr.mxu0 0.0
    %1097 = vmatpush1.msra.mxu0 0.0
    %1098 = vmatprep.subr.mxu0 0.0
    %1099 = vmatpush1.msra.mxu0 0.0
    %1100 = vmatprep.subr.mxu0 0.0
    %1101 = vmatpush1.msra.mxu0 0.0
    %1102 = vmatprep.subr.mxu0 0.0
    %1103 = vmatpush1.msra.mxu0 0.0
    %1104 = vmatprep.subr.mxu0 0.0
    %1105 = vmatpush1.msra.mxu0 0.0
    %1106 = vmatprep.subr.mxu0 0.0
    %1107 = vmatpush1.msra.mxu0 0.0
    %1108 = vmatprep.subr.mxu0 0.0
    %1109 = vmatpush1.msra.mxu0 0.0
    %1110 = vmatprep.mubr.f32.mxu0 0.0
    %1111 = vmatmul.mubr.f32.gmra.mrb[0].mxu0 %v973
    %v1112 = vpop.f32.mrb[0].mxu0
    %v1113 = vadd.f32 %v607, %v1112
    %v1114 = vpop.f32.mrb[0].mxu0
    %1115 = vdwg.mxu0
    %v1117 = vrot.slane %v1042, 4
    %v1119 = vadd.f32 %v494, %v1117
    %v1120 = vadd.f32 %v500, %v1117
    %v1121 = vxor.u32 %v1119, 2147483648
    %v1122 = vxor.u32 %v1120, 2147483648
    %v1123 = vmul.f32 %v1121, 1.442695
    %v1124 = vpow.pop %v1123
    %v1125 = vmul.f32 %v1122, 1.442695
    %v1126 = vpow.pop %v1125
    %v1127 = vadd.f32 %v1124, 1.0
    %v1128 = vadd.f32 %v1126, 1.0
    %v1129 = vrcp.pop %v1127
    %v1130 = vmul.f32 1.0, %v1129
    %v1131 = vrcp.pop %v1128
    %v1132 = vmul.f32 1.0, %v1131
    %v1134 = vrot.slane %v1044, 4
    %v1136 = vadd.f32 %v496, %v1134
    %v1137 = vadd.f32 %v502, %v1134
    %v1138 = vxor.u32 %v1136, 2147483648
    %v1139 = vxor.u32 %v1137, 2147483648
    %v1140 = vmul.f32 %v1138, 1.442695
    %v1141 = vpow.pop %v1140
    %v1142 = vmul.f32 %v1139, 1.442695
    %v1143 = vpow.pop %v1142
    %v1144 = vadd.f32 %v1141, 1.0
    %v1145 = vadd.f32 %v1143, 1.0
    %v1146 = vrcp.pop %v1144
    %v1147 = vmul.f32 1.0, %v1146
    %v1148 = vrcp.pop %v1145
    %v1149 = vmul.f32 1.0, %v1148
    %v1151 = vrot.slane %v1113, 4
    %v1153 = vmul.f32 %v1130, %v1151
    %v1154 = vmul.f32 %v1132, %v1151
    %v1155 = vadd.f32 %v582, %v1153
    %v1156 = vadd.f32 %v587, %v1154
    %v1157 = vtanh.pop %v1155
    %v1158 = vtanh.pop %v1156
    %v1159 = vsub.f32 1.0, %v1147
    %v1160 = vsub.f32 1.0, %v1149
    %v1161 = vmul.f32 %v1159, %v1157
    %v1162 = vmul.f32 %v1160, %v1158
    %vm1163 = vcmask 1045504
    %v1164 = vrot.slane %v966, 2
    %v1165 = vrot.slane %v967, 2
    %v1166 = vsel %vm1163, %v1164, %v1165
    %v1169 = vmul.f32 %v1147, %v1166
    %v1170 = vmul.f32 %v1149, %v1165
    %v1171 = vadd.f32 %v1161, %v1169
    %v1172 = vadd.f32 %v1162, %v1170
    %vm1175 = vcmask 1043456
    %v1176 = vrot.slane %v1171, 4
    %v1177 = vrot.slane %v1172, 4
    %v1178 = vsel %vm1175, %v1176, %v1177
    %1180 = vmatprep.subr.mxu0 %v343
    %1181 = vmatpush1.msra.mxu0 %v342
    %1182 = vmatprep.subr.mxu0 %v346
    %1183 = vmatpush1.msra.mxu0 %v345
    %1184 = vmatprep.subr.mxu0 %v349
    %1185 = vmatpush1.msra.mxu0 %v348
    %1186 = vmatprep.subr.mxu0 %v352
    %1187 = vmatpush1.msra.mxu0 %v351
    %1188 = vmatprep.subr.mxu0 %v355
    %1189 = vmatpush1.msra.mxu0 %v354
    %1190 = vmatprep.subr.mxu0 %v358
    %1191 = vmatpush1.msra.mxu0 %v357
    %1192 = vmatprep.subr.mxu0 %v361
    %1193 = vmatpush1.msra.mxu0 %v360
    %1194 = vmatprep.subr.mxu0 %v364
    %1195 = vmatpush1.msra.mxu0 %v363
    %1196 = vmatprep.subr.mxu0 %v367
    %1197 = vmatpush1.msra.mxu0 %v366
    %1198 = vmatprep.subr.mxu0 %v370
    %1199 = vmatpush1.msra.mxu0 %v369
    %1200 = vmatprep.subr.mxu0 %v373
    %1201 = vmatpush1.msra.mxu0 %v372
    %1202 = vmatprep.subr.mxu0 %v376
    %1203 = vmatpush1.msra.mxu0 %v375
    %1204 = vmatprep.subr.mxu0 %v379
    %1205 = vmatpush1.msra.mxu0 %v378
    %1206 = vmatprep.subr.mxu0 %v382
    %1207 = vmatpush1.msra.mxu0 %v381
    %1208 = vmatprep.subr.mxu0 %v385
    %1209 = vmatpush1.msra.mxu0 %v384
    %1210 = vmatprep.subr.mxu0 %v388
    %1211 = vmatpush1.msra.mxu0 %v387
    %1212 = vmatprep.subr.mxu0 0.0
    %1213 = vmatpush1.msra.mxu0 0.0
    %1214 = vmatprep.subr.mxu0 0.0
    %1215 = vmatpush1.msra.mxu0 0.0
    %1216 = vmatprep.subr.mxu0 0.0
    %1217 = vmatpush1.msra.mxu0 0.0
    %1218 = vmatprep.subr.mxu0 0.0
    %1219 = vmatpush1.msra.mxu0 0.0
    %1220 = vmatprep.subr.mxu0 0.0
    %1221 = vmatpush1.msra.mxu0 0.0
    %1222 = vmatprep.subr.mxu0 0.0
    %1223 = vmatpush1.msra.mxu0 0.0
    %1224 = vmatprep.subr.mxu0 0.0
    %1225 = vmatpush1.msra.mxu0 0.0
    %1226 = vmatprep.subr.mxu0 0.0
    %1227 = vmatpush1.msra.mxu0 0.0
    %1228 = vmatprep.subr.mxu0 0.0
    %1229 = vmatpush1.msra.mxu0 0.0
    %1230 = vmatprep.subr.mxu0 0.0
    %1231 = vmatpush1.msra.mxu0 0.0
    %1232 = vmatprep.subr.mxu0 0.0
    %1233 = vmatpush1.msra.mxu0 0.0
    %1234 = vmatprep.subr.mxu0 0.0
    %1235 = vmatpush1.msra.mxu0 0.0
    %1236 = vmatprep.subr.mxu0 0.0
    %1237 = vmatpush1.msra.mxu0 0.0
    %1238 = vmatprep.subr.mxu0 0.0
    %1239 = vmatpush1.msra.mxu0 0.0
    %1240 = vmatprep.subr.mxu0 0.0
    %1241 = vmatpush1.msra.mxu0 0.0
    %1242 = vmatprep.subr.mxu0 0.0
    %1243 = vmatpush1.msra.mxu0 0.0
    %1244 = vmatprep.mubr.f32.mxu0 0.0
    %1245 = vmatmul.mubr.f32.gmra.mrb[0].mxu0 %v1178
    %v1246 = vpop.f32.mrb[0].mxu0
    %v1247 = vadd.f32 %v599, %v1246
    %v1248 = vpop.f32.mrb[0].mxu0
    %v1249 = vadd.f32 %v603, %v1248
    %1250 = vdwg.mxu0
    %1251 = vmatprep.subr.mxu0 0.0
    %1252 = vmatpush1.msra.mxu0 %v344
    %1253 = vmatprep.subr.mxu0 0.0
    %1254 = vmatpush1.msra.mxu0 %v347
    %1255 = vmatprep.subr.mxu0 0.0
    %1256 = vmatpush1.msra.mxu0 %v350
    %1257 = vmatprep.subr.mxu0 0.0
    %1258 = vmatpush1.msra.mxu0 %v353
    %1259 = vmatprep.subr.mxu0 0.0
    %1260 = vmatpush1.msra.mxu0 %v356
    %1261 = vmatprep.subr.mxu0 0.0
    %1262 = vmatpush1.msra.mxu0 %v359
    %1263 = vmatprep.subr.mxu0 0.0
    %1264 = vmatpush1.msra.mxu0 %v362
    %1265 = vmatprep.subr.mxu0 0.0
    %1266 = vmatpush1.msra.mxu0 %v365
    %1267 = vmatprep.subr.mxu0 0.0
    %1268 = vmatpush1.msra.mxu0 %v368
    %1269 = vmatprep.subr.mxu0 0.0
    %1270 = vmatpush1.msra.mxu0 %v371
    %1271 = vmatprep.subr.mxu0 0.0
    %1272 = vmatpush1.msra.mxu0 %v374
    %1273 = vmatprep.subr.mxu0 0.0
    %1274 = vmatpush1.msra.mxu0 %v377
    %1275 = vmatprep.subr.mxu0 0.0
    %1276 = vmatpush1.msra.mxu0 %v380
    %1277 = vmatprep.subr.mxu0 0.0
    %1278 = vmatpush1.msra.mxu0 %v383
    %1279 = vmatprep.subr.mxu0 0.0
    %1280 = vmatpush1.msra.mxu0 %v386
    %1281 = vmatprep.subr.mxu0 0.0
    %1282 = vmatpush1.msra.mxu0 %v389
    %1283 = vmatprep.subr.mxu0 0.0
    %1284 = vmatpush1.msra.mxu0 0.0
    %1285 = vmatprep.subr.mxu0 0.0
    %1286 = vmatpush1.msra.mxu0 0.0
    %1287 = vmatprep.subr.mxu0 0.0
    %1288 = vmatpush1.msra.mxu0 0.0
    %1289 = vmatprep.subr.mxu0 0.0
    %1290 = vmatpush1.msra.mxu0 0.0
    %1291 = vmatprep.subr.mxu0 0.0
    %1292 = vmatpush1.msra.mxu0 0.0
    %1293 = vmatprep.subr.mxu0 0.0
    %1294 = vmatpush1.msra.mxu0 0.0
    %1295 = vmatprep.subr.mxu0 0.0
    %1296 = vmatpush1.msra.mxu0 0.0
    %1297 = vmatprep.subr.mxu0 0.0
    %1298 = vmatpush1.msra.mxu0 0.0
    %1299 = vmatprep.subr.mxu0 0.0
    %1300 = vmatpush1.msra.mxu0 0.0
    %1301 = vmatprep.subr.mxu0 0.0
    %1302 = vmatpush1.msra.mxu0 0.0
    %1303 = vmatprep.subr.mxu0 0.0
    %1304 = vmatpush1.msra.mxu0 0.0
    %1305 = vmatprep.subr.mxu0 0.0
    %1306 = vmatpush1.msra.mxu0 0.0
    %1307 = vmatprep.subr.mxu0 0.0
    %1308 = vmatpush1.msra.mxu0 0.0
    %1309 = vmatprep.subr.mxu0 0.0
    %1310 = vmatpush1.msra.mxu0 0.0
    %1311 = vmatprep.subr.mxu0 0.0
    %1312 = vmatpush1.msra.mxu0 0.0
    %1313 = vmatprep.subr.mxu0 0.0
    %1314 = vmatpush1.msra.mxu0 0.0
    %1315 = vmatprep.mubr.f32.mxu0 0.0
    %1316 = vmatmul.mubr.f32.gmra.mrb[0].mxu0 %v1178
    %v1317 = vpop.f32.mrb[0].mxu0
    %v1318 = vadd.f32 %v607, %v1317
    %v1319 = vpop.f32.mrb[0].mxu0
    %1320 = vdwg.mxu0
    %v1322 = vrot.slane %v1247, 6
    %v1324 = vadd.f32 %v500, %v1322
    %v1325 = vxor.u32 %v1324, 2147483648
    %v1326 = vmul.f32 %v1325, 1.442695
    %v1327 = vpow.pop %v1326
    %v1328 = vadd.f32 %v1327, 1.0
    %v1329 = vrcp.pop %v1328
    %v1330 = vmul.f32 1.0, %v1329
    %v1332 = vrot.slane %v1249, 6
    %v1334 = vadd.f32 %v502, %v1332
    %v1335 = vxor.u32 %v1334, 2147483648
    %v1336 = vmul.f32 %v1335, 1.442695
    %v1337 = vpow.pop %v1336
    %v1338 = vadd.f32 %v1337, 1.0
    %v1339 = vrcp.pop %v1338
    %v1340 = vmul.f32 1.0, %v1339
    %v1342 = vrot.slane %v1318, 6
    %v1344 = vmul.f32 %v1330, %v1342
    %v1345 = vadd.f32 %v587, %v1344
    %v1346 = vtanh.pop %v1345
    %v1347 = vsub.f32 1.0, %v1340
    %v1348 = vmul.f32 %v1347, %v1346
    %v1349 = vrot.slane %v1171, 2
    %v1350 = vrot.slane %v1172, 2
    %v1351 = vsel %vm1163, %v1349, %v1350
    %v1353 = vmul.f32 %v1340, %v1351
    %v1354 = vadd.f32 %v1348, %v1353
    %v1356 = vrot.slane %v1354, 2
    %1358 = vmatprep.subr.mxu0 %v343
    %1359 = vmatpush1.msra.mxu0 %v342
    %1360 = vmatprep.subr.mxu0 %v346
    %1361 = vmatpush1.msra.mxu0 %v345
    %1362 = vmatprep.subr.mxu0 %v349
    %1363 = vmatpush1.msra.mxu0 %v348
    %1364 = vmatprep.subr.mxu0 %v352
    %1365 = vmatpush1.msra.mxu0 %v351
    %1366 = vmatprep.subr.mxu0 %v355
    %1367 = vmatpush1.msra.mxu0 %v354
    %1368 = vmatprep.subr.mxu0 %v358
    %1369 = vmatpush1.msra.mxu0 %v357
    %1370 = vmatprep.subr.mxu0 %v361
    %1371 = vmatpush1.msra.mxu0 %v360
    %1372 = vmatprep.subr.mxu0 %v364
    %1373 = vmatpush1.msra.mxu0 %v363
    %1374 = vmatprep.subr.mxu0 %v367
    %1375 = vmatpush1.msra.mxu0 %v366
    %1376 = vmatprep.subr.mxu0 %v370
    %1377 = vmatpush1.msra.mxu0 %v369
    %1378 = vmatprep.subr.mxu0 %v373
    %1379 = vmatpush1.msra.mxu0 %v372
    %1380 = vmatprep.subr.mxu0 %v376
    %1381 = vmatpush1.msra.mxu0 %v375
    %1382 = vmatprep.subr.mxu0 %v379
    %1383 = vmatpush1.msra.mxu0 %v378
    %1384 = vmatprep.subr.mxu0 %v382
    %1385 = vmatpush1.msra.mxu0 %v381
    %1386 = vmatprep.subr.mxu0 %v385
    %1387 = vmatpush1.msra.mxu0 %v384
    %1388 = vmatprep.subr.mxu0 %v388
    %1389 = vmatpush1.msra.mxu0 %v387
    %1390 = vmatprep.subr.mxu0 0.0
    %1391 = vmatpush1.msra.mxu0 0.0
    %1392 = vmatprep.subr.mxu0 0.0
    %1393 = vmatpush1.msra.mxu0 0.0
    %1394 = vmatprep.subr.mxu0 0.0
    %1395 = vmatpush1.msra.mxu0 0.0
    %1396 = vmatprep.subr.mxu0 0.0
    %1397 = vmatpush1.msra.mxu0 0.0
    %1398 = vmatprep.subr.mxu0 0.0
    %1399 = vmatpush1.msra.mxu0 0.0
    %1400 = vmatprep.subr.mxu0 0.0
    %1401 = vmatpush1.msra.mxu0 0.0
    %1402 = vmatprep.subr.mxu0 0.0
    %1403 = vmatpush1.msra.mxu0 0.0
    %1404 = vmatprep.subr.mxu0 0.0
    %1405 = vmatpush1.msra.mxu0 0.0
    %1406 = vmatprep.subr.mxu0 0.0
    %1407 = vmatpush1.msra.mxu0 0.0
    %1408 = vmatprep.subr.mxu0 0.0
    %1409 = vmatpush1.msra.mxu0 0.0
    %1410 = vmatprep.subr.mxu0 0.0
    %1411 = vmatpush1.msra.mxu0 0.0
    %1412 = vmatprep.subr.mxu0 0.0
    %1413 = vmatpush1.msra.mxu0 0.0
    %1414 = vmatprep.subr.mxu0 0.0
    %1415 = vmatpush1.msra.mxu0 0.0
    %1416 = vmatprep.subr.mxu0 0.0
    %1417 = vmatpush1.msra.mxu0 0.0
    %1418 = vmatprep.subr.mxu0 0.0
    %1419 = vmatpush1.msra.mxu0 0.0
    %1420 = vmatprep.subr.mxu0 0.0
    %1421 = vmatpush1.msra.mxu0 0.0
    %1422 = vmatprep.mubr.f32.mxu0 0.0
    %1423 = vmatmul.mubr.f32.gmra.mrb[0].mxu0 %v1356
    %v1424 = vpop.f32.mrb[0].mxu0
    %v1425 = vadd.f32 %v599, %v1424
    %v1426 = vpop.f32.mrb[0].mxu0
    %v1427 = vadd.f32 %v603, %v1426
    %1428 = vdwg.mxu0
    %1429 = vmatprep.subr.mxu0 0.0
    %1430 = vmatpush1.msra.mxu0 %v344
    %1431 = vmatprep.subr.mxu0 0.0
    %1432 = vmatpush1.msra.mxu0 %v347
    %1433 = vmatprep.subr.mxu0 0.0
    %1434 = vmatpush1.msra.mxu0 %v350
    %1435 = vmatprep.subr.mxu0 0.0
    %1436 = vmatpush1.msra.mxu0 %v353
    %1437 = vmatprep.subr.mxu0 0.0
    %1438 = vmatpush1.msra.mxu0 %v356
    %1439 = vmatprep.subr.mxu0 0.0
    %1440 = vmatpush1.msra.mxu0 %v359
    %1441 = vmatprep.subr.mxu0 0.0
    %1442 = vmatpush1.msra.mxu0 %v362
    %1443 = vmatprep.subr.mxu0 0.0
    %1444 = vmatpush1.msra.mxu0 %v365
    %1445 = vmatprep.subr.mxu0 0.0
    %1446 = vmatpush1.msra.mxu0 %v368
    %1447 = vmatprep.subr.mxu0 0.0
    %1448 = vmatpush1.msra.mxu0 %v371
    %1449 = vmatprep.subr.mxu0 0.0
    %1450 = vmatpush1.msra.mxu0 %v374
    %1451 = vmatprep.subr.mxu0 0.0
    %1452 = vmatpush1.msra.mxu0 %v377
    %1453 = vmatprep.subr.mxu0 0.0
    %1454 = vmatpush1.msra.mxu0 %v380
    %1455 = vmatprep.subr.mxu0 0.0
    %1456 = vmatpush1.msra.mxu0 %v383
    %1457 = vmatprep.subr.mxu0 0.0
    %1458 = vmatpush1.msra.mxu0 %v386
    %1459 = vmatprep.subr.mxu0 0.0
    %1460 = vmatpush1.msra.mxu0 %v389
    %1461 = vmatprep.subr.mxu0 0.0
    %1462 = vmatpush1.msra.mxu0 0.0
    %1463 = vmatprep.subr.mxu0 0.0
    %1464 = vmatpush1.msra.mxu0 0.0
    %1465 = vmatprep.subr.mxu0 0.0
    %1466 = vmatpush1.msra.mxu0 0.0
    %1467 = vmatprep.subr.mxu0 0.0
    %1468 = vmatpush1.msra.mxu0 0.0
    %1469 = vmatprep.subr.mxu0 0.0
    %1470 = vmatpush1.msra.mxu0 0.0
    %1471 = vmatprep.subr.mxu0 0.0
    %1472 = vmatpush1.msra.mxu0 0.0
    %1473 = vmatprep.subr.mxu0 0.0
    %1474 = vmatpush1.msra.mxu0 0.0
    %1475 = vmatprep.subr.mxu0 0.0
    %1476 = vmatpush1.msra.mxu0 0.0
    %1477 = vmatprep.subr.mxu0 0.0
    %1478 = vmatpush1.msra.mxu0 0.0
    %1479 = vmatprep.subr.mxu0 0.0
    %1480 = vmatpush1.msra.mxu0 0.0
    %1481 = vmatprep.subr.mxu0 0.0
    %1482 = vmatpush1.msra.mxu0 0.0
    %1483 = vmatprep.subr.mxu0 0.0
    %1484 = vmatpush1.msra.mxu0 0.0
    %1485 = vmatprep.subr.mxu0 0.0
    %1486 = vmatpush1.msra.mxu0 0.0
    %1487 = vmatprep.subr.mxu0 0.0
    %1488 = vmatpush1.msra.mxu0 0.0
    %1489 = vmatprep.subr.mxu0 0.0
    %1490 = vmatpush1.msra.mxu0 0.0
    %1491 = vmatprep.subr.mxu0 0.0
    %1492 = vmatpush1.msra.mxu0 0.0
    %1493 = vmatprep.mubr.f32.mxu0 0.0
    %1494 = vmatmul.mubr.f32.gmra.mrb[0].mxu0 %v1356
    %v1495 = vpop.f32.mrb[0].mxu0
    %v1496 = vadd.f32 %v607, %v1495
    %v1497 = vpop.f32.mrb[0].mxu0
    %1498 = vdwg.mxu0
    %v1499 = vadd.f32 %v506, %v1425
    %v1500 = vxor.u32 %v1499, 2147483648
    %v1501 = vmul.f32 %v1500, 1.442695
    %v1502 = vpow.pop %v1501
    %v1503 = vadd.f32 %v1502, 1.0
    %v1504 = vrcp.pop %v1503
    %v1505 = vmul.f32 1.0, %v1504
    %v1506 = vadd.f32 %v508, %v1427
    %v1507 = vxor.u32 %v1506, 2147483648
    %v1508 = vmul.f32 %v1507, 1.442695
    %v1509 = vpow.pop %v1508
    %v1510 = vadd.f32 %v1509, 1.0
    %v1511 = vrcp.pop %v1510
    %v1512 = vmul.f32 1.0, %v1511
    %v1513 = vmul.f32 %v1505, %v1496
    %v1514 = vadd.f32 %v592, %v1513
    %v1515 = vtanh.pop %v1514
    %v1516 = vsub.f32 1.0, %v1512
    %v1517 = vmul.f32 %v1516, %v1515
    %v1518 = vmul.f32 %v1512, %v1356
    %v1519 = vadd.f32 %v1517, %v1518
    %v1520 = vld [vmem:[#allocation2] sm:$0x3f]
    %v1521 = vld [vmem:[#allocation4] sm:$0x3f]
    %1523 = vrot.lane.b32.xlu0 %v1521, 16
    %v1524 = vpop.permute.xlu0 %1523
    %v1526 = vsel %vm408, %v1520, %v1524
    %v1527 = vld [vmem:[%s33] sm:$0xff]
    %v1528 = vld [vmem:[%s33 + $0x8] sm:$0xff]
    %v1529 = vld [vmem:[%s33 + $0x10] sm:$0xff]
    %v1530 = vld [vmem:[%s33 + $0x18] sm:$0xff]
    %v1531 = vld [vmem:[%s33 + $0x20] sm:$0xff]
    %v1532 = vld [vmem:[%s33 + $0x28] sm:$0xff]
    %v1533 = vld [vmem:[%s33 + $0x30] sm:$0xff]
    %v1534 = vld [vmem:[%s33 + $0x38] sm:$0xff]
    %v1535 = vld [vmem:[%s35] sm:$0x3]
    %v1537 = vlaneseq
    %v1538 = vshrl.u32 %v1537, 7
    %v1539 = vsub.s32 0, %v1538
    %v1540 = vrot.slane %v1535, %v1539
    %v1541 = vlaneseq
    %v1542 = vshrl.u32 %v1541, 7
    %v1543 = vsub.s32 1, %v1542
    %v1544 = vrot.slane %v1535, %v1543
    %vm1547 = vcmask 261120
    %v1549 = vsel %vm1547, %v1526, 0
    %1551 = vmatprep.subr.mxu0 %v1528
    %1552 = vmatpush1.msra.mxu0 %v1527
    %1553 = vmatprep.subr.mxu0 %v1530
    %1554 = vmatpush1.msra.mxu0 %v1529
    %1555 = vmatprep.subr.mxu0 %v1532
    %1556 = vmatpush1.msra.mxu0 %v1531
    %1557 = vmatprep.subr.mxu0 %v1534
    %1558 = vmatpush1.msra.mxu0 %v1533
    %1559 = vmatprep.subr.mxu0 0.0
    %1560 = vmatpush1.msra.mxu0 0.0
    %1561 = vmatprep.subr.mxu0 0.0
    %1562 = vmatpush1.msra.mxu0 0.0
    %1563 = vmatprep.subr.mxu0 0.0
    %1564 = vmatpush1.msra.mxu0 0.0
    %1565 = vmatprep.subr.mxu0 0.0
    %1566 = vmatpush1.msra.mxu0 0.0
    %1567 = vmatprep.subr.mxu0 0.0
    %1568 = vmatpush1.msra.mxu0 0.0
    %1569 = vmatprep.subr.mxu0 0.0
    %1570 = vmatpush1.msra.mxu0 0.0
    %1571 = vmatprep.subr.mxu0 0.0
    %1572 = vmatpush1.msra.mxu0 0.0
    %1573 = vmatprep.subr.mxu0 0.0
    %1574 = vmatpush1.msra.mxu0 0.0
    %1575 = vmatprep.subr.mxu0 0.0
    %1576 = vmatpush1.msra.mxu0 0.0
    %1577 = vmatprep.subr.mxu0 0.0
    %1578 = vmatpush1.msra.mxu0 0.0
    %1579 = vmatprep.subr.mxu0 0.0
    %1580 = vmatpush1.msra.mxu0 0.0
    %1581 = vmatprep.subr.mxu0 0.0
    %1582 = vmatpush1.msra.mxu0 0.0
    %1583 = vmatprep.subr.mxu0 0.0
    %1584 = vmatpush1.msra.mxu0 0.0
    %1585 = vmatprep.subr.mxu0 0.0
    %1586 = vmatpush1.msra.mxu0 0.0
    %1587 = vmatprep.subr.mxu0 0.0
    %1588 = vmatpush1.msra.mxu0 0.0
    %1589 = vmatprep.subr.mxu0 0.0
    %1590 = vmatpush1.msra.mxu0 0.0
    %1591 = vmatprep.subr.mxu0 0.0
    %1592 = vmatpush1.msra.mxu0 0.0
    %1593 = vmatprep.subr.mxu0 0.0
    %1594 = vmatpush1.msra.mxu0 0.0
    %1595 = vmatprep.subr.mxu0 0.0
    %1596 = vmatpush1.msra.mxu0 0.0
    %1597 = vmatprep.subr.mxu0 0.0
    %1598 = vmatpush1.msra.mxu0 0.0
    %1599 = vmatprep.subr.mxu0 0.0
    %1600 = vmatpush1.msra.mxu0 0.0
    %1601 = vmatprep.subr.mxu0 0.0
    %1602 = vmatpush1.msra.mxu0 0.0
    %1603 = vmatprep.subr.mxu0 0.0
    %1604 = vmatpush1.msra.mxu0 0.0
    %1605 = vmatprep.subr.mxu0 0.0
    %1606 = vmatpush1.msra.mxu0 0.0
    %1607 = vmatprep.subr.mxu0 0.0
    %1608 = vmatpush1.msra.mxu0 0.0
    %1609 = vmatprep.subr.mxu0 0.0
    %1610 = vmatpush1.msra.mxu0 0.0
    %1611 = vmatprep.subr.mxu0 0.0
    %1612 = vmatpush1.msra.mxu0 0.0
    %1613 = vmatprep.subr.mxu0 0.0
    %1614 = vmatpush1.msra.mxu0 0.0
    %1615 = vmatprep.mubr.f32.mxu0 0.0
    %1616 = vmatmul.mubr.f32.gmra.mrb[0].mxu0 %v1549
    %v1617 = vpop.f32.mrb[0].mxu0
    %v1618 = vadd.f32 %v1540, %v1617
    %v1619 = vpop.f32.mrb[0].mxu0
    %v1620 = vadd.f32 %v1544, %v1619
    %1621 = vdwg.mxu0
    %v1622 = vxor.u32 %v1618, 2147483648
    %v1623 = vmul.f32 %v1622, 1.442695
    %v1624 = vpow.pop %v1623
    %v1625 = vadd.f32 %v1624, 1.0
    %v1626 = vrcp.pop %v1625
    %v1627 = vmul.f32 1.0, %v1626
    %v1628 = vtanh.pop %v1618
    %1630 = vrot.lane.b32.xlu0 %v1628, 80
    %v1631 = vpop.permute.xlu0 %1630
    %v1633 = vmul.f32 %v1627, %v1631
    %v1634 = vtanh.pop %v1633
    %1636 = vrot.lane.b32.xlu0 %v1634, 24
    %v1637 = vpop.permute.xlu0 %1636
    %v1639 = vmul.f32 %v1627, %v1637
    %v1640 = vtanh.pop %v1620
    %1642 = vrot.lane.b32.xlu0 %v1640, 80
    %v1643 = vpop.permute.xlu0 %1642
    %vm1644 = vcmask 654336
    %v1645 = vsel %vm1644, %v1631, %v1643
    %v1647 = vmul.f32 %v1627, %v1645
    %v1648 = vtanh.pop %v1647
    %1650 = vrot.lane.b32.xlu0 %v1648, 24
    %v1651 = vpop.permute.xlu0 %1650
    %v1653 = vmul.f32 %v1627, %v1651
    %1655 = vrot.lane.b32.xlu0 %v1639, 104
    %v1656 = vpop.permute.xlu0 %1655
    %1659 = vrot.lane.b32.xlu0 %v1653, 56
    %v1660 = vpop.permute.xlu0 %1659
    %vm1662 = vcmask 195584
    %v1663 = vsel %vm1662, %v1656, %v1660
    %v1664 = vld [vmem:[%s41] sm:$0xff]
    %v1665 = vld [vmem:[%s41 + $0x8] sm:$0xff]
    %v1666 = vld [vmem:[%s41 + $0x10] sm:$0xff]
    %v1667 = vld [vmem:[%s41 + $0x18] sm:$0xff]
    %v1668 = vld [vmem:[%s41 + $0x20] sm:$0xff]
    %v1669 = vld [vmem:[%s41 + $0x28] sm:$0xff]
    %v1670 = vld [vmem:[%s41 + $0x30] sm:$0xff]
    %v1671 = vld [vmem:[%s41 + $0x38] sm:$0xff]
    %v1672 = vld [vmem:[%s41 + $0x40] sm:$0xff]
    %v1673 = vld [vmem:[%s41 + $0x48] sm:$0xff]
    %v1674 = vld [vmem:[%s41 + $0x50] sm:$0xff]
    %v1675 = vld [vmem:[%s41 + $0x58] sm:$0xff]
    %v1676 = vld [vmem:[%s41 + $0x60] sm:$0xff]
    %v1677 = vld [vmem:[%s41 + $0x68] sm:$0xff]
    %v1678 = vld [vmem:[%s41 + $0x70] sm:$0xff]
    %v1679 = vld [vmem:[%s41 + $0x78] sm:$0xff]
    %v1680 = vld [vmem:[%s41 + $0x80] sm:$0xff]
    %v1681 = vld [vmem:[%s41 + $0x88] sm:$0xff]
    %v1682 = vld [vmem:[%s41 + $0x90] sm:$0xff]
    %v1683 = vld [vmem:[%s41 + $0x98] sm:$0xff]
    %v1684 = vld [vmem:[%s41 + $0xa0] sm:$0xff]
    %v1685 = vld [vmem:[%s41 + $0xa8] sm:$0xff]
    %v1686 = vld [vmem:[#allocation16] sm:$0x1]
    %v1688 = vlaneseq
    %v1689 = vshrl.u32 %v1688, 7
    %v1690 = vsub.s32 0, %v1689
    %v1691 = vrot.slane %v1686, %v1690
    %vm1693 = vcmask 392192
    %v1695 = vsel %vm1693, %v1663, 0
    %1697 = vmatprep.subr.mxu0 0.0
    %1698 = vmatpush1.msra.mxu0 %v1664
    %1699 = vmatprep.subr.mxu0 0.0
    %1700 = vmatpush1.msra.mxu0 %v1665
    %1701 = vmatprep.subr.mxu0 0.0
    %1702 = vmatpush1.msra.mxu0 %v1666
    %1703 = vmatprep.subr.mxu0 0.0
    %1704 = vmatpush1.msra.mxu0 %v1667
    %1705 = vmatprep.subr.mxu0 0.0
    %1706 = vmatpush1.msra.mxu0 %v1668
    %1707 = vmatprep.subr.mxu0 0.0
    %1708 = vmatpush1.msra.mxu0 %v1669
    %1709 = vmatprep.subr.mxu0 0.0
    %1710 = vmatpush1.msra.mxu0 %v1670
    %1711 = vmatprep.subr.mxu0 0.0
    %1712 = vmatpush1.msra.mxu0 %v1671
    %1713 = vmatprep.subr.mxu0 0.0
    %1714 = vmatpush1.msra.mxu0 %v1672
    %1715 = vmatprep.subr.mxu0 0.0
    %1716 = vmatpush1.msra.mxu0 %v1673
    %1717 = vmatprep.subr.mxu0 0.0
    %1718 = vmatpush1.msra.mxu0 %v1674
    %1719 = vmatprep.subr.mxu0 0.0
    %1720 = vmatpush1.msra.mxu0 %v1675
    %1721 = vmatprep.subr.mxu0 0.0
    %1722 = vmatpush1.msra.mxu0 %v1676
    %1723 = vmatprep.subr.mxu0 0.0
    %1724 = vmatpush1.msra.mxu0 %v1677
    %1725 = vmatprep.subr.mxu0 0.0
    %1726 = vmatpush1.msra.mxu0 %v1678
    %1727 = vmatprep.subr.mxu0 0.0
    %1728 = vmatpush1.msra.mxu0 %v1679
    %1729 = vmatprep.subr.mxu0 0.0
    %1730 = vmatpush1.msra.mxu0 %v1680
    %1731 = vmatprep.subr.mxu0 0.0
    %1732 = vmatpush1.msra.mxu0 %v1681
    %1733 = vmatprep.subr.mxu0 0.0
    %1734 = vmatpush1.msra.mxu0 %v1682
    %1735 = vmatprep.subr.mxu0 0.0
    %1736 = vmatpush1.msra.mxu0 %v1683
    %1737 = vmatprep.subr.mxu0 0.0
    %1738 = vmatpush1.msra.mxu0 %v1684
    %1739 = vmatprep.subr.mxu0 0.0
    %1740 = vmatpush1.msra.mxu0 %v1685
    %1741 = vmatprep.subr.mxu0 0.0
    %1742 = vmatpush1.msra.mxu0 0.0
    %1743 = vmatprep.subr.mxu0 0.0
    %1744 = vmatpush1.msra.mxu0 0.0
    %1745 = vmatprep.subr.mxu0 0.0
    %1746 = vmatpush1.msra.mxu0 0.0
    %1747 = vmatprep.subr.mxu0 0.0
    %1748 = vmatpush1.msra.mxu0 0.0
    %1749 = vmatprep.subr.mxu0 0.0
    %1750 = vmatpush1.msra.mxu0 0.0
    %1751 = vmatprep.subr.mxu0 0.0
    %1752 = vmatpush1.msra.mxu0 0.0
    %1753 = vmatprep.subr.mxu0 0.0
    %1754 = vmatpush1.msra.mxu0 0.0
    %1755 = vmatprep.subr.mxu0 0.0
    %1756 = vmatpush1.msra.mxu0 0.0
    %1757 = vmatprep.subr.mxu0 0.0
    %1758 = vmatpush1.msra.mxu0 0.0
    %1759 = vmatprep.subr.mxu0 0.0
    %1760 = vmatpush1.msra.mxu0 0.0
    %1761 = vmatprep.mubr.f32.mxu0 %v1695
    %1762 = vmatmul.mubr.f32.gmra.mrb[0].mxu0 %v1519
    %v1763 = vpop.f32.mrb[0].mxu0
    %v1764 = vadd.f32 %v1691, %v1763
    %v1765 = vpop.f32.mrb[0].mxu0
    %1766 = vdwg.mxu0
    %v1767 = vld [vmem:[%s7] sm:$0x3f]
    %v1768 = vld [vmem:[%s57] sm:$0xff]
    %v1769 = vld [vmem:[%s57 + $0x8] sm:$0xff]
    %v1770 = vld [vmem:[%s57 + $0x10] sm:$0xff]
    %v1771 = vld [vmem:[#allocation24] sm:$0x1]
    %v1772 = vld [vmem:[%s49] sm:$0xff]
    %v1773 = vld [vmem:[%s49 + $0x8] sm:$0xff]
    %v1774 = vld [vmem:[%s49 + $0x10] sm:$0xff]
    %v1776 = vsel %vm1662, %v1764, 0
    %1778 = vmatprep.subr.mxu0 0.0
    %1779 = vmatpush1.msra.mxu0 %v1772
    %1780 = vmatprep.subr.mxu0 0.0
    %1781 = vmatpush1.msra.mxu0 %v1773
    %1782 = vmatprep.subr.mxu0 0.0
    %1783 = vmatpush1.msra.mxu0 %v1774
    %1784 = vmatprep.subr.mxu0 0.0
    %1785 = vmatpush1.msra.mxu0 0.0
    %1786 = vmatprep.subr.mxu0 0.0
    %1787 = vmatpush1.msra.mxu0 0.0
    %1788 = vmatprep.subr.mxu0 0.0
    %1789 = vmatpush1.msra.mxu0 0.0
    %1790 = vmatprep.subr.mxu0 0.0
    %1791 = vmatpush1.msra.mxu0 0.0
    %1792 = vmatprep.subr.mxu0 0.0
    %1793 = vmatpush1.msra.mxu0 0.0
    %1794 = vmatprep.subr.mxu0 0.0
    %1795 = vmatpush1.msra.mxu0 0.0
    %1796 = vmatprep.subr.mxu0 0.0
    %1797 = vmatpush1.msra.mxu0 0.0
    %1798 = vmatprep.subr.mxu0 0.0
    %1799 = vmatpush1.msra.mxu0 0.0
    %1800 = vmatprep.subr.mxu0 0.0
    %1801 = vmatpush1.msra.mxu0 0.0
    %1802 = vmatprep.subr.mxu0 0.0
    %1803 = vmatpush1.msra.mxu0 0.0
    %1804 = vmatprep.subr.mxu0 0.0
    %1805 = vmatpush1.msra.mxu0 0.0
    %1806 = vmatprep.subr.mxu0 0.0
    %1807 = vmatpush1.msra.mxu0 0.0
    %1808 = vmatprep.subr.mxu0 0.0
    %1809 = vmatpush1.msra.mxu0 0.0
    %1810 = vmatprep.subr.mxu0 0.0
    %1811 = vmatpush1.msra.mxu0 0.0
    %1812 = vmatprep.subr.mxu0 0.0
    %1813 = vmatpush1.msra.mxu0 0.0
    %1814 = vmatprep.subr.mxu0 0.0
    %1815 = vmatpush1.msra.mxu0 0.0
    %1816 = vmatprep.subr.mxu0 0.0
    %1817 = vmatpush1.msra.mxu0 0.0
    %1818 = vmatprep.subr.mxu0 0.0
    %1819 = vmatpush1.msra.mxu0 0.0
    %1820 = vmatprep.subr.mxu0 0.0
    %1821 = vmatpush1.msra.mxu0 0.0
    %1822 = vmatprep.subr.mxu0 0.0
    %1823 = vmatpush1.msra.mxu0 0.0
    %1824 = vmatprep.subr.mxu0 0.0
    %1825 = vmatpush1.msra.mxu0 0.0
    %1826 = vmatprep.subr.mxu0 0.0
    %1827 = vmatpush1.msra.mxu0 0.0
    %1828 = vmatprep.subr.mxu0 0.0
    %1829 = vmatpush1.msra.mxu0 0.0
    %1830 = vmatprep.subr.mxu0 0.0
    %1831 = vmatpush1.msra.mxu0 0.0
    %1832 = vmatprep.subr.mxu0 0.0
    %1833 = vmatpush1.msra.mxu0 0.0
    %1834 = vmatprep.subr.mxu0 0.0
    %1835 = vmatpush1.msra.mxu0 0.0
    %1836 = vmatprep.subr.mxu0 0.0
    %1837 = vmatpush1.msra.mxu0 0.0
    %1838 = vmatprep.subr.mxu0 0.0
    %1839 = vmatpush1.msra.mxu0 0.0
    %1840 = vmatprep.subr.mxu0 0.0
    %1841 = vmatpush1.msra.mxu0 0.0
    %1842 = vmatprep.mubr.f32.mxu0 0.0
    %1843 = vmatmul.mubr.f32.gmra.mrb[0].mxu0 %v1776
    %v1844 = vpop.f32.mrb[0].mxu0
    %v1845 = vadd.f32 0.0, %v1844
    %v1846 = vpop.f32.mrb[0].mxu0
    %1847 = vdwg.mxu0
    %v1848 = vld [vmem:[#allocation19] sm:$0x1]
    %v1850 = vlaneseq
    %v1851 = vshrl.u32 %v1850, 7
    %v1852 = vsub.s32 0, %v1851
    %v1853 = vrot.slane %v1848, %v1852
    %vm1855 = vcmask 48128
    %v1857 = vsel %vm1855, %v1767, 0
    %v1860 = vsel %vm1163, %v1845, 0
    %1862 = vmatprep.subr.mxu0 0.0
    %1863 = vmatpush1.msra.mxu0 %v1860
    %1864 = vmatprep.subr.mxu0 0.0
    %1865 = vmatpush1.msra.mxu0 0.0
    %1866 = vmatprep.subr.mxu0 0.0
    %1867 = vmatpush1.msra.mxu0 0.0
    %1868 = vmatprep.subr.mxu0 0.0
    %1869 = vmatpush1.msra.mxu0 0.0
    %1870 = vmatprep.subr.mxu0 0.0
    %1871 = vmatpush1.msra.mxu0 0.0
    %1872 = vmatprep.subr.mxu0 0.0
    %1873 = vmatpush1.msra.mxu0 0.0
    %1874 = vmatprep.subr.mxu0 0.0
    %1875 = vmatpush1.msra.mxu0 0.0
    %1876 = vmatprep.subr.mxu0 0.0
    %1877 = vmatpush1.msra.mxu0 0.0
    %1878 = vmatprep.subr.mxu0 0.0
    %1879 = vmatpush1.msra.mxu0 0.0
    %1880 = vmatprep.subr.mxu0 0.0
    %1881 = vmatpush1.msra.mxu0 0.0
    %1882 = vmatprep.subr.mxu0 0.0
    %1883 = vmatpush1.msra.mxu0 0.0
    %1884 = vmatprep.subr.mxu0 0.0
    %1885 = vmatpush1.msra.mxu0 0.0
    %1886 = vmatprep.subr.mxu0 0.0
    %1887 = vmatpush1.msra.mxu0 0.0
    %1888 = vmatprep.subr.mxu0 0.0
    %1889 = vmatpush1.msra.mxu0 0.0
    %1890 = vmatprep.subr.mxu0 0.0
    %1891 = vmatpush1.msra.mxu0 0.0
    %1892 = vmatprep.subr.mxu0 0.0
    %1893 = vmatpush1.msra.mxu0 0.0
    %1894 = vmatprep.subr.mxu0 0.0
    %1895 = vmatpush1.msra.mxu0 0.0
    %1896 = vmatprep.subr.mxu0 0.0
    %1897 = vmatpush1.msra.mxu0 0.0
    %1898 = vmatprep.subr.mxu0 0.0
    %1899 = vmatpush1.msra.mxu0 0.0
    %1900 = vmatprep.subr.mxu0 0.0
    %1901 = vmatpush1.msra.mxu0 0.0
    %1902 = vmatprep.subr.mxu0 0.0
    %1903 = vmatpush1.msra.mxu0 0.0
    %1904 = vmatprep.subr.mxu0 0.0
    %1905 = vmatpush1.msra.mxu0 0.0
    %1906 = vmatprep.subr.mxu0 0.0
    %1907 = vmatpush1.msra.mxu0 0.0
    %1908 = vmatprep.subr.mxu0 0.0
    %1909 = vmatpush1.msra.mxu0 0.0
    %1910 = vmatprep.subr.mxu0 0.0
    %1911 = vmatpush1.msra.mxu0 0.0
    %1912 = vmatprep.subr.mxu0 0.0
    %1913 = vmatpush1.msra.mxu0 0.0
    %1914 = vmatprep.subr.mxu0 0.0
    %1915 = vmatpush1.msra.mxu0 0.0
    %1916 = vmatprep.subr.mxu0 0.0
    %1917 = vmatpush1.msra.mxu0 0.0
    %1918 = vmatprep.subr.mxu0 0.0
    %1919 = vmatpush1.msra.mxu0 0.0
    %1920 = vmatprep.subr.mxu0 0.0
    %1921 = vmatpush1.msra.mxu0 0.0
    %1922 = vmatprep.subr.mxu0 0.0
    %1923 = vmatpush1.msra.mxu0 0.0
    %1924 = vmatprep.subr.mxu0 0.0
    %1925 = vmatpush1.msra.mxu0 0.0
    %1926 = vmatprep.mubr.f32.mxu0 0.0
    %1927 = vmatmul.mubr.f32.gmra.mrb[0].mxu0 %v1857
    %v1928 = vpop.f32.mrb[0].mxu0
    %v1929 = vadd.f32 %v1853, %v1928
    %v1930 = vpop.f32.mrb[0].mxu0
    %1931 = vdwg.mxu0
    %v1932 = vmax.f32 %v1929, 0.0
    %s1933 = scalar_lea.vmem %s49, 24
    %v1934 = vld [vmem:[%s1933] sm:$0xff]
    %v1935 = vld [vmem:[%s1933 + $0x8] sm:$0xff]
    %v1936 = vld [vmem:[%s1933 + $0x10] sm:$0xff]
    %v1938 = vsel %vm1662, %v1932, 0
    %1940 = vmatprep.subr.mxu0 0.0
    %1941 = vmatpush1.msra.mxu0 %v1934
    %1942 = vmatprep.subr.mxu0 0.0
    %1943 = vmatpush1.msra.mxu0 %v1935
    %1944 = vmatprep.subr.mxu0 0.0
    %1945 = vmatpush1.msra.mxu0 %v1936
    %1946 = vmatprep.subr.mxu0 0.0
    %1947 = vmatpush1.msra.mxu0 0.0
    %1948 = vmatprep.subr.mxu0 0.0
    %1949 = vmatpush1.msra.mxu0 0.0
    %1950 = vmatprep.subr.mxu0 0.0
    %1951 = vmatpush1.msra.mxu0 0.0
    %1952 = vmatprep.subr.mxu0 0.0
    %1953 = vmatpush1.msra.mxu0 0.0
    %1954 = vmatprep.subr.mxu0 0.0
    %1955 = vmatpush1.msra.mxu0 0.0
    %1956 = vmatprep.subr.mxu0 0.0
    %1957 = vmatpush1.msra.mxu0 0.0
    %1958 = vmatprep.subr.mxu0 0.0
    %1959 = vmatpush1.msra.mxu0 0.0
    %1960 = vmatprep.subr.mxu0 0.0
    %1961 = vmatpush1.msra.mxu0 0.0
    %1962 = vmatprep.subr.mxu0 0.0
    %1963 = vmatpush1.msra.mxu0 0.0
    %1964 = vmatprep.subr.mxu0 0.0
    %1965 = vmatpush1.msra.mxu0 0.0
    %1966 = vmatprep.subr.mxu0 0.0
    %1967 = vmatpush1.msra.mxu0 0.0
    %1968 = vmatprep.subr.mxu0 0.0
    %1969 = vmatpush1.msra.mxu0 0.0
    %1970 = vmatprep.subr.mxu0 0.0
    %1971 = vmatpush1.msra.mxu0 0.0
    %1972 = vmatprep.subr.mxu0 0.0
    %1973 = vmatpush1.msra.mxu0 0.0
    %1974 = vmatprep.subr.mxu0 0.0
    %1975 = vmatpush1.msra.mxu0 0.0
    %1976 = vmatprep.subr.mxu0 0.0
    %1977 = vmatpush1.msra.mxu0 0.0
    %1978 = vmatprep.subr.mxu0 0.0
    %1979 = vmatpush1.msra.mxu0 0.0
    %1980 = vmatprep.subr.mxu0 0.0
    %1981 = vmatpush1.msra.mxu0 0.0
    %1982 = vmatprep.subr.mxu0 0.0
    %1983 = vmatpush1.msra.mxu0 0.0
    %1984 = vmatprep.subr.mxu0 0.0
    %1985 = vmatpush1.msra.mxu0 0.0
    %1986 = vmatprep.subr.mxu0 0.0
    %1987 = vmatpush1.msra.mxu0 0.0
    %1988 = vmatprep.subr.mxu0 0.0
    %1989 = vmatpush1.msra.mxu0 0.0
    %1990 = vmatprep.subr.mxu0 0.0
    %1991 = vmatpush1.msra.mxu0 0.0
    %1992 = vmatprep.subr.mxu0 0.0
    %1993 = vmatpush1.msra.mxu0 0.0
    %1994 = vmatprep.subr.mxu0 0.0
    %1995 = vmatpush1.msra.mxu0 0.0
    %1996 = vmatprep.subr.mxu0 0.0
    %1997 = vmatpush1.msra.mxu0 0.0
    %1998 = vmatprep.subr.mxu0 0.0
    %1999 = vmatpush1.msra.mxu0 0.0
    %2000 = vmatprep.subr.mxu0 0.0
    %2001 = vmatpush1.msra.mxu0 0.0
    %2002 = vmatprep.subr.mxu0 0.0
    %2003 = vmatpush1.msra.mxu0 0.0
    %2004 = vmatprep.mubr.f32.mxu0 0.0
    %2005 = vmatmul.mubr.f32.gmra.mrb[0].mxu0 %v1938
    %v2006 = vpop.f32.mrb[0].mxu0
    %v2007 = vadd.f32 0.0, %v2006
    %v2008 = vpop.f32.mrb[0].mxu0
    %2009 = vdwg.mxu0
    %s2010 = scalar_lea.vmem [#allocation19], 1
    %v2011 = vld [vmem:[%s2010] sm:$0x1]
    %v2013 = vlaneseq
    %v2014 = vshrl.u32 %v2013, 7
    %v2015 = vsub.s32 0, %v2014
    %v2016 = vrot.slane %v2011, %v2015
    %v2019 = vsel %vm1163, %v2007, 0
    %2021 = vmatprep.subr.mxu0 0.0
    %2022 = vmatpush1.msra.mxu0 %v2019
    %2023 = vmatprep.subr.mxu0 0.0
    %2024 = vmatpush1.msra.mxu0 0.0
    %2025 = vmatprep.subr.mxu0 0.0
    %2026 = vmatpush1.msra.mxu0 0.0
    %2027 = vmatprep.subr.mxu0 0.0
    %2028 = vmatpush1.msra.mxu0 0.0
    %2029 = vmatprep.subr.mxu0 0.0
    %2030 = vmatpush1.msra.mxu0 0.0
    %2031 = vmatprep.subr.mxu0 0.0
    %2032 = vmatpush1.msra.mxu0 0.0
    %2033 = vmatprep.subr.mxu0 0.0
    %2034 = vmatpush1.msra.mxu0 0.0
    %2035 = vmatprep.subr.mxu0 0.0
    %2036 = vmatpush1.msra.mxu0 0.0
    %2037 = vmatprep.subr.mxu0 0.0
    %2038 = vmatpush1.msra.mxu0 0.0
    %2039 = vmatprep.subr.mxu0 0.0
    %2040 = vmatpush1.msra.mxu0 0.0
    %2041 = vmatprep.subr.mxu0 0.0
    %2042 = vmatpush1.msra.mxu0 0.0
    %2043 = vmatprep.subr.mxu0 0.0
    %2044 = vmatpush1.msra.mxu0 0.0
    %2045 = vmatprep.subr.mxu0 0.0
    %2046 = vmatpush1.msra.mxu0 0.0
    %2047 = vmatprep.subr.mxu0 0.0
    %2048 = vmatpush1.msra.mxu0 0.0
    %2049 = vmatprep.subr.mxu0 0.0
    %2050 = vmatpush1.msra.mxu0 0.0
    %2051 = vmatprep.subr.mxu0 0.0
    %2052 = vmatpush1.msra.mxu0 0.0
    %2053 = vmatprep.subr.mxu0 0.0
    %2054 = vmatpush1.msra.mxu0 0.0
    %2055 = vmatprep.subr.mxu0 0.0
    %2056 = vmatpush1.msra.mxu0 0.0
    %2057 = vmatprep.subr.mxu0 0.0
    %2058 = vmatpush1.msra.mxu0 0.0
    %2059 = vmatprep.subr.mxu0 0.0
    %2060 = vmatpush1.msra.mxu0 0.0
    %2061 = vmatprep.subr.mxu0 0.0
    %2062 = vmatpush1.msra.mxu0 0.0
    %2063 = vmatprep.subr.mxu0 0.0
    %2064 = vmatpush1.msra.mxu0 0.0
    %2065 = vmatprep.subr.mxu0 0.0
    %2066 = vmatpush1.msra.mxu0 0.0
    %2067 = vmatprep.subr.mxu0 0.0
    %2068 = vmatpush1.msra.mxu0 0.0
    %2069 = vmatprep.subr.mxu0 0.0
    %2070 = vmatpush1.msra.mxu0 0.0
    %2071 = vmatprep.subr.mxu0 0.0
    %2072 = vmatpush1.msra.mxu0 0.0
    %2073 = vmatprep.subr.mxu0 0.0
    %2074 = vmatpush1.msra.mxu0 0.0
    %2075 = vmatprep.subr.mxu0 0.0
    %2076 = vmatpush1.msra.mxu0 0.0
    %2077 = vmatprep.subr.mxu0 0.0
    %2078 = vmatpush1.msra.mxu0 0.0
    %2079 = vmatprep.subr.mxu0 0.0
    %2080 = vmatpush1.msra.mxu0 0.0
    %2081 = vmatprep.subr.mxu0 0.0
    %2082 = vmatpush1.msra.mxu0 0.0
    %2083 = vmatprep.subr.mxu0 0.0
    %2084 = vmatpush1.msra.mxu0 0.0
    %2085 = vmatprep.mubr.f32.mxu0 0.0
    %2086 = vmatmul.mubr.f32.gmra.mrb[0].mxu0 %v1857
    %v2087 = vpop.f32.mrb[0].mxu0
    %v2088 = vadd.f32 %v2016, %v2087
    %v2089 = vpop.f32.mrb[0].mxu0
    %2090 = vdwg.mxu0
    %v2092 = vlaneseq
    %v2093 = vshrl.u32 %v2092, 7
    %v2094 = vsub.s32 0, %v2093
    %v2095 = vrot.slane %v1771, %v2094
    %v2098 = vsel %vm1662, %v2088, 0
    %2100 = vmatprep.subr.mxu0 0.0
    %2101 = vmatpush1.msra.mxu0 %v1768
    %2102 = vmatprep.subr.mxu0 0.0
    %2103 = vmatpush1.msra.mxu0 %v1769
    %2104 = vmatprep.subr.mxu0 0.0
    %2105 = vmatpush1.msra.mxu0 %v1770
    %2106 = vmatprep.subr.mxu0 0.0
    %2107 = vmatpush1.msra.mxu0 0.0
    %2108 = vmatprep.subr.mxu0 0.0
    %2109 = vmatpush1.msra.mxu0 0.0
    %2110 = vmatprep.subr.mxu0 0.0
    %2111 = vmatpush1.msra.mxu0 0.0
    %2112 = vmatprep.subr.mxu0 0.0
    %2113 = vmatpush1.msra.mxu0 0.0
    %2114 = vmatprep.subr.mxu0 0.0
    %2115 = vmatpush1.msra.mxu0 0.0
    %2116 = vmatprep.subr.mxu0 0.0
    %2117 = vmatpush1.msra.mxu0 0.0
    %2118 = vmatprep.subr.mxu0 0.0
    %2119 = vmatpush1.msra.mxu0 0.0
    %2120 = vmatprep.subr.mxu0 0.0
    %2121 = vmatpush1.msra.mxu0 0.0
    %2122 = vmatprep.subr.mxu0 0.0
    %2123 = vmatpush1.msra.mxu0 0.0
    %2124 = vmatprep.subr.mxu0 0.0
    %2125 = vmatpush1.msra.mxu0 0.0
    %2126 = vmatprep.subr.mxu0 0.0
    %2127 = vmatpush1.msra.mxu0 0.0
    %2128 = vmatprep.subr.mxu0 0.0
    %2129 = vmatpush1.msra.mxu0 0.0
    %2130 = vmatprep.subr.mxu0 0.0
    %2131 = vmatpush1.msra.mxu0 0.0
    %2132 = vmatprep.subr.mxu0 0.0
    %2133 = vmatpush1.msra.mxu0 0.0
    %2134 = vmatprep.subr.mxu0 0.0
    %2135 = vmatpush1.msra.mxu0 0.0
    %2136 = vmatprep.subr.mxu0 0.0
    %2137 = vmatpush1.msra.mxu0 0.0
    %2138 = vmatprep.subr.mxu0 0.0
    %2139 = vmatpush1.msra.mxu0 0.0
    %2140 = vmatprep.subr.mxu0 0.0
    %2141 = vmatpush1.msra.mxu0 0.0
    %2142 = vmatprep.subr.mxu0 0.0
    %2143 = vmatpush1.msra.mxu0 0.0
    %2144 = vmatprep.subr.mxu0 0.0
    %2145 = vmatpush1.msra.mxu0 0.0
    %2146 = vmatprep.subr.mxu0 0.0
    %2147 = vmatpush1.msra.mxu0 0.0
    %2148 = vmatprep.subr.mxu0 0.0
    %2149 = vmatpush1.msra.mxu0 0.0
    %2150 = vmatprep.subr.mxu0 0.0
    %2151 = vmatpush1.msra.mxu0 0.0
    %2152 = vmatprep.subr.mxu0 0.0
    %2153 = vmatpush1.msra.mxu0 0.0
    %2154 = vmatprep.subr.mxu0 0.0
    %2155 = vmatpush1.msra.mxu0 0.0
    %2156 = vmatprep.subr.mxu0 0.0
    %2157 = vmatpush1.msra.mxu0 0.0
    %2158 = vmatprep.subr.mxu0 0.0
    %2159 = vmatpush1.msra.mxu0 0.0
    %2160 = vmatprep.subr.mxu0 0.0
    %2161 = vmatpush1.msra.mxu0 0.0
    %2162 = vmatprep.subr.mxu0 0.0
    %2163 = vmatpush1.msra.mxu0 0.0
    %2164 = vmatprep.mubr.f32.mxu0 0.0
    %2165 = vmatmul.mubr.f32.gmra.mrb[0].mxu0 %v2098
    %v2166 = vpop.f32.mrb[0].mxu0
    %v2167 = vadd.f32 %v2095, %v2166
    %v2168 = vpop.f32.mrb[0].mxu0
    %2169 = vdwg.mxu0
    %vm2170 = vcmask 13312
    %v2171 = vsel %vm2170, %v2167, -inf
    %2172 = vmax.xlane.f32.xlu0 %v2171
    %v2173 = vpop.xlane.xlu0 %2172
    %v2174 = vsub.f32 %v2167, %v2173
    %v2175 = vmul.f32 %v2174, 1.442695
    %v2176 = vpow.pop %v2175
    %v2177 = vsel %vm2170, %v2176, 0.0
    %2178 = vadd.xlane.f32.xlu0 %v2177
    %v2179 = vpop.xlane.xlu0 %2178
    %v2180 = vrcp.pop %v2179
    %v2181 = vmul.f32 %v2176, %v2180
    %2182 = vst.msk [vmem:[%s65] sm:$0x3f] %vm2170, %v2181
    %v2183 = vld [vmem:[%s13] sm:$0xff]
    %v2184 = vld [vmem:[%s13 + $0x8] sm:$0xff]
    %v2185 = vld [vmem:[%s13 + $0x10] sm:$0xff]
    %v2186 = vld [vmem:[%s13 + $0x18] sm:$0xff]
    %v2187 = vld [vmem:[%s13 + $0x20] sm:$0xff]
    %v2188 = vld [vmem:[%s13 + $0x28] sm:$0xff]
    %v2189 = vld [vmem:[%s13 + $0x30] sm:$0x3]
    %v2190 = vld [vmem:[%s25] sm:$0xff]
    %v2191 = vld [vmem:[%s25 + $0x8] sm:$0xff]
    %v2192 = vld [vmem:[%s25 + $0x10] sm:$0xff]
    %v2193 = vld [vmem:[%s25 + $0x18] sm:$0xff]
    %v2194 = vld [vmem:[%s25 + $0x20] sm:$0xff]
    %v2195 = vld [vmem:[%s25 + $0x28] sm:$0xff]
    %v2196 = vld [vmem:[#allocation9] sm:$0xff]
    %v2197 = vld [vmem:[#allocation9 + $0x8] sm:$0xff]
    %v2198 = vld [vmem:[#allocation9 + $0x10] sm:$0xff]
    %v2199 = vld [vmem:[#allocation9 + $0x18] sm:$0xff]
    %v2200 = vld [vmem:[#allocation9 + $0x20] sm:$0xff]
    %v2201 = vld [vmem:[#allocation9 + $0x28] sm:$0xff]
    %v2202 = vld [vmem:[#allocation9 + $0x30] sm:$0xff]
    %v2203 = vld [vmem:[#allocation9 + $0x38] sm:$0xff]
    %v2204 = vld [vmem:[#allocation9 + $0x40] sm:$0xff]
    %v2205 = vld [vmem:[#allocation9 + $0x48] sm:$0xff]
    %v2206 = vld [vmem:[#allocation9 + $0x50] sm:$0xff]
    %v2207 = vld [vmem:[#allocation9 + $0x58] sm:$0xff]
    %v2208 = vld [vmem:[#allocation9 + $0x60] sm:$0xff]
    %v2209 = vld [vmem:[#allocation9 + $0x68] sm:$0xff]
    %v2210 = vld [vmem:[#allocation9 + $0x70] sm:$0xff]
    %v2211 = vld [vmem:[#allocation9 + $0x78] sm:$0xff]
    %v2212 = vld [vmem:[#allocation9 + $0x80] sm:$0xff]
    %v2213 = vld [vmem:[#allocation9 + $0x88] sm:$0xff]
    %v2214 = vld [vmem:[#allocation9 + $0x90] sm:$0xff]
    %v2215 = vld [vmem:[#allocation9 + $0x98] sm:$0xff]
    %v2216 = vld [vmem:[#allocation9 + $0xa0] sm:$0xff]
    %v2217 = vld [vmem:[#allocation9 + $0xa8] sm:$0xff]
    %v2218 = vld [vmem:[#allocation9 + $0xb0] sm:$0xff]
    %v2219 = vld [vmem:[#allocation9 + $0xb8] sm:$0xff]
    %v2220 = vld [vmem:[#allocation9 + $0xc0] sm:$0xff]
    %v2221 = vld [vmem:[#allocation9 + $0xc8] sm:$0xff]
    %v2222 = vld [vmem:[#allocation9 + $0xd0] sm:$0xff]
    %v2223 = vld [vmem:[#allocation9 + $0xd8] sm:$0xff]
    %v2224 = vld [vmem:[#allocation9 + $0xe0] sm:$0xff]
    %v2225 = vld [vmem:[#allocation9 + $0xe8] sm:$0xff]
    %v2226 = vld [vmem:[#allocation9 + $0xf0] sm:$0xff]
    %v2227 = vld [vmem:[#allocation9 + $0xf8] sm:$0xff]
    %v2228 = vld [vmem:[#allocation9 + $0x100] sm:$0xff]
    %v2229 = vld [vmem:[#allocation9 + $0x108] sm:$0xff]
    %v2230 = vld [vmem:[#allocation9 + $0x110] sm:$0xff]
    %v2231 = vld [vmem:[#allocation9 + $0x118] sm:$0xff]
    %v2232 = vld [vmem:[#allocation9 + $0x120] sm:$0xff]
    %v2233 = vld [vmem:[#allocation9 + $0x128] sm:$0xff]
    %v2234 = vld [vmem:[#allocation9 + $0x130] sm:$0xff]
    %v2235 = vld [vmem:[#allocation9 + $0x138] sm:$0xff]
    %v2236 = vld [vmem:[#allocation9 + $0x140] sm:$0xff]
    %v2237 = vld [vmem:[#allocation9 + $0x148] sm:$0xff]
    %v2238 = vld [vmem:[#allocation9 + $0x150] sm:$0xff]
    %v2239 = vld [vmem:[#allocation9 + $0x158] sm:$0xff]
    %v2240 = vld [vmem:[#allocation9 + $0x160] sm:$0xff]
    %v2241 = vld [vmem:[#allocation9 + $0x168] sm:$0xff]
    %v2242 = vld [vmem:[#allocation9 + $0x170] sm:$0xff]
    %v2243 = vld [vmem:[#allocation9 + $0x178] sm:$0xff]
    %v2244 = vld [vmem:[#allocation10] sm:$0x7]
    %v2245 = vld [vmem:[#allocation12] sm:$0x7]
    %v2247 = vlaneseq
    %v2248 = vshrl.u32 %v2247, 7
    %v2249 = vsub.s32 0, %v2248
    %v2250 = vrot.slane %v2244, %v2249
    %v2251 = vlaneseq
    %v2252 = vshrl.u32 %v2251, 7
    %v2253 = vsub.s32 1, %v2252
    %v2254 = vrot.slane %v2244, %v2253
    %v2255 = vlaneseq
    %v2256 = vshrl.u32 %v2255, 7
    %v2257 = vsub.s32 2, %v2256
    %v2258 = vrot.slane %v2244, %v2257
    %v2263 = vsel %vm408, %v2183, 0
    %v2266 = vsel %vm408, %v2184, 0
    %v2269 = vsel %vm408, %v2185, 0
    %v2272 = vsel %vm408, %v2186, 0
    %v2275 = vsel %vm408, %v2187, 0
    %v2278 = vsel %vm408, %v2188, 0
    %v2281 = vsel %vm408, %v2189, 0
    %2283 = vmatprep.subr.mxu0 %v2191
    %2284 = vmatpush1.msra.mxu0 %v2190
    %2285 = vmatprep.subr.mxu0 %v2194
    %2286 = vmatpush1.msra.mxu0 %v2193
    %2287 = vmatprep.subr.mxu0 0.0
    %2288 = vmatpush1.msra.mxu0 0.0
    %2289 = vmatprep.subr.mxu0 0.0
    %2290 = vmatpush1.msra.mxu0 0.0
    %2291 = vmatprep.subr.mxu0 0.0
    %2292 = vmatpush1.msra.mxu0 0.0
    %2293 = vmatprep.subr.mxu0 0.0
    %2294 = vmatpush1.msra.mxu0 0.0
    %2295 = vmatprep.subr.mxu0 0.0
    %2296 = vmatpush1.msra.mxu0 0.0
    %2297 = vmatprep.subr.mxu0 0.0
    %2298 = vmatpush1.msra.mxu0 0.0
    %2299 = vmatprep.subr.mxu0 0.0
    %2300 = vmatpush1.msra.mxu0 0.0
    %2301 = vmatprep.subr.mxu0 0.0
    %2302 = vmatpush1.msra.mxu0 0.0
    %2303 = vmatprep.subr.mxu0 0.0
    %2304 = vmatpush1.msra.mxu0 0.0
    %2305 = vmatprep.subr.mxu0 0.0
    %2306 = vmatpush1.msra.mxu0 0.0
    %2307 = vmatprep.subr.mxu0 0.0
    %2308 = vmatpush1.msra.mxu0 0.0
    %2309 = vmatprep.subr.mxu0 0.0
    %2310 = vmatpush1.msra.mxu0 0.0
    %2311 = vmatprep.subr.mxu0 0.0
    %2312 = vmatpush1.msra.mxu0 0.0
    %2313 = vmatprep.subr.mxu0 0.0
    %2314 = vmatpush1.msra.mxu0 0.0
    %2315 = vmatprep.subr.mxu0 0.0
    %2316 = vmatpush1.msra.mxu0 0.0
    %2317 = vmatprep.subr.mxu0 0.0
    %2318 = vmatpush1.msra.mxu0 0.0
    %2319 = vmatprep.subr.mxu0 0.0
    %2320 = vmatpush1.msra.mxu0 0.0
    %2321 = vmatprep.subr.mxu0 0.0
    %2322 = vmatpush1.msra.mxu0 0.0
    %2323 = vmatprep.subr.mxu0 0.0
    %2324 = vmatpush1.msra.mxu0 0.0
    %2325 = vmatprep.subr.mxu0 0.0
    %2326 = vmatpush1.msra.mxu0 0.0
    %2327 = vmatprep.subr.mxu0 0.0
    %2328 = vmatpush1.msra.mxu0 0.0
    %2329 = vmatprep.subr.mxu0 0.0
    %2330 = vmatpush1.msra.mxu0 0.0
    %2331 = vmatprep.subr.mxu0 0.0
    %2332 = vmatpush1.msra.mxu0 0.0
    %2333 = vmatprep.subr.mxu0 0.0
    %2334 = vmatpush1.msra.mxu0 0.0
    %2335 = vmatprep.subr.mxu0 0.0
    %2336 = vmatpush1.msra.mxu0 0.0
    %2337 = vmatprep.subr.mxu0 0.0
    %2338 = vmatpush1.msra.mxu0 0.0
    %2339 = vmatprep.subr.mxu0 0.0
    %2340 = vmatpush1.msra.mxu0 0.0
    %2341 = vmatprep.subr.mxu0 0.0
    %2342 = vmatpush1.msra.mxu0 0.0
    %2343 = vmatprep.subr.mxu0 0.0
    %2344 = vmatpush1.msra.mxu0 0.0
    %2345 = vmatprep.subr.mxu0 0.0
    %2346 = vmatpush1.msra.mxu0 0.0
    %2347 = vmatprep.mubr.f32.mxu0 0.0
    %2348 = vmatmul.mubr.f32.gmra.mrb[0].mxu0 %v2263
    %v2349 = vpop.f32.mrb[0].mxu0
    %v2350 = vadd.f32 %v2250, %v2349
    %v2351 = vpop.f32.mrb[0].mxu0
    %v2352 = vadd.f32 %v2254, %v2351
    %2353 = vmatprep.mubr.f32.mxu0 0.0
    %2354 = vmatmul.mubr.f32.gmra.mrb[0].mxu0 %v2266
    %v2355 = vpop.f32.mrb[0].mxu0
    %v2356 = vadd.f32 %v2250, %v2355
    %v2357 = vpop.f32.mrb[0].mxu0
    %v2358 = vadd.f32 %v2254, %v2357
    %2359 = vmatprep.mubr.f32.mxu0 0.0
    %2360 = vmatmul.mubr.f32.gmra.mrb[0].mxu0 %v2269
    %v2361 = vpop.f32.mrb[0].mxu0
    %v2362 = vadd.f32 %v2250, %v2361
    %v2363 = vpop.f32.mrb[0].mxu0
    %v2364 = vadd.f32 %v2254, %v2363
    %2365 = vmatprep.mubr.f32.mxu0 0.0
    %2366 = vmatmul.mubr.f32.gmra.mrb[0].mxu0 %v2272
    %v2367 = vpop.f32.mrb[0].mxu0
    %v2368 = vadd.f32 %v2250, %v2367
    %v2369 = vpop.f32.mrb[0].mxu0
    %v2370 = vadd.f32 %v2254, %v2369
    %2371 = vmatprep.mubr.f32.mxu0 0.0
    %2372 = vmatmul.mubr.f32.gmra.mrb[0].mxu0 %v2275
    %v2373 = vpop.f32.mrb[0].mxu0
    %v2374 = vadd.f32 %v2250, %v2373
    %v2375 = vpop.f32.mrb[0].mxu0
    %v2376 = vadd.f32 %v2254, %v2375
    %2377 = vmatprep.mubr.f32.mxu0 0.0
    %2378 = vmatmul.mubr.f32.gmra.mrb[0].mxu0 %v2278
    %v2379 = vpop.f32.mrb[0].mxu0
    %v2380 = vadd.f32 %v2250, %v2379
    %v2381 = vpop.f32.mrb[0].mxu0
    %v2382 = vadd.f32 %v2254, %v2381
    %2383 = vmatprep.mubr.f32.mxu0 0.0
    %2384 = vmatmul.mubr.f32.gmra.mrb[0].mxu0 %v2281
    %v2385 = vpop.f32.mrb[0].mxu0
    %v2386 = vadd.f32 %v2250, %v2385
    %v2387 = vpop.f32.mrb[0].mxu0
    %v2388 = vadd.f32 %v2254, %v2387
    %2389 = vdwg.mxu0
    %2390 = vmatprep.subr.mxu0 0.0
    %2391 = vmatpush1.msra.mxu0 %v2192
    %2392 = vmatprep.subr.mxu0 0.0
    %2393 = vmatpush1.msra.mxu0 %v2195
    %2394 = vmatprep.subr.mxu0 0.0
    %2395 = vmatpush1.msra.mxu0 0.0
    %2396 = vmatprep.subr.mxu0 0.0
    %2397 = vmatpush1.msra.mxu0 0.0
    %2398 = vmatprep.subr.mxu0 0.0
    %2399 = vmatpush1.msra.mxu0 0.0
    %2400 = vmatprep.subr.mxu0 0.0
    %2401 = vmatpush1.msra.mxu0 0.0
    %2402 = vmatprep.subr.mxu0 0.0
    %2403 = vmatpush1.msra.mxu0 0.0
    %2404 = vmatprep.subr.mxu0 0.0
    %2405 = vmatpush1.msra.mxu0 0.0
    %2406 = vmatprep.subr.mxu0 0.0
    %2407 = vmatpush1.msra.mxu0 0.0
    %2408 = vmatprep.subr.mxu0 0.0
    %2409 = vmatpush1.msra.mxu0 0.0
    %2410 = vmatprep.subr.mxu0 0.0
    %2411 = vmatpush1.msra.mxu0 0.0
    %2412 = vmatprep.subr.mxu0 0.0
    %2413 = vmatpush1.msra.mxu0 0.0
    %2414 = vmatprep.subr.mxu0 0.0
    %2415 = vmatpush1.msra.mxu0 0.0
    %2416 = vmatprep.subr.mxu0 0.0
    %2417 = vmatpush1.msra.mxu0 0.0
    %2418 = vmatprep.subr.mxu0 0.0
    %2419 = vmatpush1.msra.mxu0 0.0
    %2420 = vmatprep.subr.mxu0 0.0
    %2421 = vmatpush1.msra.mxu0 0.0
    %2422 = vmatprep.subr.mxu0 0.0
    %2423 = vmatpush1.msra.mxu0 0.0
    %2424 = vmatprep.subr.mxu0 0.0
    %2425 = vmatpush1.msra.mxu0 0.0
    %2426 = vmatprep.subr.mxu0 0.0
    %2427 = vmatpush1.msra.mxu0 0.0
    %2428 = vmatprep.subr.mxu0 0.0
    %2429 = vmatpush1.msra.mxu0 0.0
    %2430 = vmatprep.subr.mxu0 0.0
    %2431 = vmatpush1.msra.mxu0 0.0
    %2432 = vmatprep.subr.mxu0 0.0
    %2433 = vmatpush1.msra.mxu0 0.0
    %2434 = vmatprep.subr.mxu0 0.0
    %2435 = vmatpush1.msra.mxu0 0.0
    %2436 = vmatprep.subr.mxu0 0.0
    %2437 = vmatpush1.msra.mxu0 0.0
    %2438 = vmatprep.subr.mxu0 0.0
    %2439 = vmatpush1.msra.mxu0 0.0
    %2440 = vmatprep.subr.mxu0 0.0
    %2441 = vmatpush1.msra.mxu0 0.0
    %2442 = vmatprep.subr.mxu0 0.0
    %2443 = vmatpush1.msra.mxu0 0.0
    %2444 = vmatprep.subr.mxu0 0.0
    %2445 = vmatpush1.msra.mxu0 0.0
    %2446 = vmatprep.subr.mxu0 0.0
    %2447 = vmatpush1.msra.mxu0 0.0
    %2448 = vmatprep.subr.mxu0 0.0
    %2449 = vmatpush1.msra.mxu0 0.0
    %2450 = vmatprep.subr.mxu0 0.0
    %2451 = vmatpush1.msra.mxu0 0.0
    %2452 = vmatprep.subr.mxu0 0.0
    %2453 = vmatpush1.msra.mxu0 0.0
    %2454 = vmatprep.mubr.f32.mxu0 0.0
    %2455 = vmatmul.mubr.f32.gmra.mrb[0].mxu0 %v2263
    %v2456 = vpop.f32.mrb[0].mxu0
    %v2457 = vadd.f32 %v2258, %v2456
    %v2458 = vpop.f32.mrb[0].mxu0
    %2459 = vmatprep.mubr.f32.mxu0 0.0
    %2460 = vmatmul.mubr.f32.gmra.mrb[0].mxu0 %v2266
    %v2461 = vpop.f32.mrb[0].mxu0
    %v2462 = vadd.f32 %v2258, %v2461
    %v2463 = vpop.f32.mrb[0].mxu0
    %2464 = vmatprep.mubr.f32.mxu0 0.0
    %2465 = vmatmul.mubr.f32.gmra.mrb[0].mxu0 %v2269
    %v2466 = vpop.f32.mrb[0].mxu0
    %v2467 = vadd.f32 %v2258, %v2466
    %v2468 = vpop.f32.mrb[0].mxu0
    %2469 = vmatprep.mubr.f32.mxu0 0.0
    %2470 = vmatmul.mubr.f32.gmra.mrb[0].mxu0 %v2272
    %v2471 = vpop.f32.mrb[0].mxu0
    %v2472 = vadd.f32 %v2258, %v2471
    %v2473 = vpop.f32.mrb[0].mxu0
    %2474 = vmatprep.mubr.f32.mxu0 0.0
    %2475 = vmatmul.mubr.f32.gmra.mrb[0].mxu0 %v2275
    %v2476 = vpop.f32.mrb[0].mxu0
    %v2477 = vadd.f32 %v2258, %v2476
    %v2478 = vpop.f32.mrb[0].mxu0
    %2479 = vmatprep.mubr.f32.mxu0 0.0
    %2480 = vmatmul.mubr.f32.gmra.mrb[0].mxu0 %v2278
    %v2481 = vpop.f32.mrb[0].mxu0
    %v2482 = vadd.f32 %v2258, %v2481
    %v2483 = vpop.f32.mrb[0].mxu0
    %2484 = vmatprep.mubr.f32.mxu0 0.0
    %2485 = vmatmul.mubr.f32.gmra.mrb[0].mxu0 %v2281
    %v2486 = vpop.f32.mrb[0].mxu0
    %v2487 = vadd.f32 %v2258, %v2486
    %v2488 = vpop.f32.mrb[0].mxu0
    %2489 = vdwg.mxu0
    %v2491 = vlaneseq
    %v2492 = vshrl.u32 %v2491, 7
    %v2493 = vsub.s32 0, %v2492
    %v2494 = vrot.slane %v2245, %v2493
    %v2495 = vlaneseq
    %v2496 = vshrl.u32 %v2495, 7
    %v2497 = vsub.s32 1, %v2496
    %v2498 = vrot.slane %v2245, %v2497
    %v2499 = vlaneseq
    %v2500 = vshrl.u32 %v2499, 7
    %v2501 = vsub.s32 2, %v2500
    %v2502 = vrot.slane %v2245, %v2501
    %2506 = vmatprep.subr.mxu0 %v2197
    %2507 = vmatpush1.msra.mxu0 %v2196
    %2508 = vmatprep.subr.mxu0 %v2200
    %2509 = vmatpush1.msra.mxu0 %v2199
    %2510 = vmatprep.subr.mxu0 %v2203
    %2511 = vmatpush1.msra.mxu0 %v2202
    %2512 = vmatprep.subr.mxu0 %v2206
    %2513 = vmatpush1.msra.mxu0 %v2205
    %2514 = vmatprep.subr.mxu0 %v2209
    %2515 = vmatpush1.msra.mxu0 %v2208
    %2516 = vmatprep.subr.mxu0 %v2212
    %2517 = vmatpush1.msra.mxu0 %v2211
    %2518 = vmatprep.subr.mxu0 %v2215
    %2519 = vmatpush1.msra.mxu0 %v2214
    %2520 = vmatprep.subr.mxu0 %v2218
    %2521 = vmatpush1.msra.mxu0 %v2217
    %2522 = vmatprep.subr.mxu0 %v2221
    %2523 = vmatpush1.msra.mxu0 %v2220
    %2524 = vmatprep.subr.mxu0 %v2224
    %2525 = vmatpush1.msra.mxu0 %v2223
    %2526 = vmatprep.subr.mxu0 %v2227
    %2527 = vmatpush1.msra.mxu0 %v2226
    %2528 = vmatprep.subr.mxu0 %v2230
    %2529 = vmatpush1.msra.mxu0 %v2229
    %2530 = vmatprep.subr.mxu0 %v2233
    %2531 = vmatpush1.msra.mxu0 %v2232
    %2532 = vmatprep.subr.mxu0 %v2236
    %2533 = vmatpush1.msra.mxu0 %v2235
    %2534 = vmatprep.subr.mxu0 %v2239
    %2535 = vmatpush1.msra.mxu0 %v2238
    %2536 = vmatprep.subr.mxu0 %v2242
    %2537 = vmatpush1.msra.mxu0 %v2241
    %2538 = vmatprep.subr.mxu0 0.0
    %2539 = vmatpush1.msra.mxu0 0.0
    %2540 = vmatprep.subr.mxu0 0.0
    %2541 = vmatpush1.msra.mxu0 0.0
    %2542 = vmatprep.subr.mxu0 0.0
    %2543 = vmatpush1.msra.mxu0 0.0
    %2544 = vmatprep.subr.mxu0 0.0
    %2545 = vmatpush1.msra.mxu0 0.0
    %2546 = vmatprep.subr.mxu0 0.0
    %2547 = vmatpush1.msra.mxu0 0.0
    %2548 = vmatprep.subr.mxu0 0.0
    %2549 = vmatpush1.msra.mxu0 0.0
    %2550 = vmatprep.subr.mxu0 0.0
    %2551 = vmatpush1.msra.mxu0 0.0
    %2552 = vmatprep.subr.mxu0 0.0
    %2553 = vmatpush1.msra.mxu0 0.0
    %2554 = vmatprep.subr.mxu0 0.0
    %2555 = vmatpush1.msra.mxu0 0.0
    %2556 = vmatprep.subr.mxu0 0.0
    %2557 = vmatpush1.msra.mxu0 0.0
    %2558 = vmatprep.subr.mxu0 0.0
    %2559 = vmatpush1.msra.mxu0 0.0
    %2560 = vmatprep.subr.mxu0 0.0
    %2561 = vmatpush1.msra.mxu0 0.0
    %2562 = vmatprep.subr.mxu0 0.0
    %2563 = vmatpush1.msra.mxu0 0.0
    %2564 = vmatprep.subr.mxu0 0.0
    %2565 = vmatpush1.msra.mxu0 0.0
    %2566 = vmatprep.subr.mxu0 0.0
    %2567 = vmatpush1.msra.mxu0 0.0
    %2568 = vmatprep.subr.mxu0 0.0
    %2569 = vmatpush1.msra.mxu0 0.0
    %2570 = vmatprep.mubr.f32.mxu0 0.0
    %2571 = vmatmul.mubr.f32.gmra.mrb[0].mxu0 0.0
    %v2572 = vpop.f32.mrb[0].mxu0
    %v2573 = vadd.f32 %v2494, %v2572
    %v2574 = vpop.f32.mrb[0].mxu0
    %v2575 = vadd.f32 %v2498, %v2574
    %2576 = vmatprep.mubr.f32.mxu0 0.0
    %2577 = vmatmul.mubr.f32.gmra.mrb[0].mxu0 0.0
    %v2578 = vpop.f32.mrb[0].mxu0
    %v2579 = vadd.f32 %v2494, %v2578
    %v2580 = vpop.f32.mrb[0].mxu0
    %v2581 = vadd.f32 %v2498, %v2580
    %2582 = vdwg.mxu0
    %2583 = vmatprep.subr.mxu0 0.0
    %2584 = vmatpush1.msra.mxu0 %v2198
    %2585 = vmatprep.subr.mxu0 0.0
    %2586 = vmatpush1.msra.mxu0 %v2201
    %2587 = vmatprep.subr.mxu0 0.0
    %2588 = vmatpush1.msra.mxu0 %v2204
    %2589 = vmatprep.subr.mxu0 0.0
    %2590 = vmatpush1.msra.mxu0 %v2207
    %2591 = vmatprep.subr.mxu0 0.0
    %2592 = vmatpush1.msra.mxu0 %v2210
    %2593 = vmatprep.subr.mxu0 0.0
    %2594 = vmatpush1.msra.mxu0 %v2213
    %2595 = vmatprep.subr.mxu0 0.0
    %2596 = vmatpush1.msra.mxu0 %v2216
    %2597 = vmatprep.subr.mxu0 0.0
    %2598 = vmatpush1.msra.mxu0 %v2219
    %2599 = vmatprep.subr.mxu0 0.0
    %2600 = vmatpush1.msra.mxu0 %v2222
    %2601 = vmatprep.subr.mxu0 0.0
    %2602 = vmatpush1.msra.mxu0 %v2225
    %2603 = vmatprep.subr.mxu0 0.0
    %2604 = vmatpush1.msra.mxu0 %v2228
    %2605 = vmatprep.subr.mxu0 0.0
    %2606 = vmatpush1.msra.mxu0 %v2231
    %2607 = vmatprep.subr.mxu0 0.0
    %2608 = vmatpush1.msra.mxu0 %v2234
    %2609 = vmatprep.subr.mxu0 0.0
    %2610 = vmatpush1.msra.mxu0 %v2237
    %2611 = vmatprep.subr.mxu0 0.0
    %2612 = vmatpush1.msra.mxu0 %v2240
    %2613 = vmatprep.subr.mxu0 0.0
    %2614 = vmatpush1.msra.mxu0 %v2243
    %2615 = vmatprep.subr.mxu0 0.0
    %2616 = vmatpush1.msra.mxu0 0.0
    %2617 = vmatprep.subr.mxu0 0.0
    %2618 = vmatpush1.msra.mxu0 0.0
    %2619 = vmatprep.subr.mxu0 0.0
    %2620 = vmatpush1.msra.mxu0 0.0
    %2621 = vmatprep.subr.mxu0 0.0
    %2622 = vmatpush1.msra.mxu0 0.0
    %2623 = vmatprep.subr.mxu0 0.0
    %2624 = vmatpush1.msra.mxu0 0.0
    %2625 = vmatprep.subr.mxu0 0.0
    %2626 = vmatpush1.msra.mxu0 0.0
    %2627 = vmatprep.subr.mxu0 0.0
    %2628 = vmatpush1.msra.mxu0 0.0
    %2629 = vmatprep.subr.mxu0 0.0
    %2630 = vmatpush1.msra.mxu0 0.0
    %2631 = vmatprep.subr.mxu0 0.0
    %2632 = vmatpush1.msra.mxu0 0.0
    %2633 = vmatprep.subr.mxu0 0.0
    %2634 = vmatpush1.msra.mxu0 0.0
    %2635 = vmatprep.subr.mxu0 0.0
    %2636 = vmatpush1.msra.mxu0 0.0
    %2637 = vmatprep.subr.mxu0 0.0
    %2638 = vmatpush1.msra.mxu0 0.0
    %2639 = vmatprep.subr.mxu0 0.0
    %2640 = vmatpush1.msra.mxu0 0.0
    %2641 = vmatprep.subr.mxu0 0.0
    %2642 = vmatpush1.msra.mxu0 0.0
    %2643 = vmatprep.subr.mxu0 0.0
    %2644 = vmatpush1.msra.mxu0 0.0
    %2645 = vmatprep.subr.mxu0 0.0
    %2646 = vmatpush1.msra.mxu0 0.0
    %2647 = vmatprep.mubr.f32.mxu0 0.0
    %2648 = vmatmul.mubr.f32.gmra.mrb[0].mxu0 0.0
    %v2649 = vpop.f32.mrb[0].mxu0
    %v2650 = vadd.f32 %v2502, %v2649
    %v2651 = vpop.f32.mrb[0].mxu0
    %2652 = vmatprep.mubr.f32.mxu0 0.0
    %2653 = vmatmul.mubr.f32.gmra.mrb[0].mxu0 0.0
    %v2654 = vpop.f32.mrb[0].mxu0
    %v2655 = vadd.f32 %v2502, %v2654
    %v2656 = vpop.f32.mrb[0].mxu0
    %2657 = vdwg.mxu0
    %v2658 = vadd.f32 %v2350, %v2573
    %v2659 = vadd.f32 %v2356, %v2579
    %v2660 = vxor.u32 %v2658, 2147483648
    %v2661 = vxor.u32 %v2659, 2147483648
    %v2662 = vmul.f32 %v2660, 1.442695
    %v2663 = vpow.pop %v2662
    %v2664 = vmul.f32 %v2661, 1.442695
    %v2665 = vpow.pop %v2664
    %v2666 = vadd.f32 %v2663, 1.0
    %v2667 = vadd.f32 %v2665, 1.0
    %v2668 = vrcp.pop %v2666
    %v2669 = vmul.f32 1.0, %v2668
    %v2670 = vrcp.pop %v2667
    %v2671 = vmul.f32 1.0, %v2670
    %v2672 = vadd.f32 %v2352, %v2575
    %v2673 = vadd.f32 %v2358, %v2581
    %v2674 = vxor.u32 %v2672, 2147483648
    %v2675 = vxor.u32 %v2673, 2147483648
    %v2676 = vmul.f32 %v2674, 1.442695
    %v2677 = vpow.pop %v2676
    %v2678 = vmul.f32 %v2675, 1.442695
    %v2679 = vpow.pop %v2678
    %v2680 = vadd.f32 %v2677, 1.0
    %v2681 = vadd.f32 %v2679, 1.0
    %v2682 = vrcp.pop %v2680
    %v2683 = vmul.f32 1.0, %v2682
    %v2684 = vrcp.pop %v2681
    %v2685 = vmul.f32 1.0, %v2684
    %v2686 = vmul.f32 %v2669, %v2650
    %v2687 = vmul.f32 %v2671, %v2655
    %v2688 = vadd.f32 %v2457, %v2686
    %v2689 = vadd.f32 %v2462, %v2687
    %v2690 = vtanh.pop %v2688
    %v2691 = vtanh.pop %v2689
    %v2692 = vsub.f32 1.0, %v2683
    %v2693 = vsub.f32 1.0, %v2685
    %v2694 = vmul.f32 %v2692, %v2690
    %v2695 = vmul.f32 %v2693, %v2691
    %v2696 = vmul.f32 %v2683, 0.0
    %v2697 = vmul.f32 %v2685, 0.0
    %v2698 = vadd.f32 %v2694, %v2696
    %v2699 = vadd.f32 %v2695, %v2697
    %2700 = vmatprep.subr.mxu0 %v2197
    %2701 = vmatpush1.msra.mxu0 %v2196
    %2702 = vmatprep.subr.mxu0 %v2200
    %2703 = vmatpush1.msra.mxu0 %v2199
    %2704 = vmatprep.subr.mxu0 %v2203
    %2705 = vmatpush1.msra.mxu0 %v2202
    %2706 = vmatprep.subr.mxu0 %v2206
    %2707 = vmatpush1.msra.mxu0 %v2205
    %2708 = vmatprep.subr.mxu0 %v2209
    %2709 = vmatpush1.msra.mxu0 %v2208
    %2710 = vmatprep.subr.mxu0 %v2212
    %2711 = vmatpush1.msra.mxu0 %v2211
    %2712 = vmatprep.subr.mxu0 %v2215
    %2713 = vmatpush1.msra.mxu0 %v2214
    %2714 = vmatprep.subr.mxu0 %v2218
    %2715 = vmatpush1.msra.mxu0 %v2217
    %2716 = vmatprep.subr.mxu0 %v2221
    %2717 = vmatpush1.msra.mxu0 %v2220
    %2718 = vmatprep.subr.mxu0 %v2224
    %2719 = vmatpush1.msra.mxu0 %v2223
    %2720 = vmatprep.subr.mxu0 %v2227
    %2721 = vmatpush1.msra.mxu0 %v2226
    %2722 = vmatprep.subr.mxu0 %v2230
    %2723 = vmatpush1.msra.mxu0 %v2229
    %2724 = vmatprep.subr.mxu0 %v2233
    %2725 = vmatpush1.msra.mxu0 %v2232
    %2726 = vmatprep.subr.mxu0 %v2236
    %2727 = vmatpush1.msra.mxu0 %v2235
    %2728 = vmatprep.subr.mxu0 %v2239
    %2729 = vmatpush1.msra.mxu0 %v2238
    %2730 = vmatprep.subr.mxu0 %v2242
    %2731 = vmatpush1.msra.mxu0 %v2241
    %2732 = vmatprep.subr.mxu0 0.0
    %2733 = vmatpush1.msra.mxu0 0.0
    %2734 = vmatprep.subr.mxu0 0.0
    %2735 = vmatpush1.msra.mxu0 0.0
    %2736 = vmatprep.subr.mxu0 0.0
    %2737 = vmatpush1.msra.mxu0 0.0
    %2738 = vmatprep.subr.mxu0 0.0
    %2739 = vmatpush1.msra.mxu0 0.0
    %2740 = vmatprep.subr.mxu0 0.0
    %2741 = vmatpush1.msra.mxu0 0.0
    %2742 = vmatprep.subr.mxu0 0.0
    %2743 = vmatpush1.msra.mxu0 0.0
    %2744 = vmatprep.subr.mxu0 0.0
    %2745 = vmatpush1.msra.mxu0 0.0
    %2746 = vmatprep.subr.mxu0 0.0
    %2747 = vmatpush1.msra.mxu0 0.0
    %2748 = vmatprep.subr.mxu0 0.0
    %2749 = vmatpush1.msra.mxu0 0.0
    %2750 = vmatprep.subr.mxu0 0.0
    %2751 = vmatpush1.msra.mxu0 0.0
    %2752 = vmatprep.subr.mxu0 0.0
    %2753 = vmatpush1.msra.mxu0 0.0
    %2754 = vmatprep.subr.mxu0 0.0
    %2755 = vmatpush1.msra.mxu0 0.0
    %2756 = vmatprep.subr.mxu0 0.0
    %2757 = vmatpush1.msra.mxu0 0.0
    %2758 = vmatprep.subr.mxu0 0.0
    %2759 = vmatpush1.msra.mxu0 0.0
    %2760 = vmatprep.subr.mxu0 0.0
    %2761 = vmatpush1.msra.mxu0 0.0
    %2762 = vmatprep.subr.mxu0 0.0
    %2763 = vmatpush1.msra.mxu0 0.0
    %2764 = vmatprep.mubr.f32.mxu0 0.0
    %2765 = vmatmul.mubr.f32.gmra.mrb[0].mxu0 %v2698
    %v2766 = vpop.f32.mrb[0].mxu0
    %v2767 = vadd.f32 %v2494, %v2766
    %v2768 = vpop.f32.mrb[0].mxu0
    %v2769 = vadd.f32 %v2498, %v2768
    %2770 = vmatprep.mubr.f32.mxu0 0.0
    %2771 = vmatmul.mubr.f32.gmra.mrb[0].mxu0 %v2699
    %v2772 = vpop.f32.mrb[0].mxu0
    %v2773 = vadd.f32 %v2494, %v2772
    %v2774 = vpop.f32.mrb[0].mxu0
    %v2775 = vadd.f32 %v2498, %v2774
    %2776 = vdwg.mxu0
    %2777 = vmatprep.subr.mxu0 0.0
    %2778 = vmatpush1.msra.mxu0 %v2198
    %2779 = vmatprep.subr.mxu0 0.0
    %2780 = vmatpush1.msra.mxu0 %v2201
    %2781 = vmatprep.subr.mxu0 0.0
    %2782 = vmatpush1.msra.mxu0 %v2204
    %2783 = vmatprep.subr.mxu0 0.0
    %2784 = vmatpush1.msra.mxu0 %v2207
    %2785 = vmatprep.subr.mxu0 0.0
    %2786 = vmatpush1.msra.mxu0 %v2210
    %2787 = vmatprep.subr.mxu0 0.0
    %2788 = vmatpush1.msra.mxu0 %v2213
    %2789 = vmatprep.subr.mxu0 0.0
    %2790 = vmatpush1.msra.mxu0 %v2216
    %2791 = vmatprep.subr.mxu0 0.0
    %2792 = vmatpush1.msra.mxu0 %v2219
    %2793 = vmatprep.subr.mxu0 0.0
    %2794 = vmatpush1.msra.mxu0 %v2222
    %2795 = vmatprep.subr.mxu0 0.0
    %2796 = vmatpush1.msra.mxu0 %v2225
    %2797 = vmatprep.subr.mxu0 0.0
    %2798 = vmatpush1.msra.mxu0 %v2228
    %2799 = vmatprep.subr.mxu0 0.0
    %2800 = vmatpush1.msra.mxu0 %v2231
    %2801 = vmatprep.subr.mxu0 0.0
    %2802 = vmatpush1.msra.mxu0 %v2234
    %2803 = vmatprep.subr.mxu0 0.0
    %2804 = vmatpush1.msra.mxu0 %v2237
    %2805 = vmatprep.subr.mxu0 0.0
    %2806 = vmatpush1.msra.mxu0 %v2240
    %2807 = vmatprep.subr.mxu0 0.0
    %2808 = vmatpush1.msra.mxu0 %v2243
    %2809 = vmatprep.subr.mxu0 0.0
    %2810 = vmatpush1.msra.mxu0 0.0
    %2811 = vmatprep.subr.mxu0 0.0
    %2812 = vmatpush1.msra.mxu0 0.0
    %2813 = vmatprep.subr.mxu0 0.0
    %2814 = vmatpush1.msra.mxu0 0.0
    %2815 = vmatprep.subr.mxu0 0.0
    %2816 = vmatpush1.msra.mxu0 0.0
    %2817 = vmatprep.subr.mxu0 0.0
    %2818 = vmatpush1.msra.mxu0 0.0
    %2819 = vmatprep.subr.mxu0 0.0
    %2820 = vmatpush1.msra.mxu0 0.0
    %2821 = vmatprep.subr.mxu0 0.0
    %2822 = vmatpush1.msra.mxu0 0.0
    %2823 = vmatprep.subr.mxu0 0.0
    %2824 = vmatpush1.msra.mxu0 0.0
    %2825 = vmatprep.subr.mxu0 0.0
    %2826 = vmatpush1.msra.mxu0 0.0
    %2827 = vmatprep.subr.mxu0 0.0
    %2828 = vmatpush1.msra.mxu0 0.0
    %2829 = vmatprep.subr.mxu0 0.0
    %2830 = vmatpush1.msra.mxu0 0.0
    %2831 = vmatprep.subr.mxu0 0.0
    %2832 = vmatpush1.msra.mxu0 0.0
    %2833 = vmatprep.subr.mxu0 0.0
    %2834 = vmatpush1.msra.mxu0 0.0
    %2835 = vmatprep.subr.mxu0 0.0
    %2836 = vmatpush1.msra.mxu0 0.0
    %2837 = vmatprep.subr.mxu0 0.0
    %2838 = vmatpush1.msra.mxu0 0.0
    %2839 = vmatprep.subr.mxu0 0.0
    %2840 = vmatpush1.msra.mxu0 0.0
    %2841 = vmatprep.mubr.f32.mxu0 0.0
    %2842 = vmatmul.mubr.f32.gmra.mrb[0].mxu0 %v2698
    %v2843 = vpop.f32.mrb[0].mxu0
    %v2844 = vadd.f32 %v2502, %v2843
    %v2845 = vpop.f32.mrb[0].mxu0
    %2846 = vmatprep.mubr.f32.mxu0 0.0
    %2847 = vmatmul.mubr.f32.gmra.mrb[0].mxu0 %v2699
    %v2848 = vpop.f32.mrb[0].mxu0
    %v2849 = vadd.f32 %v2502, %v2848
    %v2850 = vpop.f32.mrb[0].mxu0
    %2851 = vdwg.mxu0
    %v2854 = vrot.slane %v2767, 6
    %v2855 = vrot.slane %v2773, 6
    %v2856 = vsel %vm970, %v2854, %v2855
    %v2859 = vadd.f32 %v2356, %v2854
    %v2860 = vadd.f32 %v2362, %v2856
    %v2861 = vxor.u32 %v2859, 2147483648
    %v2862 = vxor.u32 %v2860, 2147483648
    %v2863 = vmul.f32 %v2861, 1.442695
    %v2864 = vpow.pop %v2863
    %v2865 = vmul.f32 %v2862, 1.442695
    %v2866 = vpow.pop %v2865
    %v2867 = vadd.f32 %v2864, 1.0
    %v2868 = vadd.f32 %v2866, 1.0
    %v2869 = vrcp.pop %v2867
    %v2870 = vmul.f32 1.0, %v2869
    %v2871 = vrcp.pop %v2868
    %v2872 = vmul.f32 1.0, %v2871
    %v2875 = vrot.slane %v2769, 6
    %v2876 = vrot.slane %v2775, 6
    %v2877 = vsel %vm970, %v2875, %v2876
    %v2880 = vadd.f32 %v2358, %v2875
    %v2881 = vadd.f32 %v2364, %v2877
    %v2882 = vxor.u32 %v2880, 2147483648
    %v2883 = vxor.u32 %v2881, 2147483648
    %v2884 = vmul.f32 %v2882, 1.442695
    %v2885 = vpow.pop %v2884
    %v2886 = vmul.f32 %v2883, 1.442695
    %v2887 = vpow.pop %v2886
    %v2888 = vadd.f32 %v2885, 1.0
    %v2889 = vadd.f32 %v2887, 1.0
    %v2890 = vrcp.pop %v2888
    %v2891 = vmul.f32 1.0, %v2890
    %v2892 = vrcp.pop %v2889
    %v2893 = vmul.f32 1.0, %v2892
    %v2896 = vrot.slane %v2844, 6
    %v2897 = vrot.slane %v2849, 6
    %v2898 = vsel %vm970, %v2896, %v2897
    %v2901 = vmul.f32 %v2870, %v2896
    %v2902 = vmul.f32 %v2872, %v2898
    %v2903 = vadd.f32 %v2462, %v2901
    %v2904 = vadd.f32 %v2467, %v2902
    %v2905 = vtanh.pop %v2903
    %v2906 = vtanh.pop %v2904
    %v2907 = vsub.f32 1.0, %v2891
    %v2908 = vsub.f32 1.0, %v2893
    %v2909 = vmul.f32 %v2907, %v2905
    %v2910 = vmul.f32 %v2908, %v2906
    %v2913 = vrot.slane %v2698, 6
    %v2914 = vrot.slane %v2699, 6
    %v2915 = vsel %vm970, %v2913, %v2914
    %v2918 = vmul.f32 %v2891, %v2913
    %v2919 = vmul.f32 %v2893, %v2915
    %v2920 = vadd.f32 %v2909, %v2918
    %v2921 = vadd.f32 %v2910, %v2919
    %v2924 = vrot.slane %v2920, 2
    %v2925 = vrot.slane %v2921, 2
    %v2926 = vsel %vm1163, %v2924, %v2925
    %2929 = vmatprep.subr.mxu0 %v2197
    %2930 = vmatpush1.msra.mxu0 %v2196
    %2931 = vmatprep.subr.mxu0 %v2200
    %2932 = vmatpush1.msra.mxu0 %v2199
    %2933 = vmatprep.subr.mxu0 %v2203
    %2934 = vmatpush1.msra.mxu0 %v2202
    %2935 = vmatprep.subr.mxu0 %v2206
    %2936 = vmatpush1.msra.mxu0 %v2205
    %2937 = vmatprep.subr.mxu0 %v2209
    %2938 = vmatpush1.msra.mxu0 %v2208
    %2939 = vmatprep.subr.mxu0 %v2212
    %2940 = vmatpush1.msra.mxu0 %v2211
    %2941 = vmatprep.subr.mxu0 %v2215
    %2942 = vmatpush1.msra.mxu0 %v2214
    %2943 = vmatprep.subr.mxu0 %v2218
    %2944 = vmatpush1.msra.mxu0 %v2217
    %2945 = vmatprep.subr.mxu0 %v2221
    %2946 = vmatpush1.msra.mxu0 %v2220
    %2947 = vmatprep.subr.mxu0 %v2224
    %2948 = vmatpush1.msra.mxu0 %v2223
    %2949 = vmatprep.subr.mxu0 %v2227
    %2950 = vmatpush1.msra.mxu0 %v2226
    %2951 = vmatprep.subr.mxu0 %v2230
    %2952 = vmatpush1.msra.mxu0 %v2229
    %2953 = vmatprep.subr.mxu0 %v2233
    %2954 = vmatpush1.msra.mxu0 %v2232
    %2955 = vmatprep.subr.mxu0 %v2236
    %2956 = vmatpush1.msra.mxu0 %v2235
    %2957 = vmatprep.subr.mxu0 %v2239
    %2958 = vmatpush1.msra.mxu0 %v2238
    %2959 = vmatprep.subr.mxu0 %v2242
    %2960 = vmatpush1.msra.mxu0 %v2241
    %2961 = vmatprep.subr.mxu0 0.0
    %2962 = vmatpush1.msra.mxu0 0.0
    %2963 = vmatprep.subr.mxu0 0.0
    %2964 = vmatpush1.msra.mxu0 0.0
    %2965 = vmatprep.subr.mxu0 0.0
    %2966 = vmatpush1.msra.mxu0 0.0
    %2967 = vmatprep.subr.mxu0 0.0
    %2968 = vmatpush1.msra.mxu0 0.0
    %2969 = vmatprep.subr.mxu0 0.0
    %2970 = vmatpush1.msra.mxu0 0.0
    %2971 = vmatprep.subr.mxu0 0.0
    %2972 = vmatpush1.msra.mxu0 0.0
    %2973 = vmatprep.subr.mxu0 0.0
    %2974 = vmatpush1.msra.mxu0 0.0
    %2975 = vmatprep.subr.mxu0 0.0
    %2976 = vmatpush1.msra.mxu0 0.0
    %2977 = vmatprep.subr.mxu0 0.0
    %2978 = vmatpush1.msra.mxu0 0.0
    %2979 = vmatprep.subr.mxu0 0.0
    %2980 = vmatpush1.msra.mxu0 0.0
    %2981 = vmatprep.subr.mxu0 0.0
    %2982 = vmatpush1.msra.mxu0 0.0
    %2983 = vmatprep.subr.mxu0 0.0
    %2984 = vmatpush1.msra.mxu0 0.0
    %2985 = vmatprep.subr.mxu0 0.0
    %2986 = vmatpush1.msra.mxu0 0.0
    %2987 = vmatprep.subr.mxu0 0.0
    %2988 = vmatpush1.msra.mxu0 0.0
    %2989 = vmatprep.subr.mxu0 0.0
    %2990 = vmatpush1.msra.mxu0 0.0
    %2991 = vmatprep.subr.mxu0 0.0
    %2992 = vmatpush1.msra.mxu0 0.0
    %2993 = vmatprep.mubr.f32.mxu0 0.0
    %2994 = vmatmul.mubr.f32.gmra.mrb[0].mxu0 %v2926
    %v2995 = vpop.f32.mrb[0].mxu0
    %v2996 = vadd.f32 %v2494, %v2995
    %v2997 = vpop.f32.mrb[0].mxu0
    %v2998 = vadd.f32 %v2498, %v2997
    %2999 = vmatprep.mubr.f32.mxu0 0.0
    %3000 = vmatmul.mubr.f32.gmra.mrb[0].mxu0 %v2925
    %v3001 = vpop.f32.mrb[0].mxu0
    %v3002 = vadd.f32 %v2494, %v3001
    %v3003 = vpop.f32.mrb[0].mxu0
    %v3004 = vadd.f32 %v2498, %v3003
    %3005 = vdwg.mxu0
    %3006 = vmatprep.subr.mxu0 0.0
    %3007 = vmatpush1.msra.mxu0 %v2198
    %3008 = vmatprep.subr.mxu0 0.0
    %3009 = vmatpush1.msra.mxu0 %v2201
    %3010 = vmatprep.subr.mxu0 0.0
    %3011 = vmatpush1.msra.mxu0 %v2204
    %3012 = vmatprep.subr.mxu0 0.0
    %3013 = vmatpush1.msra.mxu0 %v2207
    %3014 = vmatprep.subr.mxu0 0.0
    %3015 = vmatpush1.msra.mxu0 %v2210
    %3016 = vmatprep.subr.mxu0 0.0
    %3017 = vmatpush1.msra.mxu0 %v2213
    %3018 = vmatprep.subr.mxu0 0.0
    %3019 = vmatpush1.msra.mxu0 %v2216
    %3020 = vmatprep.subr.mxu0 0.0
    %3021 = vmatpush1.msra.mxu0 %v2219
    %3022 = vmatprep.subr.mxu0 0.0
    %3023 = vmatpush1.msra.mxu0 %v2222
    %3024 = vmatprep.subr.mxu0 0.0
    %3025 = vmatpush1.msra.mxu0 %v2225
    %3026 = vmatprep.subr.mxu0 0.0
    %3027 = vmatpush1.msra.mxu0 %v2228
    %3028 = vmatprep.subr.mxu0 0.0
    %3029 = vmatpush1.msra.mxu0 %v2231
    %3030 = vmatprep.subr.mxu0 0.0
    %3031 = vmatpush1.msra.mxu0 %v2234
    %3032 = vmatprep.subr.mxu0 0.0
    %3033 = vmatpush1.msra.mxu0 %v2237
    %3034 = vmatprep.subr.mxu0 0.0
    %3035 = vmatpush1.msra.mxu0 %v2240
    %3036 = vmatprep.subr.mxu0 0.0
    %3037 = vmatpush1.msra.mxu0 %v2243
    %3038 = vmatprep.subr.mxu0 0.0
    %3039 = vmatpush1.msra.mxu0 0.0
    %3040 = vmatprep.subr.mxu0 0.0
    %3041 = vmatpush1.msra.mxu0 0.0
    %3042 = vmatprep.subr.mxu0 0.0
    %3043 = vmatpush1.msra.mxu0 0.0
    %3044 = vmatprep.subr.mxu0 0.0
    %3045 = vmatpush1.msra.mxu0 0.0
    %3046 = vmatprep.subr.mxu0 0.0
    %3047 = vmatpush1.msra.mxu0 0.0
    %3048 = vmatprep.subr.mxu0 0.0
    %3049 = vmatpush1.msra.mxu0 0.0
    %3050 = vmatprep.subr.mxu0 0.0
    %3051 = vmatpush1.msra.mxu0 0.0
    %3052 = vmatprep.subr.mxu0 0.0
    %3053 = vmatpush1.msra.mxu0 0.0
    %3054 = vmatprep.subr.mxu0 0.0
    %3055 = vmatpush1.msra.mxu0 0.0
    %3056 = vmatprep.subr.mxu0 0.0
    %3057 = vmatpush1.msra.mxu0 0.0
    %3058 = vmatprep.subr.mxu0 0.0
    %3059 = vmatpush1.msra.mxu0 0.0
    %3060 = vmatprep.subr.mxu0 0.0
    %3061 = vmatpush1.msra.mxu0 0.0
    %3062 = vmatprep.subr.mxu0 0.0
    %3063 = vmatpush1.msra.mxu0 0.0
    %3064 = vmatprep.subr.mxu0 0.0
    %3065 = vmatpush1.msra.mxu0 0.0
    %3066 = vmatprep.subr.mxu0 0.0
    %3067 = vmatpush1.msra.mxu0 0.0
    %3068 = vmatprep.subr.mxu0 0.0
    %3069 = vmatpush1.msra.mxu0 0.0
    %3070 = vmatprep.mubr.f32.mxu0 0.0
    %3071 = vmatmul.mubr.f32.gmra.mrb[0].mxu0 %v2926
    %v3072 = vpop.f32.mrb[0].mxu0
    %v3073 = vadd.f32 %v2502, %v3072
    %v3074 = vpop.f32.mrb[0].mxu0
    %3075 = vmatprep.mubr.f32.mxu0 0.0
    %3076 = vmatmul.mubr.f32.gmra.mrb[0].mxu0 %v2925
    %v3077 = vpop.f32.mrb[0].mxu0
    %v3078 = vadd.f32 %v2502, %v3077
    %v3079 = vpop.f32.mrb[0].mxu0
    %3080 = vdwg.mxu0
    %v3083 = vrot.slane %v2996, 4
    %v3084 = vrot.slane %v3002, 4
    %v3085 = vsel %vm1175, %v3083, %v3084
    %v3088 = vadd.f32 %v2362, %v3083
    %v3089 = vadd.f32 %v2368, %v3085
    %v3090 = vxor.u32 %v3088, 2147483648
    %v3091 = vxor.u32 %v3089, 2147483648
    %v3092 = vmul.f32 %v3090, 1.442695
    %v3093 = vpow.pop %v3092
    %v3094 = vmul.f32 %v3091, 1.442695
    %v3095 = vpow.pop %v3094
    %v3096 = vadd.f32 %v3093, 1.0
    %v3097 = vadd.f32 %v3095, 1.0
    %v3098 = vrcp.pop %v3096
    %v3099 = vmul.f32 1.0, %v3098
    %v3100 = vrcp.pop %v3097
    %v3101 = vmul.f32 1.0, %v3100
    %v3104 = vrot.slane %v2998, 4
    %v3105 = vrot.slane %v3004, 4
    %v3106 = vsel %vm1175, %v3104, %v3105
    %v3109 = vadd.f32 %v2364, %v3104
    %v3110 = vadd.f32 %v2370, %v3106
    %v3111 = vxor.u32 %v3109, 2147483648
    %v3112 = vxor.u32 %v3110, 2147483648
    %v3113 = vmul.f32 %v3111, 1.442695
    %v3114 = vpow.pop %v3113
    %v3115 = vmul.f32 %v3112, 1.442695
    %v3116 = vpow.pop %v3115
    %v3117 = vadd.f32 %v3114, 1.0
    %v3118 = vadd.f32 %v3116, 1.0
    %v3119 = vrcp.pop %v3117
    %v3120 = vmul.f32 1.0, %v3119
    %v3121 = vrcp.pop %v3118
    %v3122 = vmul.f32 1.0, %v3121
    %v3125 = vrot.slane %v3073, 4
    %v3126 = vrot.slane %v3078, 4
    %v3127 = vsel %vm1175, %v3125, %v3126
    %v3130 = vmul.f32 %v3099, %v3125
    %v3131 = vmul.f32 %v3101, %v3127
    %v3132 = vadd.f32 %v2467, %v3130
    %v3133 = vadd.f32 %v2472, %v3131
    %v3134 = vtanh.pop %v3132
    %v3135 = vtanh.pop %v3133
    %v3136 = vsub.f32 1.0, %v3120
    %v3137 = vsub.f32 1.0, %v3122
    %v3138 = vmul.f32 %v3136, %v3134
    %v3139 = vmul.f32 %v3137, %v3135
    %v3140 = vrot.slane %v2920, 6
    %v3141 = vrot.slane %v2921, 6
    %v3142 = vsel %vm970, %v3140, %v3141
    %v3145 = vmul.f32 %v3120, %v3140
    %v3146 = vmul.f32 %v3122, %v3142
    %v3147 = vadd.f32 %v3138, %v3145
    %v3148 = vadd.f32 %v3139, %v3146
    %v3151 = vrot.slane %v3147, 4
    %v3152 = vrot.slane %v3148, 4
    %v3153 = vsel %vm1175, %v3151, %v3152
    %3156 = vmatprep.subr.mxu0 %v2197
    %3157 = vmatpush1.msra.mxu0 %v2196
    %3158 = vmatprep.subr.mxu0 %v2200
    %3159 = vmatpush1.msra.mxu0 %v2199
    %3160 = vmatprep.subr.mxu0 %v2203
    %3161 = vmatpush1.msra.mxu0 %v2202
    %3162 = vmatprep.subr.mxu0 %v2206
    %3163 = vmatpush1.msra.mxu0 %v2205
    %3164 = vmatprep.subr.mxu0 %v2209
    %3165 = vmatpush1.msra.mxu0 %v2208
    %3166 = vmatprep.subr.mxu0 %v2212
    %3167 = vmatpush1.msra.mxu0 %v2211
    %3168 = vmatprep.subr.mxu0 %v2215
    %3169 = vmatpush1.msra.mxu0 %v2214
    %3170 = vmatprep.subr.mxu0 %v2218
    %3171 = vmatpush1.msra.mxu0 %v2217
    %3172 = vmatprep.subr.mxu0 %v2221
    %3173 = vmatpush1.msra.mxu0 %v2220
    %3174 = vmatprep.subr.mxu0 %v2224
    %3175 = vmatpush1.msra.mxu0 %v2223
    %3176 = vmatprep.subr.mxu0 %v2227
    %3177 = vmatpush1.msra.mxu0 %v2226
    %3178 = vmatprep.subr.mxu0 %v2230
    %3179 = vmatpush1.msra.mxu0 %v2229
    %3180 = vmatprep.subr.mxu0 %v2233
    %3181 = vmatpush1.msra.mxu0 %v2232
    %3182 = vmatprep.subr.mxu0 %v2236
    %3183 = vmatpush1.msra.mxu0 %v2235
    %3184 = vmatprep.subr.mxu0 %v2239
    %3185 = vmatpush1.msra.mxu0 %v2238
    %3186 = vmatprep.subr.mxu0 %v2242
    %3187 = vmatpush1.msra.mxu0 %v2241
    %3188 = vmatprep.subr.mxu0 0.0
    %3189 = vmatpush1.msra.mxu0 0.0
    %3190 = vmatprep.subr.mxu0 0.0
    %3191 = vmatpush1.msra.mxu0 0.0
    %3192 = vmatprep.subr.mxu0 0.0
    %3193 = vmatpush1.msra.mxu0 0.0
    %3194 = vmatprep.subr.mxu0 0.0
    %3195 = vmatpush1.msra.mxu0 0.0
    %3196 = vmatprep.subr.mxu0 0.0
    %3197 = vmatpush1.msra.mxu0 0.0
    %3198 = vmatprep.subr.mxu0 0.0
    %3199 = vmatpush1.msra.mxu0 0.0
    %3200 = vmatprep.subr.mxu0 0.0
    %3201 = vmatpush1.msra.mxu0 0.0
    %3202 = vmatprep.subr.mxu0 0.0
    %3203 = vmatpush1.msra.mxu0 0.0
    %3204 = vmatprep.subr.mxu0 0.0
    %3205 = vmatpush1.msra.mxu0 0.0
    %3206 = vmatprep.subr.mxu0 0.0
    %3207 = vmatpush1.msra.mxu0 0.0
    %3208 = vmatprep.subr.mxu0 0.0
    %3209 = vmatpush1.msra.mxu0 0.0
    %3210 = vmatprep.subr.mxu0 0.0
    %3211 = vmatpush1.msra.mxu0 0.0
    %3212 = vmatprep.subr.mxu0 0.0
    %3213 = vmatpush1.msra.mxu0 0.0
    %3214 = vmatprep.subr.mxu0 0.0
    %3215 = vmatpush1.msra.mxu0 0.0
    %3216 = vmatprep.subr.mxu0 0.0
    %3217 = vmatpush1.msra.mxu0 0.0
    %3218 = vmatprep.subr.mxu0 0.0
    %3219 = vmatpush1.msra.mxu0 0.0
    %3220 = vmatprep.mubr.f32.mxu0 0.0
    %3221 = vmatmul.mubr.f32.gmra.mrb[0].mxu0 %v3153
    %v3222 = vpop.f32.mrb[0].mxu0
    %v3223 = vadd.f32 %v2494, %v3222
    %v3224 = vpop.f32.mrb[0].mxu0
    %v3225 = vadd.f32 %v2498, %v3224
    %3226 = vmatprep.mubr.f32.mxu0 0.0
    %3227 = vmatmul.mubr.f32.gmra.mrb[0].mxu0 %v3152
    %v3228 = vpop.f32.mrb[0].mxu0
    %v3229 = vadd.f32 %v2494, %v3228
    %v3230 = vpop.f32.mrb[0].mxu0
    %v3231 = vadd.f32 %v2498, %v3230
    %3232 = vdwg.mxu0
    %3233 = vmatprep.subr.mxu0 0.0
    %3234 = vmatpush1.msra.mxu0 %v2198
    %3235 = vmatprep.subr.mxu0 0.0
    %3236 = vmatpush1.msra.mxu0 %v2201
    %3237 = vmatprep.subr.mxu0 0.0
    %3238 = vmatpush1.msra.mxu0 %v2204
    %3239 = vmatprep.subr.mxu0 0.0
    %3240 = vmatpush1.msra.mxu0 %v2207
    %3241 = vmatprep.subr.mxu0 0.0
    %3242 = vmatpush1.msra.mxu0 %v2210
    %3243 = vmatprep.subr.mxu0 0.0
    %3244 = vmatpush1.msra.mxu0 %v2213
    %3245 = vmatprep.subr.mxu0 0.0
    %3246 = vmatpush1.msra.mxu0 %v2216
    %3247 = vmatprep.subr.mxu0 0.0
    %3248 = vmatpush1.msra.mxu0 %v2219
    %3249 = vmatprep.subr.mxu0 0.0
    %3250 = vmatpush1.msra.mxu0 %v2222
    %3251 = vmatprep.subr.mxu0 0.0
    %3252 = vmatpush1.msra.mxu0 %v2225
    %3253 = vmatprep.subr.mxu0 0.0
    %3254 = vmatpush1.msra.mxu0 %v2228
    %3255 = vmatprep.subr.mxu0 0.0
    %3256 = vmatpush1.msra.mxu0 %v2231
    %3257 = vmatprep.subr.mxu0 0.0
    %3258 = vmatpush1.msra.mxu0 %v2234
    %3259 = vmatprep.subr.mxu0 0.0
    %3260 = vmatpush1.msra.mxu0 %v2237
    %3261 = vmatprep.subr.mxu0 0.0
    %3262 = vmatpush1.msra.mxu0 %v2240
    %3263 = vmatprep.subr.mxu0 0.0
    %3264 = vmatpush1.msra.mxu0 %v2243
    %3265 = vmatprep.subr.mxu0 0.0
    %3266 = vmatpush1.msra.mxu0 0.0
    %3267 = vmatprep.subr.mxu0 0.0
    %3268 = vmatpush1.msra.mxu0 0.0
    %3269 = vmatprep.subr.mxu0 0.0
    %3270 = vmatpush1.msra.mxu0 0.0
    %3271 = vmatprep.subr.mxu0 0.0
    %3272 = vmatpush1.msra.mxu0 0.0
    %3273 = vmatprep.subr.mxu0 0.0
    %3274 = vmatpush1.msra.mxu0 0.0
    %3275 = vmatprep.subr.mxu0 0.0
    %3276 = vmatpush1.msra.mxu0 0.0
    %3277 = vmatprep.subr.mxu0 0.0
    %3278 = vmatpush1.msra.mxu0 0.0
    %3279 = vmatprep.subr.mxu0 0.0
    %3280 = vmatpush1.msra.mxu0 0.0
    %3281 = vmatprep.subr.mxu0 0.0
    %3282 = vmatpush1.msra.mxu0 0.0
    %3283 = vmatprep.subr.mxu0 0.0
    %3284 = vmatpush1.msra.mxu0 0.0
    %3285 = vmatprep.subr.mxu0 0.0
    %3286 = vmatpush1.msra.mxu0 0.0
    %3287 = vmatprep.subr.mxu0 0.0
    %3288 = vmatpush1.msra.mxu0 0.0
    %3289 = vmatprep.subr.mxu0 0.0
    %3290 = vmatpush1.msra.mxu0 0.0
    %3291 = vmatprep.subr.mxu0 0.0
    %3292 = vmatpush1.msra.mxu0 0.0
    %3293 = vmatprep.subr.mxu0 0.0
    %3294 = vmatpush1.msra.mxu0 0.0
    %3295 = vmatprep.subr.mxu0 0.0
    %3296 = vmatpush1.msra.mxu0 0.0
    %3297 = vmatprep.mubr.f32.mxu0 0.0
    %3298 = vmatmul.mubr.f32.gmra.mrb[0].mxu0 %v3153
    %v3299 = vpop.f32.mrb[0].mxu0
    %v3300 = vadd.f32 %v2502, %v3299
    %v3301 = vpop.f32.mrb[0].mxu0
    %3302 = vmatprep.mubr.f32.mxu0 0.0
    %3303 = vmatmul.mubr.f32.gmra.mrb[0].mxu0 %v3152
    %v3304 = vpop.f32.mrb[0].mxu0
    %v3305 = vadd.f32 %v2502, %v3304
    %v3306 = vpop.f32.mrb[0].mxu0
    %3307 = vdwg.mxu0
    %v3310 = vrot.slane %v3223, 2
    %v3311 = vrot.slane %v3229, 2
    %v3312 = vsel %vm1163, %v3310, %v3311
    %v3315 = vadd.f32 %v2368, %v3310
    %v3316 = vadd.f32 %v2374, %v3312
    %v3317 = vxor.u32 %v3315, 2147483648
    %v3318 = vxor.u32 %v3316, 2147483648
    %v3319 = vmul.f32 %v3317, 1.442695
    %v3320 = vpow.pop %v3319
    %v3321 = vmul.f32 %v3318, 1.442695
    %v3322 = vpow.pop %v3321
    %v3323 = vadd.f32 %v3320, 1.0
    %v3324 = vadd.f32 %v3322, 1.0
    %v3325 = vrcp.pop %v3323
    %v3326 = vmul.f32 1.0, %v3325
    %v3327 = vrcp.pop %v3324
    %v3328 = vmul.f32 1.0, %v3327
    %v3331 = vrot.slane %v3225, 2
    %v3332 = vrot.slane %v3231, 2
    %v3333 = vsel %vm1163, %v3331, %v3332
    %v3336 = vadd.f32 %v2370, %v3331
    %v3337 = vadd.f32 %v2376, %v3333
    %v3338 = vxor.u32 %v3336, 2147483648
    %v3339 = vxor.u32 %v3337, 2147483648
    %v3340 = vmul.f32 %v3338, 1.442695
    %v3341 = vpow.pop %v3340
    %v3342 = vmul.f32 %v3339, 1.442695
    %v3343 = vpow.pop %v3342
    %v3344 = vadd.f32 %v3341, 1.0
    %v3345 = vadd.f32 %v3343, 1.0
    %v3346 = vrcp.pop %v3344
    %v3347 = vmul.f32 1.0, %v3346
    %v3348 = vrcp.pop %v3345
    %v3349 = vmul.f32 1.0, %v3348
    %v3352 = vrot.slane %v3300, 2
    %v3353 = vrot.slane %v3305, 2
    %v3354 = vsel %vm1163, %v3352, %v3353
    %v3357 = vmul.f32 %v3326, %v3352
    %v3358 = vmul.f32 %v3328, %v3354
    %v3359 = vadd.f32 %v2472, %v3357
    %v3360 = vadd.f32 %v2477, %v3358
    %v3361 = vtanh.pop %v3359
    %v3362 = vtanh.pop %v3360
    %v3363 = vsub.f32 1.0, %v3347
    %v3364 = vsub.f32 1.0, %v3349
    %v3365 = vmul.f32 %v3363, %v3361
    %v3366 = vmul.f32 %v3364, %v3362
    %v3367 = vrot.slane %v3147, 6
    %v3368 = vrot.slane %v3148, 6
    %v3369 = vsel %vm970, %v3367, %v3368
    %v3372 = vmul.f32 %v3347, %v3367
    %v3373 = vmul.f32 %v3349, %v3369
    %v3374 = vadd.f32 %v3365, %v3372
    %v3375 = vadd.f32 %v3366, %v3373
    %v3378 = vrot.slane %v3374, 6
    %v3379 = vrot.slane %v3375, 6
    %v3380 = vsel %vm970, %v3378, %v3379
    %3383 = vmatprep.subr.mxu0 %v2197
    %3384 = vmatpush1.msra.mxu0 %v2196
    %3385 = vmatprep.subr.mxu0 %v2200
    %3386 = vmatpush1.msra.mxu0 %v2199
    %3387 = vmatprep.subr.mxu0 %v2203
    %3388 = vmatpush1.msra.mxu0 %v2202
    %3389 = vmatprep.subr.mxu0 %v2206
    %3390 = vmatpush1.msra.mxu0 %v2205
    %3391 = vmatprep.subr.mxu0 %v2209
    %3392 = vmatpush1.msra.mxu0 %v2208
    %3393 = vmatprep.subr.mxu0 %v2212
    %3394 = vmatpush1.msra.mxu0 %v2211
    %3395 = vmatprep.subr.mxu0 %v2215
    %3396 = vmatpush1.msra.mxu0 %v2214
    %3397 = vmatprep.subr.mxu0 %v2218
    %3398 = vmatpush1.msra.mxu0 %v2217
    %3399 = vmatprep.subr.mxu0 %v2221
    %3400 = vmatpush1.msra.mxu0 %v2220
    %3401 = vmatprep.subr.mxu0 %v2224
    %3402 = vmatpush1.msra.mxu0 %v2223
    %3403 = vmatprep.subr.mxu0 %v2227
    %3404 = vmatpush1.msra.mxu0 %v2226
    %3405 = vmatprep.subr.mxu0 %v2230
    %3406 = vmatpush1.msra.mxu0 %v2229
    %3407 = vmatprep.subr.mxu0 %v2233
    %3408 = vmatpush1.msra.mxu0 %v2232
    %3409 = vmatprep.subr.mxu0 %v2236
    %3410 = vmatpush1.msra.mxu0 %v2235
    %3411 = vmatprep.subr.mxu0 %v2239
    %3412 = vmatpush1.msra.mxu0 %v2238
    %3413 = vmatprep.subr.mxu0 %v2242
    %3414 = vmatpush1.msra.mxu0 %v2241
    %3415 = vmatprep.subr.mxu0 0.0
    %3416 = vmatpush1.msra.mxu0 0.0
    %3417 = vmatprep.subr.mxu0 0.0
    %3418 = vmatpush1.msra.mxu0 0.0
    %3419 = vmatprep.subr.mxu0 0.0
    %3420 = vmatpush1.msra.mxu0 0.0
    %3421 = vmatprep.subr.mxu0 0.0
    %3422 = vmatpush1.msra.mxu0 0.0
    %3423 = vmatprep.subr.mxu0 0.0
    %3424 = vmatpush1.msra.mxu0 0.0
    %3425 = vmatprep.subr.mxu0 0.0
    %3426 = vmatpush1.msra.mxu0 0.0
    %3427 = vmatprep.subr.mxu0 0.0
    %3428 = vmatpush1.msra.mxu0 0.0
    %3429 = vmatprep.subr.mxu0 0.0
    %3430 = vmatpush1.msra.mxu0 0.0
    %3431 = vmatprep.subr.mxu0 0.0
    %3432 = vmatpush1.msra.mxu0 0.0
    %3433 = vmatprep.subr.mxu0 0.0
    %3434 = vmatpush1.msra.mxu0 0.0
    %3435 = vmatprep.subr.mxu0 0.0
    %3436 = vmatpush1.msra.mxu0 0.0
    %3437 = vmatprep.subr.mxu0 0.0
    %3438 = vmatpush1.msra.mxu0 0.0
    %3439 = vmatprep.subr.mxu0 0.0
    %3440 = vmatpush1.msra.mxu0 0.0
    %3441 = vmatprep.subr.mxu0 0.0
    %3442 = vmatpush1.msra.mxu0 0.0
    %3443 = vmatprep.subr.mxu0 0.0
    %3444 = vmatpush1.msra.mxu0 0.0
    %3445 = vmatprep.subr.mxu0 0.0
    %3446 = vmatpush1.msra.mxu0 0.0
    %3447 = vmatprep.mubr.f32.mxu0 0.0
    %3448 = vmatmul.mubr.f32.gmra.mrb[0].mxu0 %v3380
    %v3449 = vpop.f32.mrb[0].mxu0
    %v3450 = vadd.f32 %v2494, %v3449
    %v3451 = vpop.f32.mrb[0].mxu0
    %v3452 = vadd.f32 %v2498, %v3451
    %3453 = vmatprep.mubr.f32.mxu0 0.0
    %3454 = vmatmul.mubr.f32.gmra.mrb[0].mxu0 %v3379
    %v3455 = vpop.f32.mrb[0].mxu0
    %v3456 = vadd.f32 %v2494, %v3455
    %v3457 = vpop.f32.mrb[0].mxu0
    %v3458 = vadd.f32 %v2498, %v3457
    %3459 = vdwg.mxu0
    %3460 = vmatprep.subr.mxu0 0.0
    %3461 = vmatpush1.msra.mxu0 %v2198
    %3462 = vmatprep.subr.mxu0 0.0
    %3463 = vmatpush1.msra.mxu0 %v2201
    %3464 = vmatprep.subr.mxu0 0.0
    %3465 = vmatpush1.msra.mxu0 %v2204
    %3466 = vmatprep.subr.mxu0 0.0
    %3467 = vmatpush1.msra.mxu0 %v2207
    %3468 = vmatprep.subr.mxu0 0.0
    %3469 = vmatpush1.msra.mxu0 %v2210
    %3470 = vmatprep.subr.mxu0 0.0
    %3471 = vmatpush1.msra.mxu0 %v2213
    %3472 = vmatprep.subr.mxu0 0.0
    %3473 = vmatpush1.msra.mxu0 %v2216
    %3474 = vmatprep.subr.mxu0 0.0
    %3475 = vmatpush1.msra.mxu0 %v2219
    %3476 = vmatprep.subr.mxu0 0.0
    %3477 = vmatpush1.msra.mxu0 %v2222
    %3478 = vmatprep.subr.mxu0 0.0
    %3479 = vmatpush1.msra.mxu0 %v2225
    %3480 = vmatprep.subr.mxu0 0.0
    %3481 = vmatpush1.msra.mxu0 %v2228
    %3482 = vmatprep.subr.mxu0 0.0
    %3483 = vmatpush1.msra.mxu0 %v2231
    %3484 = vmatprep.subr.mxu0 0.0
    %3485 = vmatpush1.msra.mxu0 %v2234
    %3486 = vmatprep.subr.mxu0 0.0
    %3487 = vmatpush1.msra.mxu0 %v2237
    %3488 = vmatprep.subr.mxu0 0.0
    %3489 = vmatpush1.msra.mxu0 %v2240
    %3490 = vmatprep.subr.mxu0 0.0
    %3491 = vmatpush1.msra.mxu0 %v2243
    %3492 = vmatprep.subr.mxu0 0.0
    %3493 = vmatpush1.msra.mxu0 0.0
    %3494 = vmatprep.subr.mxu0 0.0
    %3495 = vmatpush1.msra.mxu0 0.0
    %3496 = vmatprep.subr.mxu0 0.0
    %3497 = vmatpush1.msra.mxu0 0.0
    %3498 = vmatprep.subr.mxu0 0.0
    %3499 = vmatpush1.msra.mxu0 0.0
    %3500 = vmatprep.subr.mxu0 0.0
    %3501 = vmatpush1.msra.mxu0 0.0
    %3502 = vmatprep.subr.mxu0 0.0
    %3503 = vmatpush1.msra.mxu0 0.0
    %3504 = vmatprep.subr.mxu0 0.0
    %3505 = vmatpush1.msra.mxu0 0.0
    %3506 = vmatprep.subr.mxu0 0.0
    %3507 = vmatpush1.msra.mxu0 0.0
    %3508 = vmatprep.subr.mxu0 0.0
    %3509 = vmatpush1.msra.mxu0 0.0
    %3510 = vmatprep.subr.mxu0 0.0
    %3511 = vmatpush1.msra.mxu0 0.0
    %3512 = vmatprep.subr.mxu0 0.0
    %3513 = vmatpush1.msra.mxu0 0.0
    %3514 = vmatprep.subr.mxu0 0.0
    %3515 = vmatpush1.msra.mxu0 0.0
    %3516 = vmatprep.subr.mxu0 0.0
    %3517 = vmatpush1.msra.mxu0 0.0
    %3518 = vmatprep.subr.mxu0 0.0
    %3519 = vmatpush1.msra.mxu0 0.0
    %3520 = vmatprep.subr.mxu0 0.0
    %3521 = vmatpush1.msra.mxu0 0.0
    %3522 = vmatprep.subr.mxu0 0.0
    %3523 = vmatpush1.msra.mxu0 0.0
    %3524 = vmatprep.mubr.f32.mxu0 0.0
    %3525 = vmatmul.mubr.f32.gmra.mrb[0].mxu0 %v3380
    %v3526 = vpop.f32.mrb[0].mxu0
    %v3527 = vadd.f32 %v2502, %v3526
    %v3528 = vpop.f32.mrb[0].mxu0
    %3529 = vmatprep.mubr.f32.mxu0 0.0
    %3530 = vmatmul.mubr.f32.gmra.mrb[0].mxu0 %v3379
    %v3531 = vpop.f32.mrb[0].mxu0
    %v3532 = vadd.f32 %v2502, %v3531
    %v3533 = vpop.f32.mrb[0].mxu0
    %3534 = vdwg.mxu0
    %v3535 = vadd.f32 %v2380, %v3450
    %v3536 = vadd.f32 %v2386, %v3456
    %v3537 = vxor.u32 %v3535, 2147483648
    %v3538 = vxor.u32 %v3536, 2147483648
    %v3539 = vmul.f32 %v3537, 1.442695
    %v3540 = vpow.pop %v3539
    %v3541 = vmul.f32 %v3538, 1.442695
    %v3542 = vpow.pop %v3541
    %v3543 = vadd.f32 %v3540, 1.0
    %v3544 = vadd.f32 %v3542, 1.0
    %v3545 = vrcp.pop %v3543
    %v3546 = vmul.f32 1.0, %v3545
    %v3547 = vrcp.pop %v3544
    %v3548 = vmul.f32 1.0, %v3547
    %v3549 = vadd.f32 %v2382, %v3452
    %v3550 = vadd.f32 %v2388, %v3458
    %v3551 = vxor.u32 %v3549, 2147483648
    %v3552 = vxor.u32 %v3550, 2147483648
    %v3553 = vmul.f32 %v3551, 1.442695
    %v3554 = vpow.pop %v3553
    %v3555 = vmul.f32 %v3552, 1.442695
    %v3556 = vpow.pop %v3555
    %v3557 = vadd.f32 %v3554, 1.0
    %v3558 = vadd.f32 %v3556, 1.0
    %v3559 = vrcp.pop %v3557
    %v3560 = vmul.f32 1.0, %v3559
    %v3561 = vrcp.pop %v3558
    %v3562 = vmul.f32 1.0, %v3561
    %v3563 = vmul.f32 %v3546, %v3527
    %v3564 = vmul.f32 %v3548, %v3532
    %v3565 = vadd.f32 %v2482, %v3563
    %v3566 = vadd.f32 %v2487, %v3564
    %v3567 = vtanh.pop %v3565
    %v3568 = vtanh.pop %v3566
    %v3569 = vsub.f32 1.0, %v3560
    %v3570 = vsub.f32 1.0, %v3562
    %v3571 = vmul.f32 %v3569, %v3567
    %v3572 = vmul.f32 %v3570, %v3568
    %v3573 = vmul.f32 %v3560, %v3380
    %v3574 = vmul.f32 %v3562, %v3379
    %v3575 = vadd.f32 %v3571, %v3573
    %v3576 = vadd.f32 %v3572, %v3574
    %v3577 = vld [vmem:[%s11] sm:$0xff]
    %v3578 = vld [vmem:[%s11 + $0x8] sm:$0x3]
    %v3579 = vld [vmem:[#allocation13] sm:$0xff]
    %v3580 = vld [vmem:[#allocation13 + $0x8] sm:$0xff]
    %v3581 = vld [vmem:[#allocation15] sm:$0x1]
    %v3583 = vlaneseq
    %v3584 = vshrl.u32 %v3583, 7
    %v3585 = vsub.s32 0, %v3584
    %v3586 = vrot.slane %v3581, %v3585
    %v3589 = vsel %vm408, %v3577, 0
    %v3592 = vsel %vm408, %v3578, 0
    %3594 = vmatprep.subr.mxu0 0.0
    %3595 = vmatpush1.msra.mxu0 %v3579
    %3596 = vmatprep.subr.mxu0 0.0
    %3597 = vmatpush1.msra.mxu0 %v3580
    %3598 = vmatprep.subr.mxu0 0.0
    %3599 = vmatpush1.msra.mxu0 0.0
    %3600 = vmatprep.subr.mxu0 0.0
    %3601 = vmatpush1.msra.mxu0 0.0
    %3602 = vmatprep.subr.mxu0 0.0
    %3603 = vmatpush1.msra.mxu0 0.0
    %3604 = vmatprep.subr.mxu0 0.0
    %3605 = vmatpush1.msra.mxu0 0.0
    %3606 = vmatprep.subr.mxu0 0.0
    %3607 = vmatpush1.msra.mxu0 0.0
    %3608 = vmatprep.subr.mxu0 0.0
    %3609 = vmatpush1.msra.mxu0 0.0
    %3610 = vmatprep.subr.mxu0 0.0
    %3611 = vmatpush1.msra.mxu0 0.0
    %3612 = vmatprep.subr.mxu0 0.0
    %3613 = vmatpush1.msra.mxu0 0.0
    %3614 = vmatprep.subr.mxu0 0.0
    %3615 = vmatpush1.msra.mxu0 0.0
    %3616 = vmatprep.subr.mxu0 0.0
    %3617 = vmatpush1.msra.mxu0 0.0
    %3618 = vmatprep.subr.mxu0 0.0
    %3619 = vmatpush1.msra.mxu0 0.0
    %3620 = vmatprep.subr.mxu0 0.0
    %3621 = vmatpush1.msra.mxu0 0.0
    %3622 = vmatprep.subr.mxu0 0.0
    %3623 = vmatpush1.msra.mxu0 0.0
    %3624 = vmatprep.subr.mxu0 0.0
    %3625 = vmatpush1.msra.mxu0 0.0
    %3626 = vmatprep.subr.mxu0 0.0
    %3627 = vmatpush1.msra.mxu0 0.0
    %3628 = vmatprep.subr.mxu0 0.0
    %3629 = vmatpush1.msra.mxu0 0.0
    %3630 = vmatprep.subr.mxu0 0.0
    %3631 = vmatpush1.msra.mxu0 0.0
    %3632 = vmatprep.subr.mxu0 0.0
    %3633 = vmatpush1.msra.mxu0 0.0
    %3634 = vmatprep.subr.mxu0 0.0
    %3635 = vmatpush1.msra.mxu0 0.0
    %3636 = vmatprep.subr.mxu0 0.0
    %3637 = vmatpush1.msra.mxu0 0.0
    %3638 = vmatprep.subr.mxu0 0.0
    %3639 = vmatpush1.msra.mxu0 0.0
    %3640 = vmatprep.subr.mxu0 0.0
    %3641 = vmatpush1.msra.mxu0 0.0
    %3642 = vmatprep.subr.mxu0 0.0
    %3643 = vmatpush1.msra.mxu0 0.0
    %3644 = vmatprep.subr.mxu0 0.0
    %3645 = vmatpush1.msra.mxu0 0.0
    %3646 = vmatprep.subr.mxu0 0.0
    %3647 = vmatpush1.msra.mxu0 0.0
    %3648 = vmatprep.subr.mxu0 0.0
    %3649 = vmatpush1.msra.mxu0 0.0
    %3650 = vmatprep.subr.mxu0 0.0
    %3651 = vmatpush1.msra.mxu0 0.0
    %3652 = vmatprep.subr.mxu0 0.0
    %3653 = vmatpush1.msra.mxu0 0.0
    %3654 = vmatprep.subr.mxu0 0.0
    %3655 = vmatpush1.msra.mxu0 0.0
    %3656 = vmatprep.subr.mxu0 0.0
    %3657 = vmatpush1.msra.mxu0 0.0
    %3658 = vmatprep.mubr.f32.mxu0 0.0
    %3659 = vmatmul.mubr.f32.gmra.mrb[0].mxu0 %v3589
    %v3660 = vpop.f32.mrb[0].mxu0
    %v3661 = vadd.f32 %v3586, %v3660
    %v3662 = vpop.f32.mrb[0].mxu0
    %3663 = vmatprep.mubr.f32.mxu0 0.0
    %3664 = vmatmul.mubr.f32.gmra.mrb[0].mxu0 %v3592
    %v3665 = vpop.f32.mrb[0].mxu0
    %v3666 = vadd.f32 %v3586, %v3665
    %v3667 = vpop.f32.mrb[0].mxu0
    %3668 = vdwg.mxu0
    %v3669 = vxor.u32 %v3661, 2147483648
    %v3670 = vxor.u32 %v3666, 2147483648
    %v3671 = vmul.f32 %v3669, 1.442695
    %v3672 = vpow.pop %v3671
    %v3673 = vmul.f32 %v3670, 1.442695
    %v3674 = vpow.pop %v3673
    %v3675 = vadd.f32 %v3672, 1.0
    %v3676 = vadd.f32 %v3674, 1.0
    %v3677 = vrcp.pop %v3675
    %v3678 = vmul.f32 1.0, %v3677
    %v3679 = vrcp.pop %v3676
    %v3680 = vmul.f32 1.0, %v3679
    %v3681 = vtanh.pop %v3661
    %v3682 = vtanh.pop %v3666
    %3685 = vrot.lane.b32.xlu0 %v3681, 80
    %v3686 = vpop.permute.xlu0 %3685
    %3687 = vrot.lane.b32.xlu0 %v3682, 80
    %v3688 = vpop.permute.xlu0 %3687
    %v3691 = vmul.f32 %v3678, %v3686
    %v3692 = vmul.f32 %v3680, %v3688
    %v3693 = vtanh.pop %v3691
    %v3694 = vtanh.pop %v3692
    %3697 = vrot.lane.b32.xlu0 %v3693, 24
    %v3698 = vpop.permute.xlu0 %3697
    %3699 = vrot.lane.b32.xlu0 %v3694, 24
    %v3700 = vpop.permute.xlu0 %3699
    %v3703 = vmul.f32 %v3678, %v3698
    %v3704 = vmul.f32 %v3680, %v3700
    %v3705 = vld [vmem:[%s9] sm:$0xff]
    %v3706 = vld [vmem:[%s9 + $0x8] sm:$0x3]
    %3709 = vrot.lane.b32.xlu0 %v3703, 116
    %v3710 = vpop.permute.xlu0 %3709
    %3711 = vrot.lane.b32.xlu0 %v3704, 116
    %v3712 = vpop.permute.xlu0 %3711
    %3717 = vrot.lane.b32.xlu0 %v3575, 36
    %v3718 = vpop.permute.xlu0 %3717
    %3719 = vrot.lane.b32.xlu0 %v3576, 36
    %v3720 = vpop.permute.xlu0 %3719
    %vm3723 = vcmask 97280
    %v3724 = vsel %vm3723, %v3705, %v3710
    %v3725 = vsel %vm3723, %v3706, %v3712
    %vm3726 = vcmask 293888
    %v3727 = vsel %vm3726, %v3724, %v3718
    %v3728 = vsel %vm3726, %v3725, %v3720
    %v3729 = vld [vmem:[%s45] sm:$0xff]
    %v3730 = vld [vmem:[%s45 + $0x8] sm:$0xff]
    %v3731 = vld [vmem:[%s45 + $0x10] sm:$0xff]
    %v3732 = vld [vmem:[%s45 + $0x18] sm:$0xff]
    %v3733 = vld [vmem:[%s45 + $0x20] sm:$0xff]
    %v3734 = vld [vmem:[%s45 + $0x28] sm:$0xff]
    %v3735 = vld [vmem:[%s45 + $0x30] sm:$0xff]
    %v3736 = vld [vmem:[%s45 + $0x38] sm:$0xff]
    %v3737 = vld [vmem:[%s45 + $0x40] sm:$0xff]
    %v3738 = vld [vmem:[%s45 + $0x48] sm:$0xff]
    %v3739 = vld [vmem:[%s45 + $0x50] sm:$0xff]
    %v3740 = vld [vmem:[%s45 + $0x58] sm:$0xff]
    %v3741 = vld [vmem:[%s45 + $0x60] sm:$0xff]
    %v3742 = vld [vmem:[%s45 + $0x68] sm:$0xff]
    %v3743 = vld [vmem:[%s45 + $0x70] sm:$0xff]
    %v3744 = vld [vmem:[%s45 + $0x78] sm:$0xff]
    %v3745 = vld [vmem:[%s45 + $0x80] sm:$0xff]
    %v3746 = vld [vmem:[%s45 + $0x88] sm:$0xff]
    %v3747 = vld [vmem:[%s45 + $0x90] sm:$0xff]
    %v3748 = vld [vmem:[%s45 + $0x98] sm:$0xff]
    %v3749 = vld [vmem:[%s45 + $0xa0] sm:$0xf]
    %v3750 = vld [vmem:[#allocation18] sm:$0x1]
    %v3752 = vlaneseq
    %v3753 = vshrl.u32 %v3752, 7
    %v3754 = vsub.s32 0, %v3753
    %v3755 = vrot.slane %v3750, %v3754
    %v3757 = vsel %vm3726, %v3718, 0
    %v3759 = vsel %vm3726, %v3720, 0
    %v3762 = vsel %vm1175, %v3749, 0
    %3764 = vmatprep.subr.mxu0 0.0
    %3765 = vmatpush1.msra.mxu0 %v3729
    %3766 = vmatprep.subr.mxu0 0.0
    %3767 = vmatpush1.msra.mxu0 %v3730
    %3768 = vmatprep.subr.mxu0 0.0
    %3769 = vmatpush1.msra.mxu0 %v3731
    %3770 = vmatprep.subr.mxu0 0.0
    %3771 = vmatpush1.msra.mxu0 %v3732
    %3772 = vmatprep.subr.mxu0 0.0
    %3773 = vmatpush1.msra.mxu0 %v3733
    %3774 = vmatprep.subr.mxu0 0.0
    %3775 = vmatpush1.msra.mxu0 %v3734
    %3776 = vmatprep.subr.mxu0 0.0
    %3777 = vmatpush1.msra.mxu0 %v3735
    %3778 = vmatprep.subr.mxu0 0.0
    %3779 = vmatpush1.msra.mxu0 %v3736
    %3780 = vmatprep.subr.mxu0 0.0
    %3781 = vmatpush1.msra.mxu0 %v3737
    %3782 = vmatprep.subr.mxu0 0.0
    %3783 = vmatpush1.msra.mxu0 %v3738
    %3784 = vmatprep.subr.mxu0 0.0
    %3785 = vmatpush1.msra.mxu0 %v3739
    %3786 = vmatprep.subr.mxu0 0.0
    %3787 = vmatpush1.msra.mxu0 %v3740
    %3788 = vmatprep.subr.mxu0 0.0
    %3789 = vmatpush1.msra.mxu0 %v3741
    %3790 = vmatprep.subr.mxu0 0.0
    %3791 = vmatpush1.msra.mxu0 %v3742
    %3792 = vmatprep.subr.mxu0 0.0
    %3793 = vmatpush1.msra.mxu0 %v3743
    %3794 = vmatprep.subr.mxu0 0.0
    %3795 = vmatpush1.msra.mxu0 %v3744
    %3796 = vmatprep.subr.mxu0 0.0
    %3797 = vmatpush1.msra.mxu0 %v3745
    %3798 = vmatprep.subr.mxu0 0.0
    %3799 = vmatpush1.msra.mxu0 %v3746
    %3800 = vmatprep.subr.mxu0 0.0
    %3801 = vmatpush1.msra.mxu0 %v3747
    %3802 = vmatprep.subr.mxu0 0.0
    %3803 = vmatpush1.msra.mxu0 %v3748
    %3804 = vmatprep.subr.mxu0 0.0
    %3805 = vmatpush1.msra.mxu0 %v3762
    %3806 = vmatprep.subr.mxu0 0.0
    %3807 = vmatpush1.msra.mxu0 0.0
    %3808 = vmatprep.subr.mxu0 0.0
    %3809 = vmatpush1.msra.mxu0 0.0
    %3810 = vmatprep.subr.mxu0 0.0
    %3811 = vmatpush1.msra.mxu0 0.0
    %3812 = vmatprep.subr.mxu0 0.0
    %3813 = vmatpush1.msra.mxu0 0.0
    %3814 = vmatprep.subr.mxu0 0.0
    %3815 = vmatpush1.msra.mxu0 0.0
    %3816 = vmatprep.subr.mxu0 0.0
    %3817 = vmatpush1.msra.mxu0 0.0
    %3818 = vmatprep.subr.mxu0 0.0
    %3819 = vmatpush1.msra.mxu0 0.0
    %3820 = vmatprep.subr.mxu0 0.0
    %3821 = vmatpush1.msra.mxu0 0.0
    %3822 = vmatprep.subr.mxu0 0.0
    %3823 = vmatpush1.msra.mxu0 0.0
    %3824 = vmatprep.subr.mxu0 0.0
    %3825 = vmatpush1.msra.mxu0 0.0
    %3826 = vmatprep.subr.mxu0 0.0
    %3827 = vmatpush1.msra.mxu0 0.0
    %3828 = vmatprep.mubr.f32.mxu0 %v3757
    %3829 = vmatmul.mubr.f32.gmra.mrb[0].mxu0 %v3727
    %v3830 = vpop.f32.mrb[0].mxu0
    %v3831 = vadd.f32 %v3755, %v3830
    %v3832 = vpop.f32.mrb[0].mxu0
    %3833 = vmatprep.mubr.f32.mxu0 %v3759
    %3834 = vmatmul.mubr.f32.gmra.mrb[0].mxu0 %v3728
    %v3835 = vpop.f32.mrb[0].mxu0
    %v3836 = vadd.f32 %v3755, %v3835
    %v3837 = vpop.f32.mrb[0].mxu0
    %3838 = vdwg.mxu0
    %v3839 = vld [vmem:[%s15] sm:$0xff]
    %v3840 = vld [vmem:[%s15 + $0x8] sm:$0x3]
    %v3841 = vld [vmem:[%s61] sm:$0xff]
    %v3842 = vld [vmem:[%s61 + $0x8] sm:$0xff]
    %v3843 = vld [vmem:[%s61 + $0x10] sm:$0xff]
    %v3844 = vld [vmem:[#allocation25] sm:$0x1]
    %v3845 = vld [vmem:[#allocation21] sm:$0xff]
    %v3846 = vld [vmem:[#allocation21 + $0x8] sm:$0xff]
    %v3847 = vld [vmem:[#allocation21 + $0x10] sm:$0xff]
    %v3849 = vsel %vm1662, %v3831, 0
    %v3852 = vsel %vm1662, %v3836, 0
    %3854 = vmatprep.subr.mxu0 0.0
    %3855 = vmatpush1.msra.mxu0 %v3845
    %3856 = vmatprep.subr.mxu0 0.0
    %3857 = vmatpush1.msra.mxu0 %v3846
    %3858 = vmatprep.subr.mxu0 0.0
    %3859 = vmatpush1.msra.mxu0 %v3847
    %3860 = vmatprep.subr.mxu0 0.0
    %3861 = vmatpush1.msra.mxu0 0.0
    %3862 = vmatprep.subr.mxu0 0.0
    %3863 = vmatpush1.msra.mxu0 0.0
    %3864 = vmatprep.subr.mxu0 0.0
    %3865 = vmatpush1.msra.mxu0 0.0
    %3866 = vmatprep.subr.mxu0 0.0
    %3867 = vmatpush1.msra.mxu0 0.0
    %3868 = vmatprep.subr.mxu0 0.0
    %3869 = vmatpush1.msra.mxu0 0.0
    %3870 = vmatprep.subr.mxu0 0.0
    %3871 = vmatpush1.msra.mxu0 0.0
    %3872 = vmatprep.subr.mxu0 0.0
    %3873 = vmatpush1.msra.mxu0 0.0
    %3874 = vmatprep.subr.mxu0 0.0
    %3875 = vmatpush1.msra.mxu0 0.0
    %3876 = vmatprep.subr.mxu0 0.0
    %3877 = vmatpush1.msra.mxu0 0.0
    %3878 = vmatprep.subr.mxu0 0.0
    %3879 = vmatpush1.msra.mxu0 0.0
    %3880 = vmatprep.subr.mxu0 0.0
    %3881 = vmatpush1.msra.mxu0 0.0
    %3882 = vmatprep.subr.mxu0 0.0
    %3883 = vmatpush1.msra.mxu0 0.0
    %3884 = vmatprep.subr.mxu0 0.0
    %3885 = vmatpush1.msra.mxu0 0.0
    %3886 = vmatprep.subr.mxu0 0.0
    %3887 = vmatpush1.msra.mxu0 0.0
    %3888 = vmatprep.subr.mxu0 0.0
    %3889 = vmatpush1.msra.mxu0 0.0
    %3890 = vmatprep.subr.mxu0 0.0
    %3891 = vmatpush1.msra.mxu0 0.0
    %3892 = vmatprep.subr.mxu0 0.0
    %3893 = vmatpush1.msra.mxu0 0.0
    %3894 = vmatprep.subr.mxu0 0.0
    %3895 = vmatpush1.msra.mxu0 0.0
    %3896 = vmatprep.subr.mxu0 0.0
    %3897 = vmatpush1.msra.mxu0 0.0
    %3898 = vmatprep.subr.mxu0 0.0
    %3899 = vmatpush1.msra.mxu0 0.0
    %3900 = vmatprep.subr.mxu0 0.0
    %3901 = vmatpush1.msra.mxu0 0.0
    %3902 = vmatprep.subr.mxu0 0.0
    %3903 = vmatpush1.msra.mxu0 0.0
    %3904 = vmatprep.subr.mxu0 0.0
    %3905 = vmatpush1.msra.mxu0 0.0
    %3906 = vmatprep.subr.mxu0 0.0
    %3907 = vmatpush1.msra.mxu0 0.0
    %3908 = vmatprep.subr.mxu0 0.0
    %3909 = vmatpush1.msra.mxu0 0.0
    %3910 = vmatprep.subr.mxu0 0.0
    %3911 = vmatpush1.msra.mxu0 0.0
    %3912 = vmatprep.subr.mxu0 0.0
    %3913 = vmatpush1.msra.mxu0 0.0
    %3914 = vmatprep.subr.mxu0 0.0
    %3915 = vmatpush1.msra.mxu0 0.0
    %3916 = vmatprep.subr.mxu0 0.0
    %3917 = vmatpush1.msra.mxu0 0.0
    %3918 = vmatprep.mubr.f32.mxu0 0.0
    %3919 = vmatmul.mubr.f32.gmra.mrb[0].mxu0 %v3849
    %v3920 = vpop.f32.mrb[0].mxu0
    %v3921 = vadd.f32 0.0, %v3920
    %v3922 = vpop.f32.mrb[0].mxu0
    %3923 = vmatprep.mubr.f32.mxu0 0.0
    %3924 = vmatmul.mubr.f32.gmra.mrb[0].mxu0 %v3852
    %v3925 = vpop.f32.mrb[0].mxu0
    %v3926 = vadd.f32 0.0, %v3925
    %v3927 = vpop.f32.mrb[0].mxu0
    %3928 = vdwg.mxu0
    %v3929 = vld [vmem:[#allocation22] sm:$0x1]
    %v3931 = vlaneseq
    %v3932 = vshrl.u32 %v3931, 7
    %v3933 = vsub.s32 0, %v3932
    %v3934 = vrot.slane %v3929, %v3933
    %vm3936 = vcmask 80896
    %v3938 = vsel %vm3936, %v3839, 0
    %v3941 = vsel %vm3936, %v3840, 0
    %v3944 = vsel %vm970, %v3926, 0
    %3946 = vmatprep.subr.mxu0 0.0
    %3947 = vmatpush1.msra.mxu0 %v3921
    %3948 = vmatprep.subr.mxu0 0.0
    %3949 = vmatpush1.msra.mxu0 %v3944
    %3950 = vmatprep.subr.mxu0 0.0
    %3951 = vmatpush1.msra.mxu0 0.0
    %3952 = vmatprep.subr.mxu0 0.0
    %3953 = vmatpush1.msra.mxu0 0.0
    %3954 = vmatprep.subr.mxu0 0.0
    %3955 = vmatpush1.msra.mxu0 0.0
    %3956 = vmatprep.subr.mxu0 0.0
    %3957 = vmatpush1.msra.mxu0 0.0
    %3958 = vmatprep.subr.mxu0 0.0
    %3959 = vmatpush1.msra.mxu0 0.0
    %3960 = vmatprep.subr.mxu0 0.0
    %3961 = vmatpush1.msra.mxu0 0.0
    %3962 = vmatprep.subr.mxu0 0.0
    %3963 = vmatpush1.msra.mxu0 0.0
    %3964 = vmatprep.subr.mxu0 0.0
    %3965 = vmatpush1.msra.mxu0 0.0
    %3966 = vmatprep.subr.mxu0 0.0
    %3967 = vmatpush1.msra.mxu0 0.0
    %3968 = vmatprep.subr.mxu0 0.0
    %3969 = vmatpush1.msra.mxu0 0.0
    %3970 = vmatprep.subr.mxu0 0.0
    %3971 = vmatpush1.msra.mxu0 0.0
    %3972 = vmatprep.subr.mxu0 0.0
    %3973 = vmatpush1.msra.mxu0 0.0
    %3974 = vmatprep.subr.mxu0 0.0
    %3975 = vmatpush1.msra.mxu0 0.0
    %3976 = vmatprep.subr.mxu0 0.0
    %3977 = vmatpush1.msra.mxu0 0.0
    %3978 = vmatprep.subr.mxu0 0.0
    %3979 = vmatpush1.msra.mxu0 0.0
    %3980 = vmatprep.subr.mxu0 0.0
    %3981 = vmatpush1.msra.mxu0 0.0
    %3982 = vmatprep.subr.mxu0 0.0
    %3983 = vmatpush1.msra.mxu0 0.0
    %3984 = vmatprep.subr.mxu0 0.0
    %3985 = vmatpush1.msra.mxu0 0.0
    %3986 = vmatprep.subr.mxu0 0.0
    %3987 = vmatpush1.msra.mxu0 0.0
    %3988 = vmatprep.subr.mxu0 0.0
    %3989 = vmatpush1.msra.mxu0 0.0
    %3990 = vmatprep.subr.mxu0 0.0
    %3991 = vmatpush1.msra.mxu0 0.0
    %3992 = vmatprep.subr.mxu0 0.0
    %3993 = vmatpush1.msra.mxu0 0.0
    %3994 = vmatprep.subr.mxu0 0.0
    %3995 = vmatpush1.msra.mxu0 0.0
    %3996 = vmatprep.subr.mxu0 0.0
    %3997 = vmatpush1.msra.mxu0 0.0
    %3998 = vmatprep.subr.mxu0 0.0
    %3999 = vmatpush1.msra.mxu0 0.0
    %4000 = vmatprep.subr.mxu0 0.0
    %4001 = vmatpush1.msra.mxu0 0.0
    %4002 = vmatprep.subr.mxu0 0.0
    %4003 = vmatpush1.msra.mxu0 0.0
    %4004 = vmatprep.subr.mxu0 0.0
    %4005 = vmatpush1.msra.mxu0 0.0
    %4006 = vmatprep.subr.mxu0 0.0
    %4007 = vmatpush1.msra.mxu0 0.0
    %4008 = vmatprep.subr.mxu0 0.0
    %4009 = vmatpush1.msra.mxu0 0.0
    %4010 = vmatprep.mubr.f32.mxu0 0.0
    %4011 = vmatmul.mubr.f32.gmra.mrb[0].mxu0 %v3938
    %v4012 = vpop.f32.mrb[0].mxu0
    %v4013 = vadd.f32 %v3934, %v4012
    %v4014 = vpop.f32.mrb[0].mxu0
    %4015 = vmatprep.mubr.f32.mxu0 0.0
    %4016 = vmatmul.mubr.f32.gmra.mrb[0].mxu0 %v3941
    %v4017 = vpop.f32.mrb[0].mxu0
    %v4018 = vadd.f32 %v3934, %v4017
    %v4019 = vpop.f32.mrb[0].mxu0
    %4020 = vdwg.mxu0
    %v4021 = vmax.f32 %v4013, 0.0
    %v4022 = vmax.f32 %v4018, 0.0
    %s4023 = scalar_lea.vmem [#allocation21], 24
    %v4024 = vld [vmem:[%s4023] sm:$0xff]
    %v4025 = vld [vmem:[%s4023 + $0x8] sm:$0xff]
    %v4026 = vld [vmem:[%s4023 + $0x10] sm:$0xff]
    %v4028 = vsel %vm1662, %v4021, 0
    %v4031 = vsel %vm1662, %v4022, 0
    %4033 = vmatprep.subr.mxu0 0.0
    %4034 = vmatpush1.msra.mxu0 %v4024
    %4035 = vmatprep.subr.mxu0 0.0
    %4036 = vmatpush1.msra.mxu0 %v4025
    %4037 = vmatprep.subr.mxu0 0.0
    %4038 = vmatpush1.msra.mxu0 %v4026
    %4039 = vmatprep.subr.mxu0 0.0
    %4040 = vmatpush1.msra.mxu0 0.0
    %4041 = vmatprep.subr.mxu0 0.0
    %4042 = vmatpush1.msra.mxu0 0.0
    %4043 = vmatprep.subr.mxu0 0.0
    %4044 = vmatpush1.msra.mxu0 0.0
    %4045 = vmatprep.subr.mxu0 0.0
    %4046 = vmatpush1.msra.mxu0 0.0
    %4047 = vmatprep.subr.mxu0 0.0
    %4048 = vmatpush1.msra.mxu0 0.0
    %4049 = vmatprep.subr.mxu0 0.0
    %4050 = vmatpush1.msra.mxu0 0.0
    %4051 = vmatprep.subr.mxu0 0.0
    %4052 = vmatpush1.msra.mxu0 0.0
    %4053 = vmatprep.subr.mxu0 0.0
    %4054 = vmatpush1.msra.mxu0 0.0
    %4055 = vmatprep.subr.mxu0 0.0
    %4056 = vmatpush1.msra.mxu0 0.0
    %4057 = vmatprep.subr.mxu0 0.0
    %4058 = vmatpush1.msra.mxu0 0.0
    %4059 = vmatprep.subr.mxu0 0.0
    %4060 = vmatpush1.msra.mxu0 0.0
    %4061 = vmatprep.subr.mxu0 0.0
    %4062 = vmatpush1.msra.mxu0 0.0
    %4063 = vmatprep.subr.mxu0 0.0
    %4064 = vmatpush1.msra.mxu0 0.0
    %4065 = vmatprep.subr.mxu0 0.0
    %4066 = vmatpush1.msra.mxu0 0.0
    %4067 = vmatprep.subr.mxu0 0.0
    %4068 = vmatpush1.msra.mxu0 0.0
    %4069 = vmatprep.subr.mxu0 0.0
    %4070 = vmatpush1.msra.mxu0 0.0
    %4071 = vmatprep.subr.mxu0 0.0
    %4072 = vmatpush1.msra.mxu0 0.0
    %4073 = vmatprep.subr.mxu0 0.0
    %4074 = vmatpush1.msra.mxu0 0.0
    %4075 = vmatprep.subr.mxu0 0.0
    %4076 = vmatpush1.msra.mxu0 0.0
    %4077 = vmatprep.subr.mxu0 0.0
    %4078 = vmatpush1.msra.mxu0 0.0
    %4079 = vmatprep.subr.mxu0 0.0
    %4080 = vmatpush1.msra.mxu0 0.0
    %4081 = vmatprep.subr.mxu0 0.0
    %4082 = vmatpush1.msra.mxu0 0.0
    %4083 = vmatprep.subr.mxu0 0.0
    %4084 = vmatpush1.msra.mxu0 0.0
    %4085 = vmatprep.subr.mxu0 0.0
    %4086 = vmatpush1.msra.mxu0 0.0
    %4087 = vmatprep.subr.mxu0 0.0
    %4088 = vmatpush1.msra.mxu0 0.0
    %4089 = vmatprep.subr.mxu0 0.0
    %4090 = vmatpush1.msra.mxu0 0.0
    %4091 = vmatprep.subr.mxu0 0.0
    %4092 = vmatpush1.msra.mxu0 0.0
    %4093 = vmatprep.subr.mxu0 0.0
    %4094 = vmatpush1.msra.mxu0 0.0
    %4095 = vmatprep.subr.mxu0 0.0
    %4096 = vmatpush1.msra.mxu0 0.0
    %4097 = vmatprep.mubr.f32.mxu0 0.0
    %4098 = vmatmul.mubr.f32.gmra.mrb[0].mxu0 %v4028
    %v4099 = vpop.f32.mrb[0].mxu0
    %v4100 = vadd.f32 0.0, %v4099
    %v4101 = vpop.f32.mrb[0].mxu0
    %4102 = vmatprep.mubr.f32.mxu0 0.0
    %4103 = vmatmul.mubr.f32.gmra.mrb[0].mxu0 %v4031
    %v4104 = vpop.f32.mrb[0].mxu0
    %v4105 = vadd.f32 0.0, %v4104
    %v4106 = vpop.f32.mrb[0].mxu0
    %4107 = vdwg.mxu0
    %s4108 = scalar_lea.vmem [#allocation22], 1
    %v4109 = vld [vmem:[%s4108] sm:$0x1]
    %v4111 = vlaneseq
    %v4112 = vshrl.u32 %v4111, 7
    %v4113 = vsub.s32 0, %v4112
    %v4114 = vrot.slane %v4109, %v4113
    %v4117 = vsel %vm970, %v4105, 0
    %4119 = vmatprep.subr.mxu0 0.0
    %4120 = vmatpush1.msra.mxu0 %v4100
    %4121 = vmatprep.subr.mxu0 0.0
    %4122 = vmatpush1.msra.mxu0 %v4117
    %4123 = vmatprep.subr.mxu0 0.0
    %4124 = vmatpush1.msra.mxu0 0.0
    %4125 = vmatprep.subr.mxu0 0.0
    %4126 = vmatpush1.msra.mxu0 0.0
    %4127 = vmatprep.subr.mxu0 0.0
    %4128 = vmatpush1.msra.mxu0 0.0
    %4129 = vmatprep.subr.mxu0 0.0
    %4130 = vmatpush1.msra.mxu0 0.0
    %4131 = vmatprep.subr.mxu0 0.0
    %4132 = vmatpush1.msra.mxu0 0.0
    %4133 = vmatprep.subr.mxu0 0.0
    %4134 = vmatpush1.msra.mxu0 0.0
    %4135 = vmatprep.subr.mxu0 0.0
    %4136 = vmatpush1.msra.mxu0 0.0
    %4137 = vmatprep.subr.mxu0 0.0
    %4138 = vmatpush1.msra.mxu0 0.0
    %4139 = vmatprep.subr.mxu0 0.0
    %4140 = vmatpush1.msra.mxu0 0.0
    %4141 = vmatprep.subr.mxu0 0.0
    %4142 = vmatpush1.msra.mxu0 0.0
    %4143 = vmatprep.subr.mxu0 0.0
    %4144 = vmatpush1.msra.mxu0 0.0
    %4145 = vmatprep.subr.mxu0 0.0
    %4146 = vmatpush1.msra.mxu0 0.0
    %4147 = vmatprep.subr.mxu0 0.0
    %4148 = vmatpush1.msra.mxu0 0.0
    %4149 = vmatprep.subr.mxu0 0.0
    %4150 = vmatpush1.msra.mxu0 0.0
    %4151 = vmatprep.subr.mxu0 0.0
    %4152 = vmatpush1.msra.mxu0 0.0
    %4153 = vmatprep.subr.mxu0 0.0
    %4154 = vmatpush1.msra.mxu0 0.0
    %4155 = vmatprep.subr.mxu0 0.0
    %4156 = vmatpush1.msra.mxu0 0.0
    %4157 = vmatprep.subr.mxu0 0.0
    %4158 = vmatpush1.msra.mxu0 0.0
    %4159 = vmatprep.subr.mxu0 0.0
    %4160 = vmatpush1.msra.mxu0 0.0
    %4161 = vmatprep.subr.mxu0 0.0
    %4162 = vmatpush1.msra.mxu0 0.0
    %4163 = vmatprep.subr.mxu0 0.0
    %4164 = vmatpush1.msra.mxu0 0.0
    %4165 = vmatprep.subr.mxu0 0.0
    %4166 = vmatpush1.msra.mxu0 0.0
    %4167 = vmatprep.subr.mxu0 0.0
    %4168 = vmatpush1.msra.mxu0 0.0
    %4169 = vmatprep.subr.mxu0 0.0
    %4170 = vmatpush1.msra.mxu0 0.0
    %4171 = vmatprep.subr.mxu0 0.0
    %4172 = vmatpush1.msra.mxu0 0.0
    %4173 = vmatprep.subr.mxu0 0.0
    %4174 = vmatpush1.msra.mxu0 0.0
    %4175 = vmatprep.subr.mxu0 0.0
    %4176 = vmatpush1.msra.mxu0 0.0
    %4177 = vmatprep.subr.mxu0 0.0
    %4178 = vmatpush1.msra.mxu0 0.0
    %4179 = vmatprep.subr.mxu0 0.0
    %4180 = vmatpush1.msra.mxu0 0.0
    %4181 = vmatprep.subr.mxu0 0.0
    %4182 = vmatpush1.msra.mxu0 0.0
    %4183 = vmatprep.mubr.f32.mxu0 0.0
    %4184 = vmatmul.mubr.f32.gmra.mrb[0].mxu0 %v3938
    %v4185 = vpop.f32.mrb[0].mxu0
    %v4186 = vadd.f32 %v4114, %v4185
    %v4187 = vpop.f32.mrb[0].mxu0
    %4188 = vmatprep.mubr.f32.mxu0 0.0
    %4189 = vmatmul.mubr.f32.gmra.mrb[0].mxu0 %v3941
    %v4190 = vpop.f32.mrb[0].mxu0
    %v4191 = vadd.f32 %v4114, %v4190
    %v4192 = vpop.f32.mrb[0].mxu0
    %4193 = vdwg.mxu0
    %v4195 = vlaneseq
    %v4196 = vshrl.u32 %v4195, 7
    %v4197 = vsub.s32 0, %v4196
    %v4198 = vrot.slane %v3844, %v4197
    %v4201 = vsel %vm1662, %v4186, 0
    %v4204 = vsel %vm1662, %v4191, 0
    %4206 = vmatprep.subr.mxu0 0.0
    %4207 = vmatpush1.msra.mxu0 %v3841
    %4208 = vmatprep.subr.mxu0 0.0
    %4209 = vmatpush1.msra.mxu0 %v3842
    %4210 = vmatprep.subr.mxu0 0.0
    %4211 = vmatpush1.msra.mxu0 %v3843
    %4212 = vmatprep.subr.mxu0 0.0
    %4213 = vmatpush1.msra.mxu0 0.0
    %4214 = vmatprep.subr.mxu0 0.0
    %4215 = vmatpush1.msra.mxu0 0.0
    %4216 = vmatprep.subr.mxu0 0.0
    %4217 = vmatpush1.msra.mxu0 0.0
    %4218 = vmatprep.subr.mxu0 0.0
    %4219 = vmatpush1.msra.mxu0 0.0
    %4220 = vmatprep.subr.mxu0 0.0
    %4221 = vmatpush1.msra.mxu0 0.0
    %4222 = vmatprep.subr.mxu0 0.0
    %4223 = vmatpush1.msra.mxu0 0.0
    %4224 = vmatprep.subr.mxu0 0.0
    %4225 = vmatpush1.msra.mxu0 0.0
    %4226 = vmatprep.subr.mxu0 0.0
    %4227 = vmatpush1.msra.mxu0 0.0
    %4228 = vmatprep.subr.mxu0 0.0
    %4229 = vmatpush1.msra.mxu0 0.0
    %4230 = vmatprep.subr.mxu0 0.0
    %4231 = vmatpush1.msra.mxu0 0.0
    %4232 = vmatprep.subr.mxu0 0.0
    %4233 = vmatpush1.msra.mxu0 0.0
    %4234 = vmatprep.subr.mxu0 0.0
    %4235 = vmatpush1.msra.mxu0 0.0
    %4236 = vmatprep.subr.mxu0 0.0
    %4237 = vmatpush1.msra.mxu0 0.0
    %4238 = vmatprep.subr.mxu0 0.0
    %4239 = vmatpush1.msra.mxu0 0.0
    %4240 = vmatprep.subr.mxu0 0.0
    %4241 = vmatpush1.msra.mxu0 0.0
    %4242 = vmatprep.subr.mxu0 0.0
    %4243 = vmatpush1.msra.mxu0 0.0
    %4244 = vmatprep.subr.mxu0 0.0
    %4245 = vmatpush1.msra.mxu0 0.0
    %4246 = vmatprep.subr.mxu0 0.0
    %4247 = vmatpush1.msra.mxu0 0.0
    %4248 = vmatprep.subr.mxu0 0.0
    %4249 = vmatpush1.msra.mxu0 0.0
    %4250 = vmatprep.subr.mxu0 0.0
    %4251 = vmatpush1.msra.mxu0 0.0
    %4252 = vmatprep.subr.mxu0 0.0
    %4253 = vmatpush1.msra.mxu0 0.0
    %4254 = vmatprep.subr.mxu0 0.0
    %4255 = vmatpush1.msra.mxu0 0.0
    %4256 = vmatprep.subr.mxu0 0.0
    %4257 = vmatpush1.msra.mxu0 0.0
    %4258 = vmatprep.subr.mxu0 0.0
    %4259 = vmatpush1.msra.mxu0 0.0
    %4260 = vmatprep.subr.mxu0 0.0
    %4261 = vmatpush1.msra.mxu0 0.0
    %4262 = vmatprep.subr.mxu0 0.0
    %4263 = vmatpush1.msra.mxu0 0.0
    %4264 = vmatprep.subr.mxu0 0.0
    %4265 = vmatpush1.msra.mxu0 0.0
    %4266 = vmatprep.subr.mxu0 0.0
    %4267 = vmatpush1.msra.mxu0 0.0
    %4268 = vmatprep.subr.mxu0 0.0
    %4269 = vmatpush1.msra.mxu0 0.0
    %4270 = vmatprep.mubr.f32.mxu0 0.0
    %4271 = vmatmul.mubr.f32.gmra.mrb[0].mxu0 %v4201
    %v4272 = vpop.f32.mrb[0].mxu0
    %v4273 = vadd.f32 %v4198, %v4272
    %v4274 = vpop.f32.mrb[0].mxu0
    %4275 = vmatprep.mubr.f32.mxu0 0.0
    %4276 = vmatmul.mubr.f32.gmra.mrb[0].mxu0 %v4204
    %v4277 = vpop.f32.mrb[0].mxu0
    %v4278 = vadd.f32 %v4198, %v4277
    %v4279 = vpop.f32.mrb[0].mxu0
    %4280 = vdwg.mxu0
    %vm4281 = vcmask 15360
    %v4282 = vsel %vm4281, %v4273, -inf
    %4283 = vmax.xlane.f32.xlu0 %v4282
    %v4284 = vpop.xlane.xlu0 %4283
    %vm4285 = vcmask 9216
    %v4286 = vsel %vm4285, %v4278, -inf
    %4287 = vmax.xlane.f32.xlu0 %v4286
    %v4288 = vpop.xlane.xlu0 %4287
    %v4289 = vsub.f32 %v4273, %v4284
    %v4290 = vsub.f32 %v4278, %v4288
    %v4291 = vmul.f32 %v4289, 1.442695
    %v4292 = vpow.pop %v4291
    %v4293 = vmul.f32 %v4290, 1.442695
    %v4294 = vpow.pop %v4293
    %v4295 = vsel %vm4281, %v4292, 0.0
    %4296 = vadd.xlane.f32.xlu0 %v4295
    %v4297 = vpop.xlane.xlu0 %4296
    %v4298 = vsel %vm4285, %v4294, 0.0
    %4299 = vadd.xlane.f32.xlu0 %v4298
    %v4300 = vpop.xlane.xlu0 %4299
    %v4301 = vrcp.pop %v4297
    %v4302 = vrcp.pop %v4300
    %v4303 = vmul.f32 %v4292, %v4301
    %v4304 = vmul.f32 %v4294, %v4302
    %4305 = vst.msk [vmem:[%s67] sm:$0xff] %vm4281, %v4303
    %4306 = vst.msk [vmem:[%s67 + $0x8] sm:$0x3] %vm4285, %v4304
    // Predicated region
    $region194: #{fix_locator_forward.1} parent=1 // pred_check
      _
    $region195: #{fix_locator_forward.1} parent=1 // pred_check_branch
      %4308 = sbr.rel (0) target = $region197
    $region196: #{fix_locator_forward.1} parent=1 // pred_region
      _
    $region197: #{fix_locator_forward.1} parent=1 // pred_fallthru
      _
    // Predicated region
    $region198: #{fix_locator_forward.1} parent=1 // pred_check
      _
    $region199: #{fix_locator_forward.1} parent=1 // pred_check_branch
      %4310 = sbr.rel (0) target = $region201
    $region200: #{fix_locator_forward.1} parent=1 // pred_region
      _
    $region201: #{fix_locator_forward.1} parent=1 // pred_fallthru
      _
    // Predicated region
    $region202: #{fix_locator_forward.1} parent=1 // pred_check
      _
    $region203: #{fix_locator_forward.1} parent=1 // pred_check_branch
      %4312 = sbr.rel (0) target = $region205
    $region204: #{fix_locator_forward.1} parent=1 // pred_region
      _
    $region205: #{fix_locator_forward.1} parent=1 // pred_fallthru
      _
    // Predicated region
    $region206: #{fix_locator_forward.1} parent=1 // pred_check
      _
    $region207: #{fix_locator_forward.1} parent=1 // pred_check_branch
      %4314 = sbr.rel (0) target = $region209
    $region208: #{fix_locator_forward.1} parent=1 // pred_region
      _
    $region209: #{fix_locator_forward.1} parent=1 // pred_fallthru
      _
    %4315 = vsyncpa [#allocation3], 1
    %4316 = vsyncpa [#allocation5], 1
    %4317 = vsyncpa [#allocation8], 1
    %4318 = vsyncpa [#allocation11], 1
    %4319 = vsyncpa [#allocation14], 1
    %4320 = vsyncpa [#allocation17], 1
    %4321 = vsyncpa [#allocation20], 1
    %4322 = vsyncpa [#allocation23], 1
    %4323 = vsyncpa [#allocation26], 1

</llo_original>
